<compile_context>
chip_gen: v7x
topology: tpu7x:2x2x1
jax: 0.10.0
libtpu: 0.0.40
codegen_flags: <defaults>
</compile_context>

<pallas_src>
import jax
import jax.numpy as jnp
from jax.experimental import pallas as pl
from jax.experimental.pallas import tpu as pltpu

# ----------------------------- config ---------------------------------------
B = 2                       # batch
C_IN, SP = 4, 16            # spatial input channels / spatial size
HW = SP * SP                # flattened spatial positions (256)
C1 = 128                    # map_skip channels (lane-dense)
N_ENT, D_ENT, H_ENT = 8, 16, 128
D_SCALAR = 16
FEAT = 128                  # width of every internal embedding
LSTM_HIDDEN, LSTM_LAYERS = 128, 2
N_ACTION = 10
MAX_SELECTED = 5
KP = 128                    # padded contraction width for conv / entity / scalar
ONES_ROW = 9 * C_IN         # patches_T row holding constant 1.0 (conv-bias fold)

# square-weight slots ([NSQ, 128, 128] bf16)
W_SPATIAL, W_ENTITY, W_ENTRED, W_SCALAR, W_AT1_CTX, W_AT2 = range(6)
NSQ = 6

# bias / LN-param table rows ([NBT, 512] f32); lanes beyond each row's width are 0
(R_B_SPATIAL, R_B_ENTITY, R_B_ENTRED, R_B_SCALAR, R_B_AT2,
 R_B_SCPK, R_B_HEADS) = range(7)
R_LSTM0 = 7                 # per layer: gamma_i, beta_i, gamma_h, beta_h, gamma_c, beta_c
NBT = R_LSTM0 + 6 * LSTM_LAYERS


# ----------------------------- fused kernel ---------------------------------
def _alphastar_kernel(ent_num_ref, patches_t_ref, ent_ref, sca_ref,
                      h0_ref, c0_ref,
                      wconvt_ref, wsq_ref, wscpk_ref, wsein_ref, wheads_ref,
                      wlstm_ref, bt_ref,
                      idx_ref, h_out_ref, c_out_ref):
    f32 = jnp.float32
    bf16 = jnp.bfloat16
    H = LSTM_HIDDEN

    def mm(x, w):
        # bf16 MXU operands, f32 accumulation; elementwise math stays f32.
        return jnp.dot(x.astype(bf16), w.astype(bf16), preferred_element_type=f32)

    def mm_t(x, y):
        # contract the last dims of both operands ([M,K] x [N,K] -> [M,N]),
        # same dimension-numbers pattern as the flash-attention q.k^T dot.
        return jax.lax.dot_general(
            x.astype(bf16), y.astype(bf16),
            dimension_numbers=(((1,), (1,)), ((), ())),
            preferred_element_type=f32)

    def bt(i, width=128):
        return bt_ref[i:i + 1, 0:width]                  # [1, width]

    def relu(x):
        return jnp.maximum(x, 0.0)

    def layer_norm(x, g, b, eps=1e-5):
        mu = jnp.mean(x, axis=-1, keepdims=True)
        var = jnp.mean(jnp.square(x - mu), axis=-1, keepdims=True)
        return (x - mu) * jax.lax.rsqrt(var + eps) * g + b

    def row_argmax(scores, valid, idx):
        # per-row (cross-lane) argmax with invalid columns masked to -inf;
        # ties resolved to the first index (min over hit indices, f32 reduce).
        masked = jnp.where(valid, scores, -1e30)
        m = jnp.max(masked, axis=-1, keepdims=True)
        hit = jnp.logical_and(masked == m, valid)
        cand = jnp.where(hit, idx.astype(f32), 1e9)
        return jnp.min(cand, axis=-1, keepdims=True).astype(jnp.int32)  # [B,1]

    num = ent_num_ref[...]                                # [B, 1] int32

    # ---- spatial encoder: conv3x3 as a TRANSPOSED im2col matmul --------------
    # map_T[c, q] = relu( sum_k Wc[k, c] * patch[q, k] + bias[c] )  (bias folded)
    map_t = relu(mm(wconvt_ref[...], patches_t_ref[...]))        # [C1, B*HW] f32
    map_t_b = map_t.astype(bf16)

    rowq = jax.lax.broadcasted_iota(jnp.int32, (B, B * HW), 0)
    q = jax.lax.broadcasted_iota(jnp.int32, (B, B * HW), 1)
    blk = jax.lax.shift_right_logical(q, 8)               # q // HW  (HW = 256)
    pos = jnp.bitwise_and(q, HW - 1)                       # q %  HW
    in_block = blk == rowq

    # mean-pool over positions via MXU: (1/HW) selection matrix  @  map_T^T
    poolsel = jnp.where(in_block, 1.0 / HW, 0.0)           # [B, B*HW] f32
    spatial_pool = mm_t(poolsel, map_t_b)                  # [B, C1]
    spatial_emb = relu(mm(spatial_pool, wsq_ref[W_SPATIAL]) + bt(R_B_SPATIAL))

    # ---- entity encoder: MLP + masked mean (exact divide) --------------------
    ent_emb = relu(mm(ent_ref[...], wsq_ref[W_ENTITY]) + bt(R_B_ENTITY))  # [B*N, H]
    mask3 = (jax.lax.broadcasted_iota(jnp.int32, (B, N_ENT, 1), 1)
             < num.reshape(B, 1, 1)).astype(f32)
    ent3 = ent_emb.reshape(B, N_ENT, H_ENT)
    ent_sum = jnp.sum(ent3 * mask3, axis=1)                # [B, H]
    cnt = jnp.maximum(num.astype(f32), 1.0)
    ent_mean = ent_sum / cnt
    ent_red = relu(mm(ent_mean, wsq_ref[W_ENTRED]) + bt(R_B_ENTRED))

    # ---- scalar encoder; scalar_emb fan-out packed: [W_CTX | W_LSTMIN_SC] ----
    scalar_emb = relu(mm(sca_ref[...], wsq_ref[W_SCALAR]) + bt(R_B_SCALAR))
    scpk = mm(scalar_emb, wscpk_ref[...]) + bt(R_B_SCPK, 256)     # [B, 256]
    scalar_ctx = relu(scpk[:, 0:FEAT])

    # lstm_in: [spatial|entity] K-packed into one matmul; scalar part (and the
    # lstm_in bias) already produced by the packed scalar matmul above.
    se = jnp.concatenate([spatial_emb, ent_red], axis=-1)         # [B, 256]
    lstm_in = mm(se, wsein_ref[...]) + scpk[:, FEAT:2 * FEAT]     # [B, 128]

    # ---- layer-norm LSTM stack (script_lnlstm), all layers in one kernel -----
    x = lstm_in
    for layer in range(LSTM_LAYERS):
        base = R_LSTM0 + 6 * layer
        h = h0_ref[layer]                                          # [B, H]
        c = c0_ref[layer]
        igates = layer_norm(mm(x, wlstm_ref[2 * layer]),
                            bt(base + 0, 512), bt(base + 1, 512))  # [B, 4H]
        hgates = layer_norm(mm(h, wlstm_ref[2 * layer + 1]),
                            bt(base + 2, 512), bt(base + 3, 512))
        gates = igates + hgates
        i_g = jax.nn.sigmoid(gates[:, 0 * H:1 * H])
        f_g = jax.nn.sigmoid(gates[:, 1 * H:2 * H])
        g_g = jnp.tanh(gates[:, 2 * H:3 * H])
        o_g = jax.nn.sigmoid(gates[:, 3 * H:4 * H])
        cy = layer_norm(f_g * c + i_g * g_g, bt(base + 4), bt(base + 5))
        hy = o_g * jnp.tanh(cy)
        h_out_ref[layer] = hy
        c_out_ref[layer] = cy
        x = hy
    lstm_output = x                                                # [B, H]

    # ---- policy heads: one packed [128, 512] matmul for every lstm consumer --
    head_pre = mm(lstm_output, wheads_ref[...]) + bt(R_B_HEADS, 512)   # [B, 512]
    at_pre = head_pre[:, 0:128]                 # at_fc1 lstm part (bias included)
    su_logit = head_pre[:, 128:256]             # selected-units-num logits
    uq = head_pre[:, 256:384]                   # unit query
    lq = head_pre[:, 384:512]                   # location query

    at_h = relu(at_pre + mm(scalar_ctx, wsq_ref[W_AT1_CTX]))
    at_logit = mm(at_h, wsq_ref[W_AT2]) + bt(R_B_AT2)              # [B, 128]

    # TODO(synk): the reference policy samples with temperature and runs an
    # autoregressive selected-units pointer head; deterministic argmax is used.
    lane = jax.lax.broadcasted_iota(jnp.int32, (B, 128), 1)
    action_type = row_argmax(at_logit, lane < N_ACTION, lane)
    sel_units = row_argmax(su_logit, lane < MAX_SELECTED, lane)

    # target unit: tiny per-entity dot + masked in-kernel argmax
    unit_scores = jnp.sum(ent3 * uq[:, None, :], axis=-1)          # [B, N_ENT]
    n_iota = jax.lax.broadcasted_iota(jnp.int32, (B, N_ENT), 1)
    target_unit = row_argmax(unit_scores, n_iota < num, n_iota)

    # target location: lane-dense MXU scores against the transposed map,
    # per-batch lane block masked, argmax done in-kernel (no [B,HW] relayout).
    loc_scores = mm(lq, map_t_b)                                   # [B, B*HW]
    target_loc = row_argmax(loc_scores, in_block, pos)

    idx_ref[...] = jnp.concatenate(
        [action_type, target_unit, target_loc, sel_units], axis=-1)  # [B, 4]


# ----------------------------- wrapper ---------------------------------------
def _im2col_t(spatial_info):
    """NCHW -> 3x3 im2col, TRANSPOSED to [K, B*HW], bias row of ones, bf16."""
    x = jnp.transpose(spatial_info, (0, 2, 3, 1))                 # [B, SP, SP, C]
    xp = jnp.pad(x, ((0, 0), (1, 1), (1, 1), (0, 0)))
    cols = [xp[:, dh:dh + SP, dw:dw + SP, :]
            for dh in range(3) for dw in range(3)]
    patches = jnp.concatenate(cols, axis=-1).reshape(B * HW, 9 * C_IN)
    pt = jnp.transpose(patches)                                   # [36, B*HW]
    ones_row = jnp.ones((1, B * HW), jnp.float32)                 # conv-bias fold
    pad = jnp.zeros((KP - ONES_ROW - 1, B * HW), jnp.float32)
    return jnp.concatenate([pt, ones_row, pad], axis=0).astype(jnp.bfloat16)


@jax.jit
def alphastar_forward(params, spatial_info, entity_info, scalar_info,
                      entity_num, hidden_state):
    patches_t = _im2col_t(spatial_info)                           # [128, 512] bf16
    ent = entity_info["x"].reshape(B * N_ENT, D_ENT)
    ent = jnp.pad(ent, ((0, 0), (0, KP - D_ENT))).astype(jnp.bfloat16)
    sca = jnp.pad(scalar_info["x"],
                  ((0, 0), (0, KP - D_SCALAR))).astype(jnp.bfloat16)
    h0 = jnp.stack([h for h, _ in hidden_state])                  # [L, B, H]
    c0 = jnp.stack([c for _, c in hidden_state])

    idx, h_out, c_out = pl.pallas_call(
        _alphastar_kernel,
        out_shape=(
            jax.ShapeDtypeStruct((B, 4), jnp.int32),
            jax.ShapeDtypeStruct((LSTM_LAYERS, B, LSTM_HIDDEN), jnp.float32),
            jax.ShapeDtypeStruct((LSTM_LAYERS, B, LSTM_HIDDEN), jnp.float32),
        ),
        compiler_params=pltpu.CompilerParams(
            vmem_limit_bytes=32 * 1024 * 1024),
    )(entity_num.reshape(B, 1).astype(jnp.int32), patches_t, ent, sca, h0, c0,
      params["WCONVT"], params["WSQ"], params["WSCPK"], params["WSEIN"],
      params["WHEADS"], params["WLSTM"], params["BT"])

    action_info = {
        "action_type": idx[:, 0],
        "target_unit": idx[:, 1],
        "target_location": idx[:, 2],
    }
    selected_units_num = idx[:, 3]
    out_state = [(h_out[l], c_out[l]) for l in range(LSTM_LAYERS)]
    return action_info, selected_units_num, out_state


# ----------------------------- parameter init --------------------------------
def init_params(key):
    keys = jax.random.split(key, 24)
    kit = iter(keys)

    def lin(fan_in, n_out=128, n_keep=None, pad_k_to=None):
        w = jax.random.normal(next(kit), (fan_in, n_out),
                              jnp.float32) / jnp.sqrt(float(fan_in))
        if n_keep is not None:                  # zero padded output columns
            w = jnp.where(jnp.arange(n_out)[None, :] < n_keep, w, 0.0)
        if pad_k_to is not None and fan_in < pad_k_to:
            w = jnp.pad(w, ((0, pad_k_to - fan_in), (0, 0)))
        return w

    # conv weights, transposed, bias (zero) folded into column ONES_ROW
    wc = lin(9 * C_IN, C1)                                        # [36, C1]
    bc = jnp.zeros((C1, 1), jnp.float32)
    wconvt = jnp.concatenate(
        [wc.T, bc, jnp.zeros((C1, KP - ONES_ROW - 1), jnp.float32)], axis=1)

    wsq = jnp.stack([
        lin(C1, 128),                                   # W_SPATIAL
        lin(D_ENT, 128, pad_k_to=KP),                   # W_ENTITY
        lin(H_ENT, 128),                                # W_ENTRED
        lin(D_SCALAR, 128, pad_k_to=KP),                # W_SCALAR
        lin(FEAT, 128),                                 # W_AT1_CTX
        lin(FEAT, 128, n_keep=N_ACTION),                # W_AT2
    ])

    # scalar_emb fan-out packed along N: [W_CTX | W_LSTMIN_SC]
    wscpk = jnp.concatenate([lin(FEAT, 128), lin(FEAT, 128)], axis=1)   # [128,256]
    # [spatial | entity] -> lstm_in packed along K
    wsein = jnp.concatenate([lin(FEAT, 128), lin(FEAT, 128)], axis=0)   # [256,128]
    # every lstm_output consumer packed along N: [AT1_LSTM | SU | UQ | LQ]
    wheads = jnp.concatenate([
        lin(LSTM_HIDDEN, 128),
        lin(LSTM_HIDDEN, 128, n_keep=MAX_SELECTED),
        lin(LSTM_HIDDEN, 128),
        lin(LSTM_HIDDEN, 128),
    ], axis=1)                                                          # [128,512]

    wl = []
    for _ in range(LSTM_LAYERS):
        wl.append(jax.random.normal(next(kit), (LSTM_HIDDEN, 4 * LSTM_HIDDEN),
                                    jnp.float32) * 0.1)           # wih
        wl.append(jax.random.normal(next(kit), (LSTM_HIDDEN, 4 * LSTM_HIDDEN),
                                    jnp.float32) * 0.1)           # whh
    wlstm = jnp.stack(wl)                                         # [2L,128,512]

    # bias / LN table: all linear biases zero, LN gammas = 1
    bt = jnp.zeros((NBT, 512), jnp.float32)
    for layer in range(LSTM_LAYERS):
        base = R_LSTM0 + 6 * layer
        bt = bt.at[base + 0].set(1.0)          # gamma_i
        bt = bt.at[base + 2].set(1.0)          # gamma_h
        bt = bt.at[base + 4].set(1.0)          # gamma_c (first 128 lanes used)

    return {"WCONVT": wconvt.astype(jnp.bfloat16),
            "WSQ": wsq.astype(jnp.bfloat16),
            "WSCPK": wscpk.astype(jnp.bfloat16),
            "WSEIN": wsein.astype(jnp.bfloat16),
            "WHEADS": wheads.astype(jnp.bfloat16),
            "WLSTM": wlstm.astype(jnp.bfloat16),
            "BT": bt}


# ----------------------------------- main -------------------------------------
if __name__ == "__main__":
    key = jax.random.PRNGKey(0)
    pkey, k1, k2, k3 = jax.random.split(key, 4)
    params = init_params(pkey)

    spatial_info = jax.random.normal(k1, (B, C_IN, SP, SP), jnp.float32)
    entity_info = {"x": jax.random.normal(k2, (B, N_ENT, D_ENT), jnp.float32)}
    scalar_info = {"x": jax.random.normal(k3, (B, D_SCALAR), jnp.float32)}
    entity_num = jnp.array([5, 8], jnp.int32)
    hidden_state = [(jnp.zeros((B, LSTM_HIDDEN), jnp.float32),
                     jnp.zeros((B, LSTM_HIDDEN), jnp.float32))
                    for _ in range(LSTM_LAYERS)]

    action_info, selected_units_num, out_state = alphastar_forward(
        params, spatial_info, entity_info, scalar_info, entity_num,
        hidden_state)
    jax.block_until_ready((action_info, selected_units_num, out_state))
    print("KERNEL_OK")
</pallas_src>

<mosaic_0001>
module attributes {stable_mosaic.version = 11 : i64} {
  func.func @_alphastar_kernel(%arg0: memref<2x1xi32, #tpu.memory_space<vmem>>, %arg1: memref<128x512xbf16, #tpu.memory_space<vmem>>, %arg2: memref<16x128xbf16, #tpu.memory_space<vmem>>, %arg3: memref<2x128xbf16, #tpu.memory_space<vmem>>, %arg4: memref<2x2x128xf32, #tpu.memory_space<vmem>>, %arg5: memref<2x2x128xf32, #tpu.memory_space<vmem>>, %arg6: memref<128x128xbf16, #tpu.memory_space<vmem>>, %arg7: memref<6x128x128xbf16, #tpu.memory_space<vmem>>, %arg8: memref<128x256xbf16, #tpu.memory_space<vmem>>, %arg9: memref<256x128xbf16, #tpu.memory_space<vmem>>, %arg10: memref<128x512xbf16, #tpu.memory_space<vmem>>, %arg11: memref<4x128x512xbf16, #tpu.memory_space<vmem>>, %arg12: memref<19x512xf32, #tpu.memory_space<vmem>>, %arg13: memref<2x4xi32, #tpu.memory_space<vmem>>, %arg14: memref<2x2x128xf32, #tpu.memory_space<vmem>>, %arg15: memref<2x2x128xf32, #tpu.memory_space<vmem>>) attributes {dimension_semantics = [], scalar_prefetch = 0 : i64, scratch_operands = 0 : i64, tpu.core_type = #tpu.core_type<tc>} {
    %c0 = arith.constant 0 : index
    %c0_0 = arith.constant 0 : index
    %0 = vector.load %arg0[%c0, %c0_0] : memref<2x1xi32, #tpu.memory_space<vmem>>, vector<2x1xi32>
    %c0_1 = arith.constant 0 : index
    %c0_2 = arith.constant 0 : index
    %1 = vector.load %arg6[%c0_1, %c0_2] : memref<128x128xbf16, #tpu.memory_space<vmem>>, vector<128x128xbf16>
    %c0_3 = arith.constant 0 : index
    %c0_4 = arith.constant 0 : index
    %2 = vector.load %arg1[%c0_3, %c0_4] : memref<128x512xbf16, #tpu.memory_space<vmem>>, vector<128x512xbf16>
    %cst = arith.constant dense<0.000000e+00> : vector<128x512xf32>
    %3 = tpu.matmul %1, %2, %cst {dimension_numbers = #tpu.dot_dimension_numbers<[1], [0], [0], [1], [0, 0, 1, 1], [], []>} : vector<128x128xbf16>, vector<128x512xbf16>, vector<128x512xf32> -> vector<128x512xf32>
    %cst_5 = arith.constant 0.000000e+00 : f32
    %4 = vector.broadcast %cst_5 : f32 to vector<128x512xf32>
    %5 = arith.maximumf %3, %4 : vector<128x512xf32>
    %6 = arith.truncf %5 : vector<128x512xf32> to vector<128x512xbf16>
    %7 = tpu.iota {dimensions = array<i32: 0>} : vector<2x512xi32>
    %8 = tpu.iota {dimensions = array<i32: 1>} : vector<2x512xi32>
    %c8_i32 = arith.constant 8 : i32
    %9 = vector.broadcast %c8_i32 : i32 to vector<2x512xi32>
    %10 = arith.shrui %8, %9 : vector<2x512xi32>
    %c255_i32 = arith.constant 255 : i32
    %11 = vector.broadcast %c255_i32 : i32 to vector<2x512xi32>
    %12 = arith.andi %8, %11 : vector<2x512xi32>
    %13 = arith.cmpi eq, %10, %7 : vector<2x512xi32>
    %cst_6 = arith.constant 3.906250e-03 : f32
    %cst_7 = arith.constant 0.000000e+00 : f32
    %14 = vector.broadcast %cst_6 : f32 to vector<2x512xf32>
    %15 = vector.broadcast %cst_7 : f32 to vector<2x512xf32>
    %16 = arith.select %13, %14, %15 : vector<2x512xi1>, vector<2x512xf32>
    %17 = arith.truncf %16 : vector<2x512xf32> to vector<2x512xbf16>
    %cst_8 = arith.constant dense<0.000000e+00> : vector<2x128xf32>
    %18 = tpu.matmul %17, %6, %cst_8 {dimension_numbers = #tpu.dot_dimension_numbers<[1], [1], [0], [0], [0, 0, 1, 0], [], []>} : vector<2x512xbf16>, vector<128x512xbf16>, vector<2x128xf32> -> vector<2x128xf32>
    %c0_9 = arith.constant 0 : index
    %c0_10 = arith.constant 0 : index
    %c0_11 = arith.constant 0 : index
    %19 = vector.load %arg7[%c0_9, %c0_10, %c0_11] : memref<6x128x128xbf16, #tpu.memory_space<vmem>>, vector<1x128x128xbf16>
    %20 = vector.shape_cast %19 : vector<1x128x128xbf16> to vector<128x128xbf16>
    %21 = arith.truncf %18 : vector<2x128xf32> to vector<2x128xbf16>
    %cst_12 = arith.constant dense<0.000000e+00> : vector<2x128xf32>
    %22 = tpu.matmul %21, %20, %cst_12 {dimension_numbers = #tpu.dot_dimension_numbers<[1], [0], [0], [1], [0, 0, 1, 1], [], []>} : vector<2x128xbf16>, vector<128x128xbf16>, vector<2x128xf32> -> vector<2x128xf32>
    %c0_13 = arith.constant 0 : index
    %c0_14 = arith.constant 0 : index
    %23 = vector.load %arg12[%c0_13, %c0_14] : memref<19x512xf32, #tpu.memory_space<vmem>>, vector<1x128xf32>
    %24 = vector.broadcast %23 : vector<1x128xf32> to vector<2x128xf32>
    %25 = arith.addf %22, %24 : vector<2x128xf32>
    %cst_15 = arith.constant 0.000000e+00 : f32
    %26 = vector.broadcast %cst_15 : f32 to vector<2x128xf32>
    %27 = arith.maximumf %25, %26 : vector<2x128xf32>
    %c0_16 = arith.constant 0 : index
    %c0_17 = arith.constant 0 : index
    %28 = vector.load %arg2[%c0_16, %c0_17] : memref<16x128xbf16, #tpu.memory_space<vmem>>, vector<16x128xbf16>
    %c1 = arith.constant 1 : index
    %c0_18 = arith.constant 0 : index
    %c0_19 = arith.constant 0 : index
    %29 = vector.load %arg7[%c1, %c0_18, %c0_19] : memref<6x128x128xbf16, #tpu.memory_space<vmem>>, vector<1x128x128xbf16>
    %30 = vector.shape_cast %29 : vector<1x128x128xbf16> to vector<128x128xbf16>
    %cst_20 = arith.constant dense<0.000000e+00> : vector<16x128xf32>
    %31 = tpu.matmul %28, %30, %cst_20 {dimension_numbers = #tpu.dot_dimension_numbers<[1], [0], [0], [1], [0, 0, 1, 1], [], []>} : vector<16x128xbf16>, vector<128x128xbf16>, vector<16x128xf32> -> vector<16x128xf32>
    %c1_21 = arith.constant 1 : index
    %c0_22 = arith.constant 0 : index
    %32 = vector.load %arg12[%c1_21, %c0_22] : memref<19x512xf32, #tpu.memory_space<vmem>>, vector<1x128xf32>
    %33 = vector.broadcast %32 : vector<1x128xf32> to vector<16x128xf32>
    %34 = arith.addf %31, %33 : vector<16x128xf32>
    %cst_23 = arith.constant 0.000000e+00 : f32
    %35 = vector.broadcast %cst_23 : f32 to vector<16x128xf32>
    %36 = arith.maximumf %34, %35 : vector<16x128xf32>
    %37 = tpu.iota {dimensions = array<i32: 1>} : vector<2x8x1xi32>
    %38 = vector.shape_cast %0 : vector<2x1xi32> to vector<2x1x1xi32>
    %39 = vector.broadcast %38 : vector<2x1x1xi32> to vector<2x8x1xi32>
    %40 = arith.cmpi slt, %37, %39 : vector<2x8x1xi32>
    %41 = arith.extui %40 : vector<2x8x1xi1> to vector<2x8x1xi32>
    %42 = arith.sitofp %41 : vector<2x8x1xi32> to vector<2x8x1xf32>
    %43 = vector.shape_cast %36 : vector<16x128xf32> to vector<2x8x128xf32>
    %44 = vector.broadcast %42 : vector<2x8x1xf32> to vector<2x8x128xf32>
    %45 = arith.mulf %43, %44 : vector<2x8x128xf32>
    %cst_24 = arith.constant dense<0.000000e+00> : vector<2x128xf32>
    %46 = vector.multi_reduction <add>, %45, %cst_24 [1] : vector<2x8x128xf32> to vector<2x128xf32>
    %47 = arith.sitofp %0 : vector<2x1xi32> to vector<2x1xf32>
    %cst_25 = arith.constant 1.000000e+00 : f32
    %48 = vector.broadcast %cst_25 : f32 to vector<2x1xf32>
    %49 = arith.maximumf %47, %48 : vector<2x1xf32>
    %50 = vector.broadcast %49 : vector<2x1xf32> to vector<2x128xf32>
    %51 = arith.divf %46, %50 : vector<2x128xf32>
    %c2 = arith.constant 2 : index
    %c0_26 = arith.constant 0 : index
    %c0_27 = arith.constant 0 : index
    %52 = vector.load %arg7[%c2, %c0_26, %c0_27] : memref<6x128x128xbf16, #tpu.memory_space<vmem>>, vector<1x128x128xbf16>
    %53 = vector.shape_cast %52 : vector<1x128x128xbf16> to vector<128x128xbf16>
    %54 = arith.truncf %51 : vector<2x128xf32> to vector<2x128xbf16>
    %cst_28 = arith.constant dense<0.000000e+00> : vector<2x128xf32>
    %55 = tpu.matmul %54, %53, %cst_28 {dimension_numbers = #tpu.dot_dimension_numbers<[1], [0], [0], [1], [0, 0, 1, 1], [], []>} : vector<2x128xbf16>, vector<128x128xbf16>, vector<2x128xf32> -> vector<2x128xf32>
    %c2_29 = arith.constant 2 : index
    %c0_30 = arith.constant 0 : index
    %56 = vector.load %arg12[%c2_29, %c0_30] : memref<19x512xf32, #tpu.memory_space<vmem>>, vector<1x128xf32>
    %57 = vector.broadcast %56 : vector<1x128xf32> to vector<2x128xf32>
    %58 = arith.addf %55, %57 : vector<2x128xf32>
    %cst_31 = arith.constant 0.000000e+00 : f32
    %59 = vector.broadcast %cst_31 : f32 to vector<2x128xf32>
    %60 = arith.maximumf %58, %59 : vector<2x128xf32>
    %c0_32 = arith.constant 0 : index
    %c0_33 = arith.constant 0 : index
    %61 = vector.load %arg3[%c0_32, %c0_33] : memref<2x128xbf16, #tpu.memory_space<vmem>>, vector<2x128xbf16>
    %c3 = arith.constant 3 : index
    %c0_34 = arith.constant 0 : index
    %c0_35 = arith.constant 0 : index
    %62 = vector.load %arg7[%c3, %c0_34, %c0_35] : memref<6x128x128xbf16, #tpu.memory_space<vmem>>, vector<1x128x128xbf16>
    %63 = vector.shape_cast %62 : vector<1x128x128xbf16> to vector<128x128xbf16>
    %cst_36 = arith.constant dense<0.000000e+00> : vector<2x128xf32>
    %64 = tpu.matmul %61, %63, %cst_36 {dimension_numbers = #tpu.dot_dimension_numbers<[1], [0], [0], [1], [0, 0, 1, 1], [], []>} : vector<2x128xbf16>, vector<128x128xbf16>, vector<2x128xf32> -> vector<2x128xf32>
    %c3_37 = arith.constant 3 : index
    %c0_38 = arith.constant 0 : index
    %65 = vector.load %arg12[%c3_37, %c0_38] : memref<19x512xf32, #tpu.memory_space<vmem>>, vector<1x128xf32>
    %66 = vector.broadcast %65 : vector<1x128xf32> to vector<2x128xf32>
    %67 = arith.addf %64, %66 : vector<2x128xf32>
    %cst_39 = arith.constant 0.000000e+00 : f32
    %68 = vector.broadcast %cst_39 : f32 to vector<2x128xf32>
    %69 = arith.maximumf %67, %68 : vector<2x128xf32>
    %c0_40 = arith.constant 0 : index
    %c0_41 = arith.constant 0 : index
    %70 = vector.load %arg8[%c0_40, %c0_41] : memref<128x256xbf16, #tpu.memory_space<vmem>>, vector<128x256xbf16>
    %71 = arith.truncf %69 : vector<2x128xf32> to vector<2x128xbf16>
    %cst_42 = arith.constant dense<0.000000e+00> : vector<2x256xf32>
    %72 = tpu.matmul %71, %70, %cst_42 {dimension_numbers = #tpu.dot_dimension_numbers<[1], [0], [0], [1], [0, 0, 1, 1], [], []>} : vector<2x128xbf16>, vector<128x256xbf16>, vector<2x256xf32> -> vector<2x256xf32>
    %c5 = arith.constant 5 : index
    %c0_43 = arith.constant 0 : index
    %73 = vector.load %arg12[%c5, %c0_43] : memref<19x512xf32, #tpu.memory_space<vmem>>, vector<1x256xf32>
    %74 = vector.broadcast %73 : vector<1x256xf32> to vector<2x256xf32>
    %75 = arith.addf %72, %74 : vector<2x256xf32>
    %76 = vector.extract_strided_slice %75 {offsets = [0, 0], sizes = [2, 128], strides = [1, 1]} : vector<2x256xf32> to vector<2x128xf32>
    %cst_44 = arith.constant 0.000000e+00 : f32
    %77 = vector.broadcast %cst_44 : f32 to vector<2x128xf32>
    %78 = arith.maximumf %76, %77 : vector<2x128xf32>
    %79 = tpu.concatenate %27, %60 in 1 : vector<2x128xf32>, vector<2x128xf32> -> vector<2x256xf32>
    %c0_45 = arith.constant 0 : index
    %c0_46 = arith.constant 0 : index
    %80 = vector.load %arg9[%c0_45, %c0_46] : memref<256x128xbf16, #tpu.memory_space<vmem>>, vector<256x128xbf16>
    %81 = arith.truncf %79 : vector<2x256xf32> to vector<2x256xbf16>
    %cst_47 = arith.constant dense<0.000000e+00> : vector<2x128xf32>
    %82 = tpu.matmul %81, %80, %cst_47 {dimension_numbers = #tpu.dot_dimension_numbers<[1], [0], [0], [1], [0, 0, 1, 1], [], []>} : vector<2x256xbf16>, vector<256x128xbf16>, vector<2x128xf32> -> vector<2x128xf32>
    %83 = vector.extract_strided_slice %75 {offsets = [0, 128], sizes = [2, 128], strides = [1, 1]} : vector<2x256xf32> to vector<2x128xf32>
    %84 = arith.addf %82, %83 : vector<2x128xf32>
    %c0_48 = arith.constant 0 : index
    %c0_49 = arith.constant 0 : index
    %c0_50 = arith.constant 0 : index
    %85 = vector.load %arg4[%c0_48, %c0_49, %c0_50] : memref<2x2x128xf32, #tpu.memory_space<vmem>>, vector<1x2x128xf32>
    %86 = vector.shape_cast %85 : vector<1x2x128xf32> to vector<2x128xf32>
    %c0_51 = arith.constant 0 : index
    %c0_52 = arith.constant 0 : index
    %c0_53 = arith.constant 0 : index
    %87 = vector.load %arg5[%c0_51, %c0_52, %c0_53] : memref<2x2x128xf32, #tpu.memory_space<vmem>>, vector<1x2x128xf32>
    %88 = vector.shape_cast %87 : vector<1x2x128xf32> to vector<2x128xf32>
    %c0_54 = arith.constant 0 : index
    %c0_55 = arith.constant 0 : index
    %c0_56 = arith.constant 0 : index
    %89 = vector.load %arg11[%c0_54, %c0_55, %c0_56] : memref<4x128x512xbf16, #tpu.memory_space<vmem>>, vector<1x128x512xbf16>
    %90 = vector.shape_cast %89 : vector<1x128x512xbf16> to vector<128x512xbf16>
    %91 = arith.truncf %84 : vector<2x128xf32> to vector<2x128xbf16>
    %cst_57 = arith.constant dense<0.000000e+00> : vector<2x512xf32>
    %92 = tpu.matmul %91, %90, %cst_57 {dimension_numbers = #tpu.dot_dimension_numbers<[1], [0], [0], [1], [0, 0, 1, 1], [], []>} : vector<2x128xbf16>, vector<128x512xbf16>, vector<2x512xf32> -> vector<2x512xf32>
    %c7 = arith.constant 7 : index
    %c0_58 = arith.constant 0 : index
    %93 = vector.load %arg12[%c7, %c0_58] : memref<19x512xf32, #tpu.memory_space<vmem>>, vector<1x512xf32>
    %c8 = arith.constant 8 : index
    %c0_59 = arith.constant 0 : index
    %94 = vector.load %arg12[%c8, %c0_59] : memref<19x512xf32, #tpu.memory_space<vmem>>, vector<1x512xf32>
    %cst_60 = arith.constant dense<0.000000e+00> : vector<2xf32>
    %95 = vector.multi_reduction <add>, %92, %cst_60 [1] : vector<2x512xf32> to vector<2xf32>
    %96 = vector.shape_cast %95 : vector<2xf32> to vector<2x1xf32>
    %cst_61 = arith.constant 5.120000e+02 : f32
    %97 = vector.broadcast %cst_61 : f32 to vector<2x1xf32>
    %98 = arith.divf %96, %97 : vector<2x1xf32>
    %99 = vector.broadcast %98 : vector<2x1xf32> to vector<2x512xf32>
    %100 = arith.subf %92, %99 : vector<2x512xf32>
    %101 = arith.mulf %100, %100 : vector<2x512xf32>
    %cst_62 = arith.constant dense<0.000000e+00> : vector<2xf32>
    %102 = vector.multi_reduction <add>, %101, %cst_62 [1] : vector<2x512xf32> to vector<2xf32>
    %103 = vector.shape_cast %102 : vector<2xf32> to vector<2x1xf32>
    %cst_63 = arith.constant 5.120000e+02 : f32
    %104 = vector.broadcast %cst_63 : f32 to vector<2x1xf32>
    %105 = arith.divf %103, %104 : vector<2x1xf32>
    %106 = vector.broadcast %98 : vector<2x1xf32> to vector<2x512xf32>
    %107 = arith.subf %92, %106 : vector<2x512xf32>
    %cst_64 = arith.constant 9.99999974E-6 : f32
    %108 = vector.broadcast %cst_64 : f32 to vector<2x1xf32>
    %109 = arith.addf %105, %108 : vector<2x1xf32>
    %110 = math.rsqrt %109 : vector<2x1xf32>
    %111 = vector.broadcast %110 : vector<2x1xf32> to vector<2x512xf32>
    %112 = arith.mulf %107, %111 : vector<2x512xf32>
    %113 = vector.broadcast %93 : vector<1x512xf32> to vector<2x512xf32>
    %114 = arith.mulf %112, %113 : vector<2x512xf32>
    %115 = vector.broadcast %94 : vector<1x512xf32> to vector<2x512xf32>
    %116 = arith.addf %114, %115 : vector<2x512xf32>
    %c1_65 = arith.constant 1 : index
    %c0_66 = arith.constant 0 : index
    %c0_67 = arith.constant 0 : index
    %117 = vector.load %arg11[%c1_65, %c0_66, %c0_67] : memref<4x128x512xbf16, #tpu.memory_space<vmem>>, vector<1x128x512xbf16>
    %118 = vector.shape_cast %117 : vector<1x128x512xbf16> to vector<128x512xbf16>
    %119 = arith.truncf %86 : vector<2x128xf32> to vector<2x128xbf16>
    %cst_68 = arith.constant dense<0.000000e+00> : vector<2x512xf32>
    %120 = tpu.matmul %119, %118, %cst_68 {dimension_numbers = #tpu.dot_dimension_numbers<[1], [0], [0], [1], [0, 0, 1, 1], [], []>} : vector<2x128xbf16>, vector<128x512xbf16>, vector<2x512xf32> -> vector<2x512xf32>
    %c9 = arith.constant 9 : index
    %c0_69 = arith.constant 0 : index
    %121 = vector.load %arg12[%c9, %c0_69] : memref<19x512xf32, #tpu.memory_space<vmem>>, vector<1x512xf32>
    %c10 = arith.constant 10 : index
    %c0_70 = arith.constant 0 : index
    %122 = vector.load %arg12[%c10, %c0_70] : memref<19x512xf32, #tpu.memory_space<vmem>>, vector<1x512xf32>
    %cst_71 = arith.constant dense<0.000000e+00> : vector<2xf32>
    %123 = vector.multi_reduction <add>, %120, %cst_71 [1] : vector<2x512xf32> to vector<2xf32>
    %124 = vector.shape_cast %123 : vector<2xf32> to vector<2x1xf32>
    %cst_72 = arith.constant 5.120000e+02 : f32
    %125 = vector.broadcast %cst_72 : f32 to vector<2x1xf32>
    %126 = arith.divf %124, %125 : vector<2x1xf32>
    %127 = vector.broadcast %126 : vector<2x1xf32> to vector<2x512xf32>
    %128 = arith.subf %120, %127 : vector<2x512xf32>
    %129 = arith.mulf %128, %128 : vector<2x512xf32>
    %cst_73 = arith.constant dense<0.000000e+00> : vector<2xf32>
    %130 = vector.multi_reduction <add>, %129, %cst_73 [1] : vector<2x512xf32> to vector<2xf32>
    %131 = vector.shape_cast %130 : vector<2xf32> to vector<2x1xf32>
    %cst_74 = arith.constant 5.120000e+02 : f32
    %132 = vector.broadcast %cst_74 : f32 to vector<2x1xf32>
    %133 = arith.divf %131, %132 : vector<2x1xf32>
    %134 = vector.broadcast %126 : vector<2x1xf32> to vector<2x512xf32>
    %135 = arith.subf %120, %134 : vector<2x512xf32>
    %cst_75 = arith.constant 9.99999974E-6 : f32
    %136 = vector.broadcast %cst_75 : f32 to vector<2x1xf32>
    %137 = arith.addf %133, %136 : vector<2x1xf32>
    %138 = math.rsqrt %137 : vector<2x1xf32>
    %139 = vector.broadcast %138 : vector<2x1xf32> to vector<2x512xf32>
    %140 = arith.mulf %135, %139 : vector<2x512xf32>
    %141 = vector.broadcast %121 : vector<1x512xf32> to vector<2x512xf32>
    %142 = arith.mulf %140, %141 : vector<2x512xf32>
    %143 = vector.broadcast %122 : vector<1x512xf32> to vector<2x512xf32>
    %144 = arith.addf %142, %143 : vector<2x512xf32>
    %145 = arith.addf %116, %144 : vector<2x512xf32>
    %146 = vector.extract_strided_slice %145 {offsets = [0, 0], sizes = [2, 128], strides = [1, 1]} : vector<2x512xf32> to vector<2x128xf32>
    %147 = arith.negf %146 : vector<2x128xf32>
    %148 = math.exp %147 : vector<2x128xf32>
    %cst_76 = arith.constant 1.000000e+00 : f32
    %149 = vector.broadcast %cst_76 : f32 to vector<2x128xf32>
    %150 = arith.addf %149, %148 : vector<2x128xf32>
    %151 = arith.divf %149, %150 : vector<2x128xf32>
    %152 = vector.extract_strided_slice %145 {offsets = [0, 128], sizes = [2, 128], strides = [1, 1]} : vector<2x512xf32> to vector<2x128xf32>
    %153 = arith.negf %152 : vector<2x128xf32>
    %154 = math.exp %153 : vector<2x128xf32>
    %cst_77 = arith.constant 1.000000e+00 : f32
    %155 = vector.broadcast %cst_77 : f32 to vector<2x128xf32>
    %156 = arith.addf %155, %154 : vector<2x128xf32>
    %157 = arith.divf %155, %156 : vector<2x128xf32>
    %158 = vector.extract_strided_slice %145 {offsets = [0, 256], sizes = [2, 128], strides = [1, 1]} : vector<2x512xf32> to vector<2x128xf32>
    %159 = math.tanh %158 : vector<2x128xf32>
    %160 = vector.extract_strided_slice %145 {offsets = [0, 384], sizes = [2, 128], strides = [1, 1]} : vector<2x512xf32> to vector<2x128xf32>
    %161 = arith.negf %160 : vector<2x128xf32>
    %162 = math.exp %161 : vector<2x128xf32>
    %cst_78 = arith.constant 1.000000e+00 : f32
    %163 = vector.broadcast %cst_78 : f32 to vector<2x128xf32>
    %164 = arith.addf %163, %162 : vector<2x128xf32>
    %165 = arith.divf %163, %164 : vector<2x128xf32>
    %166 = arith.mulf %157, %88 : vector<2x128xf32>
    %167 = arith.mulf %151, %159 : vector<2x128xf32>
    %168 = arith.addf %166, %167 : vector<2x128xf32>
    %c11 = arith.constant 11 : index
    %c0_79 = arith.constant 0 : index
    %169 = vector.load %arg12[%c11, %c0_79] : memref<19x512xf32, #tpu.memory_space<vmem>>, vector<1x128xf32>
    %c12 = arith.constant 12 : index
    %c0_80 = arith.constant 0 : index
    %170 = vector.load %arg12[%c12, %c0_80] : memref<19x512xf32, #tpu.memory_space<vmem>>, vector<1x128xf32>
    %cst_81 = arith.constant dense<0.000000e+00> : vector<2xf32>
    %171 = vector.multi_reduction <add>, %168, %cst_81 [1] : vector<2x128xf32> to vector<2xf32>
    %172 = vector.shape_cast %171 : vector<2xf32> to vector<2x1xf32>
    %cst_82 = arith.constant 1.280000e+02 : f32
    %173 = vector.broadcast %cst_82 : f32 to vector<2x1xf32>
    %174 = arith.divf %172, %173 : vector<2x1xf32>
    %175 = vector.broadcast %174 : vector<2x1xf32> to vector<2x128xf32>
    %176 = arith.subf %168, %175 : vector<2x128xf32>
    %177 = arith.mulf %176, %176 : vector<2x128xf32>
    %cst_83 = arith.constant dense<0.000000e+00> : vector<2xf32>
    %178 = vector.multi_reduction <add>, %177, %cst_83 [1] : vector<2x128xf32> to vector<2xf32>
    %179 = vector.shape_cast %178 : vector<2xf32> to vector<2x1xf32>
    %cst_84 = arith.constant 1.280000e+02 : f32
    %180 = vector.broadcast %cst_84 : f32 to vector<2x1xf32>
    %181 = arith.divf %179, %180 : vector<2x1xf32>
    %182 = vector.broadcast %174 : vector<2x1xf32> to vector<2x128xf32>
    %183 = arith.subf %168, %182 : vector<2x128xf32>
    %cst_85 = arith.constant 9.99999974E-6 : f32
    %184 = vector.broadcast %cst_85 : f32 to vector<2x1xf32>
    %185 = arith.addf %181, %184 : vector<2x1xf32>
    %186 = math.rsqrt %185 : vector<2x1xf32>
    %187 = vector.broadcast %186 : vector<2x1xf32> to vector<2x128xf32>
    %188 = arith.mulf %183, %187 : vector<2x128xf32>
    %189 = vector.broadcast %169 : vector<1x128xf32> to vector<2x128xf32>
    %190 = arith.mulf %188, %189 : vector<2x128xf32>
    %191 = vector.broadcast %170 : vector<1x128xf32> to vector<2x128xf32>
    %192 = arith.addf %190, %191 : vector<2x128xf32>
    %193 = math.tanh %192 : vector<2x128xf32>
    %194 = arith.mulf %165, %193 : vector<2x128xf32>
    %c0_86 = arith.constant 0 : index
    %c0_87 = arith.constant 0 : index
    %c0_88 = arith.constant 0 : index
    %195 = vector.load %arg14[%c0_86, %c0_87, %c0_88] : memref<2x2x128xf32, #tpu.memory_space<vmem>>, vector<1x2x128xf32>
    %196 = vector.shape_cast %195 : vector<1x2x128xf32> to vector<2x128xf32>
    %197 = vector.shape_cast %194 : vector<2x128xf32> to vector<1x2x128xf32>
    tpu.vector_store %arg14[%c0_86, %c0_87, %c0_88], %197 {strides = array<i32>} : memref<2x2x128xf32, #tpu.memory_space<vmem>>, vector<1x2x128xf32>,
    %c0_89 = arith.constant 0 : index
    %c0_90 = arith.constant 0 : index
    %c0_91 = arith.constant 0 : index
    %198 = vector.load %arg15[%c0_89, %c0_90, %c0_91] : memref<2x2x128xf32, #tpu.memory_space<vmem>>, vector<1x2x128xf32>
    %199 = vector.shape_cast %198 : vector<1x2x128xf32> to vector<2x128xf32>
    %200 = vector.shape_cast %192 : vector<2x128xf32> to vector<1x2x128xf32>
    tpu.vector_store %arg15[%c0_89, %c0_90, %c0_91], %200 {strides = array<i32>} : memref<2x2x128xf32, #tpu.memory_space<vmem>>, vector<1x2x128xf32>,
    %c1_92 = arith.constant 1 : index
    %c0_93 = arith.constant 0 : index
    %c0_94 = arith.constant 0 : index
    %201 = vector.load %arg4[%c1_92, %c0_93, %c0_94] : memref<2x2x128xf32, #tpu.memory_space<vmem>>, vector<1x2x128xf32>
    %202 = vector.shape_cast %201 : vector<1x2x128xf32> to vector<2x128xf32>
    %c1_95 = arith.constant 1 : index
    %c0_96 = arith.constant 0 : index
    %c0_97 = arith.constant 0 : index
    %203 = vector.load %arg5[%c1_95, %c0_96, %c0_97] : memref<2x2x128xf32, #tpu.memory_space<vmem>>, vector<1x2x128xf32>
    %204 = vector.shape_cast %203 : vector<1x2x128xf32> to vector<2x128xf32>
    %c2_98 = arith.constant 2 : index
    %c0_99 = arith.constant 0 : index
    %c0_100 = arith.constant 0 : index
    %205 = vector.load %arg11[%c2_98, %c0_99, %c0_100] : memref<4x128x512xbf16, #tpu.memory_space<vmem>>, vector<1x128x512xbf16>
    %206 = vector.shape_cast %205 : vector<1x128x512xbf16> to vector<128x512xbf16>
    %207 = arith.truncf %194 : vector<2x128xf32> to vector<2x128xbf16>
    %cst_101 = arith.constant dense<0.000000e+00> : vector<2x512xf32>
    %208 = tpu.matmul %207, %206, %cst_101 {dimension_numbers = #tpu.dot_dimension_numbers<[1], [0], [0], [1], [0, 0, 1, 1], [], []>} : vector<2x128xbf16>, vector<128x512xbf16>, vector<2x512xf32> -> vector<2x512xf32>
    %c13 = arith.constant 13 : index
    %c0_102 = arith.constant 0 : index
    %209 = vector.load %arg12[%c13, %c0_102] : memref<19x512xf32, #tpu.memory_space<vmem>>, vector<1x512xf32>
    %c14 = arith.constant 14 : index
    %c0_103 = arith.constant 0 : index
    %210 = vector.load %arg12[%c14, %c0_103] : memref<19x512xf32, #tpu.memory_space<vmem>>, vector<1x512xf32>
    %cst_104 = arith.constant dense<0.000000e+00> : vector<2xf32>
    %211 = vector.multi_reduction <add>, %208, %cst_104 [1] : vector<2x512xf32> to vector<2xf32>
    %212 = vector.shape_cast %211 : vector<2xf32> to vector<2x1xf32>
    %cst_105 = arith.constant 5.120000e+02 : f32
    %213 = vector.broadcast %cst_105 : f32 to vector<2x1xf32>
    %214 = arith.divf %212, %213 : vector<2x1xf32>
    %215 = vector.broadcast %214 : vector<2x1xf32> to vector<2x512xf32>
    %216 = arith.subf %208, %215 : vector<2x512xf32>
    %217 = arith.mulf %216, %216 : vector<2x512xf32>
    %cst_106 = arith.constant dense<0.000000e+00> : vector<2xf32>
    %218 = vector.multi_reduction <add>, %217, %cst_106 [1] : vector<2x512xf32> to vector<2xf32>
    %219 = vector.shape_cast %218 : vector<2xf32> to vector<2x1xf32>
    %cst_107 = arith.constant 5.120000e+02 : f32
    %220 = vector.broadcast %cst_107 : f32 to vector<2x1xf32>
    %221 = arith.divf %219, %220 : vector<2x1xf32>
    %222 = vector.broadcast %214 : vector<2x1xf32> to vector<2x512xf32>
    %223 = arith.subf %208, %222 : vector<2x512xf32>
    %cst_108 = arith.constant 9.99999974E-6 : f32
    %224 = vector.broadcast %cst_108 : f32 to vector<2x1xf32>
    %225 = arith.addf %221, %224 : vector<2x1xf32>
    %226 = math.rsqrt %225 : vector<2x1xf32>
    %227 = vector.broadcast %226 : vector<2x1xf32> to vector<2x512xf32>
    %228 = arith.mulf %223, %227 : vector<2x512xf32>
    %229 = vector.broadcast %209 : vector<1x512xf32> to vector<2x512xf32>
    %230 = arith.mulf %228, %229 : vector<2x512xf32>
    %231 = vector.broadcast %210 : vector<1x512xf32> to vector<2x512xf32>
    %232 = arith.addf %230, %231 : vector<2x512xf32>
    %c3_109 = arith.constant 3 : index
    %c0_110 = arith.constant 0 : index
    %c0_111 = arith.constant 0 : index
    %233 = vector.load %arg11[%c3_109, %c0_110, %c0_111] : memref<4x128x512xbf16, #tpu.memory_space<vmem>>, vector<1x128x512xbf16>
    %234 = vector.shape_cast %233 : vector<1x128x512xbf16> to vector<128x512xbf16>
    %235 = arith.truncf %202 : vector<2x128xf32> to vector<2x128xbf16>
    %cst_112 = arith.constant dense<0.000000e+00> : vector<2x512xf32>
    %236 = tpu.matmul %235, %234, %cst_112 {dimension_numbers = #tpu.dot_dimension_numbers<[1], [0], [0], [1], [0, 0, 1, 1], [], []>} : vector<2x128xbf16>, vector<128x512xbf16>, vector<2x512xf32> -> vector<2x512xf32>
    %c15 = arith.constant 15 : index
    %c0_113 = arith.constant 0 : index
    %237 = vector.load %arg12[%c15, %c0_113] : memref<19x512xf32, #tpu.memory_space<vmem>>, vector<1x512xf32>
    %c16 = arith.constant 16 : index
    %c0_114 = arith.constant 0 : index
    %238 = vector.load %arg12[%c16, %c0_114] : memref<19x512xf32, #tpu.memory_space<vmem>>, vector<1x512xf32>
    %cst_115 = arith.constant dense<0.000000e+00> : vector<2xf32>
    %239 = vector.multi_reduction <add>, %236, %cst_115 [1] : vector<2x512xf32> to vector<2xf32>
    %240 = vector.shape_cast %239 : vector<2xf32> to vector<2x1xf32>
    %cst_116 = arith.constant 5.120000e+02 : f32
    %241 = vector.broadcast %cst_116 : f32 to vector<2x1xf32>
    %242 = arith.divf %240, %241 : vector<2x1xf32>
    %243 = vector.broadcast %242 : vector<2x1xf32> to vector<2x512xf32>
    %244 = arith.subf %236, %243 : vector<2x512xf32>
    %245 = arith.mulf %244, %244 : vector<2x512xf32>
    %cst_117 = arith.constant dense<0.000000e+00> : vector<2xf32>
    %246 = vector.multi_reduction <add>, %245, %cst_117 [1] : vector<2x512xf32> to vector<2xf32>
    %247 = vector.shape_cast %246 : vector<2xf32> to vector<2x1xf32>
    %cst_118 = arith.constant 5.120000e+02 : f32
    %248 = vector.broadcast %cst_118 : f32 to vector<2x1xf32>
    %249 = arith.divf %247, %248 : vector<2x1xf32>
    %250 = vector.broadcast %242 : vector<2x1xf32> to vector<2x512xf32>
    %251 = arith.subf %236, %250 : vector<2x512xf32>
    %cst_119 = arith.constant 9.99999974E-6 : f32
    %252 = vector.broadcast %cst_119 : f32 to vector<2x1xf32>
    %253 = arith.addf %249, %252 : vector<2x1xf32>
    %254 = math.rsqrt %253 : vector<2x1xf32>
    %255 = vector.broadcast %254 : vector<2x1xf32> to vector<2x512xf32>
    %256 = arith.mulf %251, %255 : vector<2x512xf32>
    %257 = vector.broadcast %237 : vector<1x512xf32> to vector<2x512xf32>
    %258 = arith.mulf %256, %257 : vector<2x512xf32>
    %259 = vector.broadcast %238 : vector<1x512xf32> to vector<2x512xf32>
    %260 = arith.addf %258, %259 : vector<2x512xf32>
    %261 = arith.addf %232, %260 : vector<2x512xf32>
    %262 = vector.extract_strided_slice %261 {offsets = [0, 0], sizes = [2, 128], strides = [1, 1]} : vector<2x512xf32> to vector<2x128xf32>
    %263 = arith.negf %262 : vector<2x128xf32>
    %264 = math.exp %263 : vector<2x128xf32>
    %cst_120 = arith.constant 1.000000e+00 : f32
    %265 = vector.broadcast %cst_120 : f32 to vector<2x128xf32>
    %266 = arith.addf %265, %264 : vector<2x128xf32>
    %267 = arith.divf %265, %266 : vector<2x128xf32>
    %268 = vector.extract_strided_slice %261 {offsets = [0, 128], sizes = [2, 128], strides = [1, 1]} : vector<2x512xf32> to vector<2x128xf32>
    %269 = arith.negf %268 : vector<2x128xf32>
    %270 = math.exp %269 : vector<2x128xf32>
    %cst_121 = arith.constant 1.000000e+00 : f32
    %271 = vector.broadcast %cst_121 : f32 to vector<2x128xf32>
    %272 = arith.addf %271, %270 : vector<2x128xf32>
    %273 = arith.divf %271, %272 : vector<2x128xf32>
    %274 = vector.extract_strided_slice %261 {offsets = [0, 256], sizes = [2, 128], strides = [1, 1]} : vector<2x512xf32> to vector<2x128xf32>
    %275 = math.tanh %274 : vector<2x128xf32>
    %276 = vector.extract_strided_slice %261 {offsets = [0, 384], sizes = [2, 128], strides = [1, 1]} : vector<2x512xf32> to vector<2x128xf32>
    %277 = arith.negf %276 : vector<2x128xf32>
    %278 = math.exp %277 : vector<2x128xf32>
    %cst_122 = arith.constant 1.000000e+00 : f32
    %279 = vector.broadcast %cst_122 : f32 to vector<2x128xf32>
    %280 = arith.addf %279, %278 : vector<2x128xf32>
    %281 = arith.divf %279, %280 : vector<2x128xf32>
    %282 = arith.mulf %273, %204 : vector<2x128xf32>
    %283 = arith.mulf %267, %275 : vector<2x128xf32>
    %284 = arith.addf %282, %283 : vector<2x128xf32>
    %c17 = arith.constant 17 : index
    %c0_123 = arith.constant 0 : index
    %285 = vector.load %arg12[%c17, %c0_123] : memref<19x512xf32, #tpu.memory_space<vmem>>, vector<1x128xf32>
    %c18 = arith.constant 18 : index
    %c0_124 = arith.constant 0 : index
    %286 = vector.load %arg12[%c18, %c0_124] : memref<19x512xf32, #tpu.memory_space<vmem>>, vector<1x128xf32>
    %cst_125 = arith.constant dense<0.000000e+00> : vector<2xf32>
    %287 = vector.multi_reduction <add>, %284, %cst_125 [1] : vector<2x128xf32> to vector<2xf32>
    %288 = vector.shape_cast %287 : vector<2xf32> to vector<2x1xf32>
    %cst_126 = arith.constant 1.280000e+02 : f32
    %289 = vector.broadcast %cst_126 : f32 to vector<2x1xf32>
    %290 = arith.divf %288, %289 : vector<2x1xf32>
    %291 = vector.broadcast %290 : vector<2x1xf32> to vector<2x128xf32>
    %292 = arith.subf %284, %291 : vector<2x128xf32>
    %293 = arith.mulf %292, %292 : vector<2x128xf32>
    %cst_127 = arith.constant dense<0.000000e+00> : vector<2xf32>
    %294 = vector.multi_reduction <add>, %293, %cst_127 [1] : vector<2x128xf32> to vector<2xf32>
    %295 = vector.shape_cast %294 : vector<2xf32> to vector<2x1xf32>
    %cst_128 = arith.constant 1.280000e+02 : f32
    %296 = vector.broadcast %cst_128 : f32 to vector<2x1xf32>
    %297 = arith.divf %295, %296 : vector<2x1xf32>
    %298 = vector.broadcast %290 : vector<2x1xf32> to vector<2x128xf32>
    %299 = arith.subf %284, %298 : vector<2x128xf32>
    %cst_129 = arith.constant 9.99999974E-6 : f32
    %300 = vector.broadcast %cst_129 : f32 to vector<2x1xf32>
    %301 = arith.addf %297, %300 : vector<2x1xf32>
    %302 = math.rsqrt %301 : vector<2x1xf32>
    %303 = vector.broadcast %302 : vector<2x1xf32> to vector<2x128xf32>
    %304 = arith.mulf %299, %303 : vector<2x128xf32>
    %305 = vector.broadcast %285 : vector<1x128xf32> to vector<2x128xf32>
    %306 = arith.mulf %304, %305 : vector<2x128xf32>
    %307 = vector.broadcast %286 : vector<1x128xf32> to vector<2x128xf32>
    %308 = arith.addf %306, %307 : vector<2x128xf32>
    %309 = math.tanh %308 : vector<2x128xf32>
    %310 = arith.mulf %281, %309 : vector<2x128xf32>
    %c1_130 = arith.constant 1 : index
    %c0_131 = arith.constant 0 : index
    %c0_132 = arith.constant 0 : index
    %311 = vector.load %arg14[%c1_130, %c0_131, %c0_132] : memref<2x2x128xf32, #tpu.memory_space<vmem>>, vector<1x2x128xf32>
    %312 = vector.shape_cast %311 : vector<1x2x128xf32> to vector<2x128xf32>
    %313 = vector.shape_cast %310 : vector<2x128xf32> to vector<1x2x128xf32>
    tpu.vector_store %arg14[%c1_130, %c0_131, %c0_132], %313 {strides = array<i32>} : memref<2x2x128xf32, #tpu.memory_space<vmem>>, vector<1x2x128xf32>,
    %c1_133 = arith.constant 1 : index
    %c0_134 = arith.constant 0 : index
    %c0_135 = arith.constant 0 : index
    %314 = vector.load %arg15[%c1_133, %c0_134, %c0_135] : memref<2x2x128xf32, #tpu.memory_space<vmem>>, vector<1x2x128xf32>
    %315 = vector.shape_cast %314 : vector<1x2x128xf32> to vector<2x128xf32>
    %316 = vector.shape_cast %308 : vector<2x128xf32> to vector<1x2x128xf32>
    tpu.vector_store %arg15[%c1_133, %c0_134, %c0_135], %316 {strides = array<i32>} : memref<2x2x128xf32, #tpu.memory_space<vmem>>, vector<1x2x128xf32>,
    %c0_136 = arith.constant 0 : index
    %c0_137 = arith.constant 0 : index
    %317 = vector.load %arg10[%c0_136, %c0_137] : memref<128x512xbf16, #tpu.memory_space<vmem>>, vector<128x512xbf16>
    %318 = arith.truncf %310 : vector<2x128xf32> to vector<2x128xbf16>
    %cst_138 = arith.constant dense<0.000000e+00> : vector<2x512xf32>
    %319 = tpu.matmul %318, %317, %cst_138 {dimension_numbers = #tpu.dot_dimension_numbers<[1], [0], [0], [1], [0, 0, 1, 1], [], []>} : vector<2x128xbf16>, vector<128x512xbf16>, vector<2x512xf32> -> vector<2x512xf32>
    %c6 = arith.constant 6 : index
    %c0_139 = arith.constant 0 : index
    %320 = vector.load %arg12[%c6, %c0_139] : memref<19x512xf32, #tpu.memory_space<vmem>>, vector<1x512xf32>
    %321 = vector.broadcast %320 : vector<1x512xf32> to vector<2x512xf32>
    %322 = arith.addf %319, %321 : vector<2x512xf32>
    %323 = vector.extract_strided_slice %322 {offsets = [0, 0], sizes = [2, 128], strides = [1, 1]} : vector<2x512xf32> to vector<2x128xf32>
    %324 = vector.extract_strided_slice %322 {offsets = [0, 128], sizes = [2, 128], strides = [1, 1]} : vector<2x512xf32> to vector<2x128xf32>
    %325 = vector.extract_strided_slice %322 {offsets = [0, 256], sizes = [2, 128], strides = [1, 1]} : vector<2x512xf32> to vector<2x128xf32>
    %326 = vector.extract_strided_slice %322 {offsets = [0, 384], sizes = [2, 128], strides = [1, 1]} : vector<2x512xf32> to vector<2x128xf32>
    %c4 = arith.constant 4 : index
    %c0_140 = arith.constant 0 : index
    %c0_141 = arith.constant 0 : index
    %327 = vector.load %arg7[%c4, %c0_140, %c0_141] : memref<6x128x128xbf16, #tpu.memory_space<vmem>>, vector<1x128x128xbf16>
    %328 = vector.shape_cast %327 : vector<1x128x128xbf16> to vector<128x128xbf16>
    %329 = arith.truncf %78 : vector<2x128xf32> to vector<2x128xbf16>
    %cst_142 = arith.constant dense<0.000000e+00> : vector<2x128xf32>
    %330 = tpu.matmul %329, %328, %cst_142 {dimension_numbers = #tpu.dot_dimension_numbers<[1], [0], [0], [1], [0, 0, 1, 1], [], []>} : vector<2x128xbf16>, vector<128x128xbf16>, vector<2x128xf32> -> vector<2x128xf32>
    %331 = arith.addf %323, %330 : vector<2x128xf32>
    %cst_143 = arith.constant 0.000000e+00 : f32
    %332 = vector.broadcast %cst_143 : f32 to vector<2x128xf32>
    %333 = arith.maximumf %331, %332 : vector<2x128xf32>
    %c5_144 = arith.constant 5 : index
    %c0_145 = arith.constant 0 : index
    %c0_146 = arith.constant 0 : index
    %334 = vector.load %arg7[%c5_144, %c0_145, %c0_146] : memref<6x128x128xbf16, #tpu.memory_space<vmem>>, vector<1x128x128xbf16>
    %335 = vector.shape_cast %334 : vector<1x128x128xbf16> to vector<128x128xbf16>
    %336 = arith.truncf %333 : vector<2x128xf32> to vector<2x128xbf16>
    %cst_147 = arith.constant dense<0.000000e+00> : vector<2x128xf32>
    %337 = tpu.matmul %336, %335, %cst_147 {dimension_numbers = #tpu.dot_dimension_numbers<[1], [0], [0], [1], [0, 0, 1, 1], [], []>} : vector<2x128xbf16>, vector<128x128xbf16>, vector<2x128xf32> -> vector<2x128xf32>
    %c4_148 = arith.constant 4 : index
    %c0_149 = arith.constant 0 : index
    %338 = vector.load %arg12[%c4_148, %c0_149] : memref<19x512xf32, #tpu.memory_space<vmem>>, vector<1x128xf32>
    %339 = vector.broadcast %338 : vector<1x128xf32> to vector<2x128xf32>
    %340 = arith.addf %337, %339 : vector<2x128xf32>
    %341 = tpu.iota {dimensions = array<i32: 1>} : vector<2x128xi32>
    %c10_i32 = arith.constant 10 : i32
    %342 = vector.broadcast %c10_i32 : i32 to vector<2x128xi32>
    %343 = arith.cmpi slt, %341, %342 : vector<2x128xi32>
    %cst_150 = arith.constant -1.000000e+30 : f32
    %344 = vector.broadcast %cst_150 : f32 to vector<2x128xf32>
    %345 = arith.select %343, %340, %344 : vector<2x128xi1>, vector<2x128xf32>
    %cst_151 = arith.constant dense<0xFF800000> : vector<2xf32>
    %346 = vector.multi_reduction <maximumf>, %345, %cst_151 [1] : vector<2x128xf32> to vector<2xf32>
    %347 = vector.shape_cast %346 : vector<2xf32> to vector<2x1xf32>
    %348 = vector.broadcast %347 : vector<2x1xf32> to vector<2x128xf32>
    %349 = arith.cmpf oeq, %345, %348 : vector<2x128xf32>
    %350 = arith.andi %349, %343 : vector<2x128xi1>
    %351 = arith.sitofp %341 : vector<2x128xi32> to vector<2x128xf32>
    %cst_152 = arith.constant 1.000000e+09 : f32
    %352 = vector.broadcast %cst_152 : f32 to vector<2x128xf32>
    %353 = arith.select %350, %351, %352 : vector<2x128xi1>, vector<2x128xf32>
    %cst_153 = arith.constant dense<0x7F800000> : vector<2xf32>
    %354 = vector.multi_reduction <minimumf>, %353, %cst_153 [1] : vector<2x128xf32> to vector<2xf32>
    %355 = vector.shape_cast %354 : vector<2xf32> to vector<2x1xf32>
    %356 = arith.fptosi %355 : vector<2x1xf32> to vector<2x1xi32>
    %c5_i32 = arith.constant 5 : i32
    %357 = vector.broadcast %c5_i32 : i32 to vector<2x128xi32>
    %358 = arith.cmpi slt, %341, %357 : vector<2x128xi32>
    %cst_154 = arith.constant -1.000000e+30 : f32
    %359 = vector.broadcast %cst_154 : f32 to vector<2x128xf32>
    %360 = arith.select %358, %324, %359 : vector<2x128xi1>, vector<2x128xf32>
    %cst_155 = arith.constant dense<0xFF800000> : vector<2xf32>
    %361 = vector.multi_reduction <maximumf>, %360, %cst_155 [1] : vector<2x128xf32> to vector<2xf32>
    %362 = vector.shape_cast %361 : vector<2xf32> to vector<2x1xf32>
    %363 = vector.broadcast %362 : vector<2x1xf32> to vector<2x128xf32>
    %364 = arith.cmpf oeq, %360, %363 : vector<2x128xf32>
    %365 = arith.andi %364, %358 : vector<2x128xi1>
    %366 = arith.sitofp %341 : vector<2x128xi32> to vector<2x128xf32>
    %cst_156 = arith.constant 1.000000e+09 : f32
    %367 = vector.broadcast %cst_156 : f32 to vector<2x128xf32>
    %368 = arith.select %365, %366, %367 : vector<2x128xi1>, vector<2x128xf32>
    %cst_157 = arith.constant dense<0x7F800000> : vector<2xf32>
    %369 = vector.multi_reduction <minimumf>, %368, %cst_157 [1] : vector<2x128xf32> to vector<2xf32>
    %370 = vector.shape_cast %369 : vector<2xf32> to vector<2x1xf32>
    %371 = arith.fptosi %370 : vector<2x1xf32> to vector<2x1xi32>
    %372 = vector.shape_cast %325 : vector<2x128xf32> to vector<2x1x128xf32>
    %373 = vector.broadcast %372 : vector<2x1x128xf32> to vector<2x8x128xf32>
    %374 = arith.mulf %43, %373 : vector<2x8x128xf32>
    %cst_158 = arith.constant dense<0.000000e+00> : vector<2x8xf32>
    %375 = vector.multi_reduction <add>, %374, %cst_158 [2] : vector<2x8x128xf32> to vector<2x8xf32>
    %376 = tpu.iota {dimensions = array<i32: 1>} : vector<2x8xi32>
    %377 = vector.broadcast %0 : vector<2x1xi32> to vector<2x8xi32>
    %378 = arith.cmpi slt, %376, %377 : vector<2x8xi32>
    %cst_159 = arith.constant -1.000000e+30 : f32
    %379 = vector.broadcast %cst_159 : f32 to vector<2x8xf32>
    %380 = arith.select %378, %375, %379 : vector<2x8xi1>, vector<2x8xf32>
    %cst_160 = arith.constant dense<0xFF800000> : vector<2xf32>
    %381 = vector.multi_reduction <maximumf>, %380, %cst_160 [1] : vector<2x8xf32> to vector<2xf32>
    %382 = vector.shape_cast %381 : vector<2xf32> to vector<2x1xf32>
    %383 = vector.broadcast %382 : vector<2x1xf32> to vector<2x8xf32>
    %384 = arith.cmpf oeq, %380, %383 : vector<2x8xf32>
    %385 = arith.andi %384, %378 : vector<2x8xi1>
    %386 = arith.sitofp %376 : vector<2x8xi32> to vector<2x8xf32>
    %cst_161 = arith.constant 1.000000e+09 : f32
    %387 = vector.broadcast %cst_161 : f32 to vector<2x8xf32>
    %388 = arith.select %385, %386, %387 : vector<2x8xi1>, vector<2x8xf32>
    %cst_162 = arith.constant dense<0x7F800000> : vector<2xf32>
    %389 = vector.multi_reduction <minimumf>, %388, %cst_162 [1] : vector<2x8xf32> to vector<2xf32>
    %390 = vector.shape_cast %389 : vector<2xf32> to vector<2x1xf32>
    %391 = arith.fptosi %390 : vector<2x1xf32> to vector<2x1xi32>
    %392 = arith.truncf %326 : vector<2x128xf32> to vector<2x128xbf16>
    %cst_163 = arith.constant dense<0.000000e+00> : vector<2x512xf32>
    %393 = tpu.matmul %392, %6, %cst_163 {dimension_numbers = #tpu.dot_dimension_numbers<[1], [0], [0], [1], [0, 0, 1, 1], [], []>} : vector<2x128xbf16>, vector<128x512xbf16>, vector<2x512xf32> -> vector<2x512xf32>
    %cst_164 = arith.constant -1.000000e+30 : f32
    %394 = vector.broadcast %cst_164 : f32 to vector<2x512xf32>
    %395 = arith.select %13, %393, %394 : vector<2x512xi1>, vector<2x512xf32>
    %cst_165 = arith.constant dense<0xFF800000> : vector<2xf32>
    %396 = vector.multi_reduction <maximumf>, %395, %cst_165 [1] : vector<2x512xf32> to vector<2xf32>
    %397 = vector.shape_cast %396 : vector<2xf32> to vector<2x1xf32>
    %398 = vector.broadcast %397 : vector<2x1xf32> to vector<2x512xf32>
    %399 = arith.cmpf oeq, %395, %398 : vector<2x512xf32>
    %400 = arith.andi %399, %13 : vector<2x512xi1>
    %401 = arith.sitofp %12 : vector<2x512xi32> to vector<2x512xf32>
    %cst_166 = arith.constant 1.000000e+09 : f32
    %402 = vector.broadcast %cst_166 : f32 to vector<2x512xf32>
    %403 = arith.select %400, %401, %402 : vector<2x512xi1>, vector<2x512xf32>
    %cst_167 = arith.constant dense<0x7F800000> : vector<2xf32>
    %404 = vector.multi_reduction <minimumf>, %403, %cst_167 [1] : vector<2x512xf32> to vector<2xf32>
    %405 = vector.shape_cast %404 : vector<2xf32> to vector<2x1xf32>
    %406 = arith.fptosi %405 : vector<2x1xf32> to vector<2x1xi32>
    %407 = tpu.concatenate %356, %391, %406, %371 in 1 : vector<2x1xi32>, vector<2x1xi32>, vector<2x1xi32>, vector<2x1xi32> -> vector<2x4xi32>
    %c0_168 = arith.constant 0 : index
    %c0_169 = arith.constant 0 : index
    %408 = vector.load %arg13[%c0_168, %c0_169] : memref<2x4xi32, #tpu.memory_space<vmem>>, vector<2x4xi32>
    tpu.vector_store %arg13[%c0_168, %c0_169], %407 {strides = array<i32>} : memref<2x4xi32, #tpu.memory_space<vmem>>, vector<2x4xi32>,
    return
  }
}

</mosaic_0001>

<llo_original>
// kernel: alphastar_forward.1
$region0: #{alphastar_forward.1}
  #allocation0 [shape = 'u32[]', space=smem, size = 0x4, offset = 0x4, fixed_abs, tag = 'smem constant byte address 0x4 - core index']
  #allocation1 [shape = 'u32[144,128]{1,0:T(1,128)}', space=vmem, size = 0x12000, scoped, tag = 'internal scratch']
  %s0 = inlined_call_operand.vmem [shape: s32[2,1], index: 0, kind: input, shape index: {}]
  %s1 = inlined_call_operand.vmem [shape: bf16[128,512], index: 1, kind: input, shape index: {}]
  %s2 = inlined_call_operand.vmem [shape: bf16[16,128], index: 2, kind: input, shape index: {}]
  %s3 = inlined_call_operand.vmem [shape: bf16[2,128], index: 3, kind: input, shape index: {}]
  %s4 = inlined_call_operand.vmem [shape: f32[2,2,128], index: 4, kind: input, shape index: {}]
  %s5 = inlined_call_operand.vmem [shape: f32[2,2,128], index: 5, kind: input, shape index: {}]
  %s6 = inlined_call_operand.vmem [shape: bf16[128,128], index: 6, kind: input, shape index: {}]
  %s7 = inlined_call_operand.vmem [shape: bf16[6,128,128], index: 7, kind: input, shape index: {}]
  %s8 = inlined_call_operand.vmem [shape: bf16[128,256], index: 8, kind: input, shape index: {}]
  %s9 = inlined_call_operand.vmem [shape: bf16[256,128], index: 9, kind: input, shape index: {}]
  %s10 = inlined_call_operand.vmem [shape: bf16[128,512], index: 10, kind: input, shape index: {}]
  %s11 = inlined_call_operand.vmem [shape: bf16[4,128,512], index: 11, kind: input, shape index: {}]
  %s12 = inlined_call_operand.vmem [shape: f32[19,512], index: 12, kind: input, shape index: {}]
  %s13 = inlined_call_operand.vmem [shape: s32[2,4], index: 13, kind: output, shape index: {0}]
  %s14 = inlined_call_operand.vmem [shape: f32[2,2,128], index: 14, kind: output, shape index: {1}]
  %s15 = inlined_call_operand.vmem [shape: f32[2,2,128], index: 15, kind: output, shape index: {2}]
  %16 = xla_tuple %s13, %s14, %s15
  %s17 = sld [smem:[#allocation0]]
  $region78: #{alphastar_forward.1} parent=0
    _
  %s19 = ssub.s32 1, %s17
  %s20 = scalar_select 0, %s19, %s17
  // Predicated region
  $region2: #{alphastar_forward.1} parent=0 // pred_check
    _
  $region3: #{alphastar_forward.1} parent=0 // pred_check_branch
    %22 = sbr.rel (0) target = $region5
  $region4: #{alphastar_forward.1} parent=0 // pred_region
    _
  $region5: #{alphastar_forward.1} parent=0 // pred_fallthru
    _
  // Predicated region
  $region6: #{alphastar_forward.1} parent=0 // pred_check
    _
  $region7: #{alphastar_forward.1} parent=0 // pred_check_branch
    %24 = sbr.rel (0) target = $region9
  $region8: #{alphastar_forward.1} parent=0 // pred_region
    _
  $region9: #{alphastar_forward.1} parent=0 // pred_fallthru
    _
  // Predicated region
  $region10: #{alphastar_forward.1} parent=0 // pred_check
    _
  $region11: #{alphastar_forward.1} parent=0 // pred_check_branch
    %26 = sbr.rel (0) target = $region13
  $region12: #{alphastar_forward.1} parent=0 // pred_region
    _
  $region13: #{alphastar_forward.1} parent=0 // pred_fallthru
    _
  // Predicated region
  $region14: #{alphastar_forward.1} parent=0 // pred_check
    _
  $region15: #{alphastar_forward.1} parent=0 // pred_check_branch
    %28 = sbr.rel (0) target = $region17
  $region16: #{alphastar_forward.1} parent=0 // pred_region
    _
  $region17: #{alphastar_forward.1} parent=0 // pred_fallthru
    _
  // Predicated region
  $region18: #{alphastar_forward.1} parent=0 // pred_check
    _
  $region19: #{alphastar_forward.1} parent=0 // pred_check_branch
    %30 = sbr.rel (0) target = $region21
  $region20: #{alphastar_forward.1} parent=0 // pred_region
    _
  $region21: #{alphastar_forward.1} parent=0 // pred_fallthru
    _
  // Predicated region
  $region22: #{alphastar_forward.1} parent=0 // pred_check
    _
  $region23: #{alphastar_forward.1} parent=0 // pred_check_branch
    %32 = sbr.rel (0) target = $region25
  $region24: #{alphastar_forward.1} parent=0 // pred_region
    _
  $region25: #{alphastar_forward.1} parent=0 // pred_fallthru
    _
  // Predicated region
  $region26: #{alphastar_forward.1} parent=0 // pred_check
    _
  $region27: #{alphastar_forward.1} parent=0 // pred_check_branch
    %34 = sbr.rel (0) target = $region29
  $region28: #{alphastar_forward.1} parent=0 // pred_region
    _
  $region29: #{alphastar_forward.1} parent=0 // pred_fallthru
    _
  // Predicated region
  $region30: #{alphastar_forward.1} parent=0 // pred_check
    _
  $region31: #{alphastar_forward.1} parent=0 // pred_check_branch
    %36 = sbr.rel (0) target = $region33
  $region32: #{alphastar_forward.1} parent=0 // pred_region
    _
  $region33: #{alphastar_forward.1} parent=0 // pred_fallthru
    _
  // Predicated region
  $region34: #{alphastar_forward.1} parent=0 // pred_check
    _
  $region35: #{alphastar_forward.1} parent=0 // pred_check_branch
    %38 = sbr.rel (0) target = $region37
  $region36: #{alphastar_forward.1} parent=0 // pred_region
    _
  $region37: #{alphastar_forward.1} parent=0 // pred_fallthru
    _
  // Predicated region
  $region38: #{alphastar_forward.1} parent=0 // pred_check
    _
  $region39: #{alphastar_forward.1} parent=0 // pred_check_branch
    %40 = sbr.rel (0) target = $region41
  $region40: #{alphastar_forward.1} parent=0 // pred_region
    _
  $region41: #{alphastar_forward.1} parent=0 // pred_fallthru
    _
  // Predicated region
  $region42: #{alphastar_forward.1} parent=0 // pred_check
    _
  $region43: #{alphastar_forward.1} parent=0 // pred_check_branch
    %42 = sbr.rel (0) target = $region45
  $region44: #{alphastar_forward.1} parent=0 // pred_region
    _
  $region45: #{alphastar_forward.1} parent=0 // pred_fallthru
    _
  // Predicated region
  $region46: #{alphastar_forward.1} parent=0 // pred_check
    _
  $region47: #{alphastar_forward.1} parent=0 // pred_check_branch
    %44 = sbr.rel (0) target = $region49
  $region48: #{alphastar_forward.1} parent=0 // pred_region
    _
  $region49: #{alphastar_forward.1} parent=0 // pred_fallthru
    _
  // Predicated region
  $region50: #{alphastar_forward.1} parent=0 // pred_check
    _
  $region51: #{alphastar_forward.1} parent=0 // pred_check_branch
    %46 = sbr.rel (0) target = $region53
  $region52: #{alphastar_forward.1} parent=0 // pred_region
    _
  $region53: #{alphastar_forward.1} parent=0 // pred_fallthru
    _
  %v48 = vld [vmem:[%s0] sm:$0x3]
  %v49 = vld [vmem:[%s6] sm:$0xf]
  %v50 = vld [vmem:[%s6 + $0x4] sm:$0xf]
  %v51 = vld [vmem:[%s6 + $0x8] sm:$0xf]
  %v52 = vld [vmem:[%s6 + $0xc] sm:$0xf]
  %v53 = vld [vmem:[%s6 + $0x10] sm:$0xf]
  %v54 = vld [vmem:[%s6 + $0x14] sm:$0xf]
  %v55 = vld [vmem:[%s6 + $0x18] sm:$0xf]
  %v56 = vld [vmem:[%s6 + $0x1c] sm:$0xf]
  %v57 = vld [vmem:[%s6 + $0x20] sm:$0xf]
  %v58 = vld [vmem:[%s6 + $0x24] sm:$0xf]
  %v59 = vld [vmem:[%s6 + $0x28] sm:$0xf]
  %v60 = vld [vmem:[%s6 + $0x2c] sm:$0xf]
  %v61 = vld [vmem:[%s6 + $0x30] sm:$0xf]
  %v62 = vld [vmem:[%s6 + $0x34] sm:$0xf]
  %v63 = vld [vmem:[%s6 + $0x38] sm:$0xf]
  %v64 = vld [vmem:[%s6 + $0x3c] sm:$0xf]
  %v65 = vld [vmem:[%s1] sm:$0xff]
  %v66 = vld [vmem:[%s1 + $0x8] sm:$0xff]
  %v67 = vld [vmem:[%s1 + $0x10] sm:$0xff]
  %v68 = vld [vmem:[%s1 + $0x18] sm:$0xff]
  %v69 = vld [vmem:[%s1 + $0x20] sm:$0xff]
  %v70 = vld [vmem:[%s1 + $0x28] sm:$0xff]
  %v71 = vld [vmem:[%s1 + $0x30] sm:$0xff]
  %v72 = vld [vmem:[%s1 + $0x38] sm:$0xff]
  %v73 = vld [vmem:[%s1 + $0x40] sm:$0xff]
  %v74 = vld [vmem:[%s1 + $0x48] sm:$0xff]
  %v75 = vld [vmem:[%s1 + $0x50] sm:$0xff]
  %v76 = vld [vmem:[%s1 + $0x58] sm:$0xff]
  %v77 = vld [vmem:[%s1 + $0x60] sm:$0xff]
  %v78 = vld [vmem:[%s1 + $0x68] sm:$0xff]
  %v79 = vld [vmem:[%s1 + $0x70] sm:$0xff]
  %v80 = vld [vmem:[%s1 + $0x78] sm:$0xff]
  %v81 = vld [vmem:[%s1 + $0x80] sm:$0xff]
  %v82 = vld [vmem:[%s1 + $0x88] sm:$0xff]
  %v83 = vld [vmem:[%s1 + $0x90] sm:$0xff]
  %v84 = vld [vmem:[%s1 + $0x98] sm:$0xff]
  %v85 = vld [vmem:[%s1 + $0xa0] sm:$0xff]
  %v86 = vld [vmem:[%s1 + $0xa8] sm:$0xff]
  %v87 = vld [vmem:[%s1 + $0xb0] sm:$0xff]
  %v88 = vld [vmem:[%s1 + $0xb8] sm:$0xff]
  %v89 = vld [vmem:[%s1 + $0xc0] sm:$0xff]
  %v90 = vld [vmem:[%s1 + $0xc8] sm:$0xff]
  %v91 = vld [vmem:[%s1 + $0xd0] sm:$0xff]
  %v92 = vld [vmem:[%s1 + $0xd8] sm:$0xff]
  %v93 = vld [vmem:[%s1 + $0xe0] sm:$0xff]
  %v94 = vld [vmem:[%s1 + $0xe8] sm:$0xff]
  %v95 = vld [vmem:[%s1 + $0xf0] sm:$0xff]
  %v96 = vld [vmem:[%s1 + $0xf8] sm:$0xff]
  %v113 = vunpack.c.l.b16 %v49
  %v114 = vunpack.c.l.b16 %v50
  %v115 = vunpack.c.l.b16 %v51
  %v116 = vunpack.c.l.b16 %v52
  %v117 = vunpack.c.l.b16 %v53
  %v118 = vunpack.c.l.b16 %v54
  %v119 = vunpack.c.l.b16 %v55
  %v120 = vunpack.c.l.b16 %v56
  %v121 = vunpack.c.l.b16 %v57
  %v122 = vunpack.c.l.b16 %v58
  %v123 = vunpack.c.l.b16 %v59
  %v124 = vunpack.c.l.b16 %v60
  %v125 = vunpack.c.l.b16 %v61
  %v126 = vunpack.c.l.b16 %v62
  %v127 = vunpack.c.l.b16 %v63
  %v128 = vunpack.c.l.b16 %v64
  %v129 = vpack.c.b16 %v114, %v113
  %v130 = vpack.c.b16 %v116, %v115
  %v131 = vpack.c.b16 %v118, %v117
  %v132 = vpack.c.b16 %v120, %v119
  %v133 = vpack.c.b16 %v122, %v121
  %v134 = vpack.c.b16 %v124, %v123
  %v135 = vpack.c.b16 %v126, %v125
  %v136 = vpack.c.b16 %v128, %v127
  %v177 = vunpack.c.l.b16 %v65
  %v178 = vunpack.c.h.b16 %v65
  %v179 = vunpack.c.l.b16 %v66
  %v180 = vunpack.c.h.b16 %v66
  %v181 = vunpack.c.l.b16 %v67
  %v182 = vunpack.c.h.b16 %v67
  %v183 = vunpack.c.l.b16 %v68
  %v184 = vunpack.c.h.b16 %v68
  %v185 = vunpack.c.l.b16 %v69
  %v186 = vunpack.c.h.b16 %v69
  %v187 = vunpack.c.l.b16 %v70
  %v188 = vunpack.c.h.b16 %v70
  %v189 = vunpack.c.l.b16 %v71
  %v190 = vunpack.c.h.b16 %v71
  %v191 = vunpack.c.l.b16 %v72
  %v192 = vunpack.c.h.b16 %v72
  %v193 = vunpack.c.l.b16 %v73
  %v194 = vunpack.c.h.b16 %v73
  %v195 = vunpack.c.l.b16 %v74
  %v196 = vunpack.c.h.b16 %v74
  %v197 = vunpack.c.l.b16 %v75
  %v198 = vunpack.c.h.b16 %v75
  %v199 = vunpack.c.l.b16 %v76
  %v200 = vunpack.c.h.b16 %v76
  %v201 = vunpack.c.l.b16 %v77
  %v202 = vunpack.c.h.b16 %v77
  %v203 = vunpack.c.l.b16 %v78
  %v204 = vunpack.c.h.b16 %v78
  %v205 = vunpack.c.l.b16 %v79
  %v206 = vunpack.c.h.b16 %v79
  %v207 = vunpack.c.l.b16 %v80
  %v208 = vunpack.c.h.b16 %v80
  %v209 = vunpack.c.l.b16 %v81
  %v210 = vunpack.c.h.b16 %v81
  %v211 = vunpack.c.l.b16 %v82
  %v212 = vunpack.c.h.b16 %v82
  %v213 = vunpack.c.l.b16 %v83
  %v214 = vunpack.c.h.b16 %v83
  %v215 = vunpack.c.l.b16 %v84
  %v216 = vunpack.c.h.b16 %v84
  %v217 = vunpack.c.l.b16 %v85
  %v218 = vunpack.c.h.b16 %v85
  %v219 = vunpack.c.l.b16 %v86
  %v220 = vunpack.c.h.b16 %v86
  %v221 = vunpack.c.l.b16 %v87
  %v222 = vunpack.c.h.b16 %v87
  %v223 = vunpack.c.l.b16 %v88
  %v224 = vunpack.c.h.b16 %v88
  %v225 = vunpack.c.l.b16 %v89
  %v226 = vunpack.c.h.b16 %v89
  %v227 = vunpack.c.l.b16 %v90
  %v228 = vunpack.c.h.b16 %v90
  %v229 = vunpack.c.l.b16 %v91
  %v230 = vunpack.c.h.b16 %v91
  %v231 = vunpack.c.l.b16 %v92
  %v232 = vunpack.c.h.b16 %v92
  %v233 = vunpack.c.l.b16 %v93
  %v234 = vunpack.c.h.b16 %v93
  %v235 = vunpack.c.l.b16 %v94
  %v236 = vunpack.c.h.b16 %v94
  %v237 = vunpack.c.l.b16 %v95
  %v238 = vunpack.c.h.b16 %v95
  %v239 = vunpack.c.l.b16 %v96
  %v240 = vunpack.c.h.b16 %v96
  %v241 = vpack.c.b16 %v181, %v177
  %v242 = vpack.c.b16 %v182, %v178
  %v243 = vpack.c.b16 %v183, %v179
  %v244 = vpack.c.b16 %v184, %v180
  %v245 = vpack.c.b16 %v189, %v185
  %v246 = vpack.c.b16 %v190, %v186
  %v247 = vpack.c.b16 %v191, %v187
  %v248 = vpack.c.b16 %v192, %v188
  %v249 = vpack.c.b16 %v197, %v193
  %v250 = vpack.c.b16 %v198, %v194
  %v251 = vpack.c.b16 %v199, %v195
  %v252 = vpack.c.b16 %v200, %v196
  %v253 = vpack.c.b16 %v205, %v201
  %v254 = vpack.c.b16 %v206, %v202
  %v255 = vpack.c.b16 %v207, %v203
  %v256 = vpack.c.b16 %v208, %v204
  %v257 = vpack.c.b16 %v213, %v209
  %v258 = vpack.c.b16 %v214, %v210
  %v259 = vpack.c.b16 %v215, %v211
  %v260 = vpack.c.b16 %v216, %v212
  %v261 = vpack.c.b16 %v221, %v217
  %v262 = vpack.c.b16 %v222, %v218
  %v263 = vpack.c.b16 %v223, %v219
  %v264 = vpack.c.b16 %v224, %v220
  %v265 = vpack.c.b16 %v229, %v225
  %v266 = vpack.c.b16 %v230, %v226
  %v267 = vpack.c.b16 %v231, %v227
  %v268 = vpack.c.b16 %v232, %v228
  %v269 = vpack.c.b16 %v237, %v233
  %v270 = vpack.c.b16 %v238, %v234
  %v271 = vpack.c.b16 %v239, %v235
  %v272 = vpack.c.b16 %v240, %v236
  %305 = vmatprep.subr.bf16.mxu0 %v242
  %306 = vmatpush1.bf16.msra.mxu0 %v241
  %307 = vmatprep.subr.bf16.mxu0 %v246
  %308 = vmatpush1.bf16.msra.mxu0 %v245
  %309 = vmatprep.subr.bf16.mxu0 %v250
  %310 = vmatpush1.bf16.msra.mxu0 %v249
  %311 = vmatprep.subr.bf16.mxu0 %v254
  %312 = vmatpush1.bf16.msra.mxu0 %v253
  %313 = vmatprep.subr.bf16.mxu0 %v258
  %314 = vmatpush1.bf16.msra.mxu0 %v257
  %315 = vmatprep.subr.bf16.mxu0 %v262
  %316 = vmatpush1.bf16.msra.mxu0 %v261
  %317 = vmatprep.subr.bf16.mxu0 %v266
  %318 = vmatpush1.bf16.msra.mxu0 %v265
  %319 = vmatprep.subr.bf16.mxu0 %v270
  %320 = vmatpush1.bf16.msra.mxu0 %v269
  %321 = vmatprep.subr.bf16.mxu0 0
  %322 = vmatpush1.bf16.msra.mxu0 0
  %323 = vmatprep.subr.bf16.mxu0 0
  %324 = vmatpush1.bf16.msra.mxu0 0
  %325 = vmatprep.subr.bf16.mxu0 0
  %326 = vmatpush1.bf16.msra.mxu0 0
  %327 = vmatprep.subr.bf16.mxu0 0
  %328 = vmatpush1.bf16.msra.mxu0 0
  %329 = vmatprep.subr.bf16.mxu0 0
  %330 = vmatpush1.bf16.msra.mxu0 0
  %331 = vmatprep.subr.bf16.mxu0 0
  %332 = vmatpush1.bf16.msra.mxu0 0
  %333 = vmatprep.subr.bf16.mxu0 0
  %334 = vmatpush1.bf16.msra.mxu0 0
  %335 = vmatprep.subr.bf16.mxu0 0
  %336 = vmatpush1.bf16.msra.mxu0 0
  %337 = vmatprep.mubr.bf16.mxu0 0
  %338 = vmatmul.mubr.bf16.gmra.mrb[0].mxu0 %v129
  %v339 = vpop.f32.mrb[0].mxu0
  %v340 = vadd.f32 0.0, %v339
  %v341 = vpop.f32.mrb[0].mxu0
  %v342 = vadd.f32 0.0, %v341
  %v343 = vpop.f32.mrb[0].mxu0
  %v344 = vadd.f32 0.0, %v343
  %v345 = vpop.f32.mrb[0].mxu0
  %v346 = vadd.f32 0.0, %v345
  %347 = vmatprep.mubr.bf16.mxu0 0
  %348 = vmatmul.mubr.bf16.gmra.mrb[0].mxu0 %v130
  %v349 = vpop.f32.mrb[0].mxu0
  %v350 = vadd.f32 0.0, %v349
  %v351 = vpop.f32.mrb[0].mxu0
  %v352 = vadd.f32 0.0, %v351
  %v353 = vpop.f32.mrb[0].mxu0
  %v354 = vadd.f32 0.0, %v353
  %v355 = vpop.f32.mrb[0].mxu0
  %v356 = vadd.f32 0.0, %v355
  %357 = vmatprep.mubr.bf16.mxu0 0
  %358 = vmatmul.mubr.bf16.gmra.mrb[0].mxu0 %v131
  %v359 = vpop.f32.mrb[0].mxu0
  %v360 = vadd.f32 0.0, %v359
  %v361 = vpop.f32.mrb[0].mxu0
  %v362 = vadd.f32 0.0, %v361
  %v363 = vpop.f32.mrb[0].mxu0
  %v364 = vadd.f32 0.0, %v363
  %v365 = vpop.f32.mrb[0].mxu0
  %v366 = vadd.f32 0.0, %v365
  %367 = vmatprep.mubr.bf16.mxu0 0
  %368 = vmatmul.mubr.bf16.gmra.mrb[0].mxu0 %v132
  %v369 = vpop.f32.mrb[0].mxu0
  %v370 = vadd.f32 0.0, %v369
  %v371 = vpop.f32.mrb[0].mxu0
  %v372 = vadd.f32 0.0, %v371
  %v373 = vpop.f32.mrb[0].mxu0
  %v374 = vadd.f32 0.0, %v373
  %v375 = vpop.f32.mrb[0].mxu0
  %v376 = vadd.f32 0.0, %v375
  %377 = vmatprep.mubr.bf16.mxu0 0
  %378 = vmatmul.mubr.bf16.gmra.mrb[0].mxu0 %v133
  %v379 = vpop.f32.mrb[0].mxu0
  %v380 = vadd.f32 0.0, %v379
  %v381 = vpop.f32.mrb[0].mxu0
  %v382 = vadd.f32 0.0, %v381
  %v383 = vpop.f32.mrb[0].mxu0
  %v384 = vadd.f32 0.0, %v383
  %v385 = vpop.f32.mrb[0].mxu0
  %v386 = vadd.f32 0.0, %v385
  %387 = vmatprep.mubr.bf16.mxu0 0
  %388 = vmatmul.mubr.bf16.gmra.mrb[0].mxu0 %v134
  %v389 = vpop.f32.mrb[0].mxu0
  %v390 = vadd.f32 0.0, %v389
  %v391 = vpop.f32.mrb[0].mxu0
  %v392 = vadd.f32 0.0, %v391
  %v393 = vpop.f32.mrb[0].mxu0
  %v394 = vadd.f32 0.0, %v393
  %v395 = vpop.f32.mrb[0].mxu0
  %v396 = vadd.f32 0.0, %v395
  %397 = vmatprep.mubr.bf16.mxu0 0
  %398 = vmatmul.mubr.bf16.gmra.mrb[0].mxu0 %v135
  %v399 = vpop.f32.mrb[0].mxu0
  %v400 = vadd.f32 0.0, %v399
  %v401 = vpop.f32.mrb[0].mxu0
  %v402 = vadd.f32 0.0, %v401
  %v403 = vpop.f32.mrb[0].mxu0
  %v404 = vadd.f32 0.0, %v403
  %v405 = vpop.f32.mrb[0].mxu0
  %v406 = vadd.f32 0.0, %v405
  %407 = vmatprep.mubr.bf16.mxu0 0
  %408 = vmatmul.mubr.bf16.gmra.mrb[0].mxu0 %v136
  %v409 = vpop.f32.mrb[0].mxu0
  %v410 = vadd.f32 0.0, %v409
  %v411 = vpop.f32.mrb[0].mxu0
  %v412 = vadd.f32 0.0, %v411
  %v413 = vpop.f32.mrb[0].mxu0
  %v414 = vadd.f32 0.0, %v413
  %v415 = vpop.f32.mrb[0].mxu0
  %v416 = vadd.f32 0.0, %v415
  %417 = vdwg.mxu0
  %418 = vmatprep.subr.bf16.mxu0 %v244
  %419 = vmatpush1.bf16.msra.mxu0 %v243
  %420 = vmatprep.subr.bf16.mxu0 %v248
  %421 = vmatpush1.bf16.msra.mxu0 %v247
  %422 = vmatprep.subr.bf16.mxu0 %v252
  %423 = vmatpush1.bf16.msra.mxu0 %v251
  %424 = vmatprep.subr.bf16.mxu0 %v256
  %425 = vmatpush1.bf16.msra.mxu0 %v255
  %426 = vmatprep.subr.bf16.mxu0 %v260
  %427 = vmatpush1.bf16.msra.mxu0 %v259
  %428 = vmatprep.subr.bf16.mxu0 %v264
  %429 = vmatpush1.bf16.msra.mxu0 %v263
  %430 = vmatprep.subr.bf16.mxu0 %v268
  %431 = vmatpush1.bf16.msra.mxu0 %v267
  %432 = vmatprep.subr.bf16.mxu0 %v272
  %433 = vmatpush1.bf16.msra.mxu0 %v271
  %434 = vmatprep.subr.bf16.mxu0 0
  %435 = vmatpush1.bf16.msra.mxu0 0
  %436 = vmatprep.subr.bf16.mxu0 0
  %437 = vmatpush1.bf16.msra.mxu0 0
  %438 = vmatprep.subr.bf16.mxu0 0
  %439 = vmatpush1.bf16.msra.mxu0 0
  %440 = vmatprep.subr.bf16.mxu0 0
  %441 = vmatpush1.bf16.msra.mxu0 0
  %442 = vmatprep.subr.bf16.mxu0 0
  %443 = vmatpush1.bf16.msra.mxu0 0
  %444 = vmatprep.subr.bf16.mxu0 0
  %445 = vmatpush1.bf16.msra.mxu0 0
  %446 = vmatprep.subr.bf16.mxu0 0
  %447 = vmatpush1.bf16.msra.mxu0 0
  %448 = vmatprep.subr.bf16.mxu0 0
  %449 = vmatpush1.bf16.msra.mxu0 0
  %450 = vmatprep.mubr.bf16.mxu0 0
  %451 = vmatmul.mubr.bf16.gmra.mrb[0].mxu0 %v129
  %v452 = vpop.f32.mrb[0].mxu0
  %v453 = vadd.f32 0.0, %v452
  %v454 = vpop.f32.mrb[0].mxu0
  %v455 = vadd.f32 0.0, %v454
  %v456 = vpop.f32.mrb[0].mxu0
  %v457 = vadd.f32 0.0, %v456
  %v458 = vpop.f32.mrb[0].mxu0
  %v459 = vadd.f32 0.0, %v458
  %460 = vmatprep.mubr.bf16.mxu0 0
  %461 = vmatmul.mubr.bf16.gmra.mrb[0].mxu0 %v130
  %v462 = vpop.f32.mrb[0].mxu0
  %v463 = vadd.f32 0.0, %v462
  %v464 = vpop.f32.mrb[0].mxu0
  %v465 = vadd.f32 0.0, %v464
  %v466 = vpop.f32.mrb[0].mxu0
  %v467 = vadd.f32 0.0, %v466
  %v468 = vpop.f32.mrb[0].mxu0
  %v469 = vadd.f32 0.0, %v468
  %470 = vmatprep.mubr.bf16.mxu0 0
  %471 = vmatmul.mubr.bf16.gmra.mrb[0].mxu0 %v131
  %v472 = vpop.f32.mrb[0].mxu0
  %v473 = vadd.f32 0.0, %v472
  %v474 = vpop.f32.mrb[0].mxu0
  %v475 = vadd.f32 0.0, %v474
  %v476 = vpop.f32.mrb[0].mxu0
  %v477 = vadd.f32 0.0, %v476
  %v478 = vpop.f32.mrb[0].mxu0
  %v479 = vadd.f32 0.0, %v478
  %480 = vmatprep.mubr.bf16.mxu0 0
  %481 = vmatmul.mubr.bf16.gmra.mrb[0].mxu0 %v132
  %v482 = vpop.f32.mrb[0].mxu0
  %v483 = vadd.f32 0.0, %v482
  %v484 = vpop.f32.mrb[0].mxu0
  %v485 = vadd.f32 0.0, %v484
  %v486 = vpop.f32.mrb[0].mxu0
  %v487 = vadd.f32 0.0, %v486
  %v488 = vpop.f32.mrb[0].mxu0
  %v489 = vadd.f32 0.0, %v488
  %490 = vmatprep.mubr.bf16.mxu0 0
  %491 = vmatmul.mubr.bf16.gmra.mrb[0].mxu0 %v133
  %v492 = vpop.f32.mrb[0].mxu0
  %v493 = vadd.f32 0.0, %v492
  %v494 = vpop.f32.mrb[0].mxu0
  %v495 = vadd.f32 0.0, %v494
  %v496 = vpop.f32.mrb[0].mxu0
  %v497 = vadd.f32 0.0, %v496
  %v498 = vpop.f32.mrb[0].mxu0
  %v499 = vadd.f32 0.0, %v498
  %500 = vmatprep.mubr.bf16.mxu0 0
  %501 = vmatmul.mubr.bf16.gmra.mrb[0].mxu0 %v134
  %v502 = vpop.f32.mrb[0].mxu0
  %v503 = vadd.f32 0.0, %v502
  %v504 = vpop.f32.mrb[0].mxu0
  %v505 = vadd.f32 0.0, %v504
  %v506 = vpop.f32.mrb[0].mxu0
  %v507 = vadd.f32 0.0, %v506
  %v508 = vpop.f32.mrb[0].mxu0
  %v509 = vadd.f32 0.0, %v508
  %510 = vmatprep.mubr.bf16.mxu0 0
  %511 = vmatmul.mubr.bf16.gmra.mrb[0].mxu0 %v135
  %v512 = vpop.f32.mrb[0].mxu0
  %v513 = vadd.f32 0.0, %v512
  %v514 = vpop.f32.mrb[0].mxu0
  %v515 = vadd.f32 0.0, %v514
  %v516 = vpop.f32.mrb[0].mxu0
  %v517 = vadd.f32 0.0, %v516
  %v518 = vpop.f32.mrb[0].mxu0
  %v519 = vadd.f32 0.0, %v518
  %520 = vmatprep.mubr.bf16.mxu0 0
  %521 = vmatmul.mubr.bf16.gmra.mrb[0].mxu0 %v136
  %v522 = vpop.f32.mrb[0].mxu0
  %v523 = vadd.f32 0.0, %v522
  %v524 = vpop.f32.mrb[0].mxu0
  %v525 = vadd.f32 0.0, %v524
  %v526 = vpop.f32.mrb[0].mxu0
  %v527 = vadd.f32 0.0, %v526
  %v528 = vpop.f32.mrb[0].mxu0
  %v529 = vadd.f32 0.0, %v528
  %530 = vdwg.mxu0
  %v531 = vmax.f32 %v340, 0.0
  %v532 = vmax.f32 %v342, 0.0
  %v533 = vmax.f32 %v453, 0.0
  %v534 = vmax.f32 %v455, 0.0
  %v535 = vmax.f32 %v344, 0.0
  %v536 = vmax.f32 %v346, 0.0
  %v537 = vmax.f32 %v457, 0.0
  %v538 = vmax.f32 %v459, 0.0
  %v539 = vmax.f32 %v350, 0.0
  %v540 = vmax.f32 %v352, 0.0
  %v541 = vmax.f32 %v463, 0.0
  %v542 = vmax.f32 %v465, 0.0
  %v543 = vmax.f32 %v354, 0.0
  %v544 = vmax.f32 %v356, 0.0
  %v545 = vmax.f32 %v467, 0.0
  %v546 = vmax.f32 %v469, 0.0
  %v547 = vmax.f32 %v360, 0.0
  %v548 = vmax.f32 %v362, 0.0
  %v549 = vmax.f32 %v473, 0.0
  %v550 = vmax.f32 %v475, 0.0
  %v551 = vmax.f32 %v364, 0.0
  %v552 = vmax.f32 %v366, 0.0
  %v553 = vmax.f32 %v477, 0.0
  %v554 = vmax.f32 %v479, 0.0
  %v555 = vmax.f32 %v370, 0.0
  %v556 = vmax.f32 %v372, 0.0
  %v557 = vmax.f32 %v483, 0.0
  %v558 = vmax.f32 %v485, 0.0
  %v559 = vmax.f32 %v374, 0.0
  %v560 = vmax.f32 %v376, 0.0
  %v561 = vmax.f32 %v487, 0.0
  %v562 = vmax.f32 %v489, 0.0
  %v563 = vmax.f32 %v380, 0.0
  %v564 = vmax.f32 %v382, 0.0
  %v565 = vmax.f32 %v493, 0.0
  %v566 = vmax.f32 %v495, 0.0
  %v567 = vmax.f32 %v384, 0.0
  %v568 = vmax.f32 %v386, 0.0
  %v569 = vmax.f32 %v497, 0.0
  %v570 = vmax.f32 %v499, 0.0
  %v571 = vmax.f32 %v390, 0.0
  %v572 = vmax.f32 %v392, 0.0
  %v573 = vmax.f32 %v503, 0.0
  %v574 = vmax.f32 %v505, 0.0
  %v575 = vmax.f32 %v394, 0.0
  %v576 = vmax.f32 %v396, 0.0
  %v577 = vmax.f32 %v507, 0.0
  %v578 = vmax.f32 %v509, 0.0
  %v579 = vmax.f32 %v400, 0.0
  %v580 = vmax.f32 %v402, 0.0
  %v581 = vmax.f32 %v513, 0.0
  %v582 = vmax.f32 %v515, 0.0
  %v583 = vmax.f32 %v404, 0.0
  %v584 = vmax.f32 %v406, 0.0
  %v585 = vmax.f32 %v517, 0.0
  %v586 = vmax.f32 %v519, 0.0
  %v587 = vmax.f32 %v410, 0.0
  %v588 = vmax.f32 %v412, 0.0
  %v589 = vmax.f32 %v523, 0.0
  %v590 = vmax.f32 %v525, 0.0
  %v591 = vmax.f32 %v414, 0.0
  %v592 = vmax.f32 %v416, 0.0
  %v593 = vmax.f32 %v527, 0.0
  %v594 = vmax.f32 %v529, 0.0
  %v595 = vpack.c.bf16 %v535, %v531
  %v596 = vpack.c.bf16 %v536, %v532
  %v597 = vpack.c.bf16 %v537, %v533
  %v598 = vpack.c.bf16 %v538, %v534
  %v599 = vpack.c.bf16 %v543, %v539
  %v600 = vpack.c.bf16 %v544, %v540
  %v601 = vpack.c.bf16 %v545, %v541
  %v602 = vpack.c.bf16 %v546, %v542
  %v603 = vpack.c.bf16 %v551, %v547
  %v604 = vpack.c.bf16 %v552, %v548
  %v605 = vpack.c.bf16 %v553, %v549
  %v606 = vpack.c.bf16 %v554, %v550
  %v607 = vpack.c.bf16 %v559, %v555
  %v608 = vpack.c.bf16 %v560, %v556
  %v609 = vpack.c.bf16 %v561, %v557
  %v610 = vpack.c.bf16 %v562, %v558
  %v611 = vpack.c.bf16 %v567, %v563
  %v612 = vpack.c.bf16 %v568, %v564
  %v613 = vpack.c.bf16 %v569, %v565
  %v614 = vpack.c.bf16 %v570, %v566
  %v615 = vpack.c.bf16 %v575, %v571
  %v616 = vpack.c.bf16 %v576, %v572
  %v617 = vpack.c.bf16 %v577, %v573
  %v618 = vpack.c.bf16 %v578, %v574
  %v619 = vpack.c.bf16 %v583, %v579
  %v620 = vpack.c.bf16 %v584, %v580
  %v621 = vpack.c.bf16 %v585, %v581
  %v622 = vpack.c.bf16 %v586, %v582
  %v623 = vpack.c.bf16 %v591, %v587
  %v624 = vpack.c.bf16 %v592, %v588
  %v625 = vpack.c.bf16 %v593, %v589
  %v626 = vpack.c.bf16 %v594, %v590
  %v627 = vlaneseq
  %v628 = vshrl.u32 %v627, 7
  %v629 = vlaneseq
  %v630 = vand.u32 %v629, 127
  %v631 = vadd.s32 %v630, 128
  %v632 = vadd.s32 %v630, 256
  %v633 = vadd.s32 %v630, 384
  %v634 = vshrl.u32 %v630, 8
  %v635 = vshrl.u32 %v631, 8
  %v636 = vshrl.u32 %v632, 8
  %v637 = vshrl.u32 %v633, 8
  %v638 = vand.u32 %v630, 255
  %v639 = vand.u32 %v631, 255
  %v640 = vand.u32 %v632, 255
  %v641 = vand.u32 %v633, 255
  %vm642 = vcmp.eq.s32.totalorder %v634, %v628
  %vm643 = vcmp.eq.s32.totalorder %v635, %v628
  %vm644 = vcmp.eq.s32.totalorder %v636, %v628
  %vm645 = vcmp.eq.s32.totalorder %v637, %v628
  %v646 = vsel %vm642, 0.00390625, 0.0
  %v647 = vsel %vm643, 0.00390625, 0.0
  %v648 = vsel %vm644, 0.00390625, 0.0
  %v649 = vsel %vm645, 0.00390625, 0.0
  %v650 = vpack.c.bf16 %v646, %v646
  %v651 = vpack.c.bf16 %v647, %v647
  %v652 = vpack.c.bf16 %v648, %v648
  %v653 = vpack.c.bf16 %v649, %v649
  %654 = vmatprep.subr.bf16.mxu0 %v596
  %655 = vmatpush1.bf16.xpose.msra.mxu0 %v595
  %656 = vmatprep.subr.bf16.mxu0 %v600
  %657 = vmatpush1.bf16.xpose.msra.mxu0 %v599
  %658 = vmatprep.subr.bf16.mxu0 %v604
  %659 = vmatpush1.bf16.xpose.msra.mxu0 %v603
  %660 = vmatprep.subr.bf16.mxu0 %v608
  %661 = vmatpush1.bf16.xpose.msra.mxu0 %v607
  %662 = vmatprep.subr.bf16.mxu0 %v612
  %663 = vmatpush1.bf16.xpose.msra.mxu0 %v611
  %664 = vmatprep.subr.bf16.mxu0 %v616
  %665 = vmatpush1.bf16.xpose.msra.mxu0 %v615
  %666 = vmatprep.subr.bf16.mxu0 %v620
  %667 = vmatpush1.bf16.xpose.msra.mxu0 %v619
  %668 = vmatprep.subr.bf16.mxu0 %v624
  %669 = vmatpush1.bf16.xpose.msra.mxu0 %v623
  %670 = vmatprep.subr.bf16.mxu0 0
  %671 = vmatpush1.bf16.xpose.msra.mxu0 0
  %672 = vmatprep.subr.bf16.mxu0 0
  %673 = vmatpush1.bf16.xpose.msra.mxu0 0
  %674 = vmatprep.subr.bf16.mxu0 0
  %675 = vmatpush1.bf16.xpose.msra.mxu0 0
  %676 = vmatprep.subr.bf16.mxu0 0
  %677 = vmatpush1.bf16.xpose.msra.mxu0 0
  %678 = vmatprep.subr.bf16.mxu0 0
  %679 = vmatpush1.bf16.xpose.msra.mxu0 0
  %680 = vmatprep.subr.bf16.mxu0 0
  %681 = vmatpush1.bf16.xpose.msra.mxu0 0
  %682 = vmatprep.subr.bf16.mxu0 0
  %683 = vmatpush1.bf16.xpose.msra.mxu0 0
  %684 = vmatprep.subr.bf16.mxu0 0
  %685 = vmatpush1.bf16.xpose.msra.mxu0 0
  %686 = vmatprep.mubr.bf16.mxu0 %v651
  %687 = vmatmul.mubr.bf16.gmra.mrb[0].mxu0 %v650
  %v688 = vpop.f32.mrb[0].mxu0
  %v689 = vadd.f32 0.0, %v688
  %v690 = vpop.f32.mrb[0].mxu0
  %v691 = vpop.f32.mrb[0].mxu0
  %v692 = vpop.f32.mrb[0].mxu0
  %693 = vdwg.mxu0
  %694 = vmatprep.subr.bf16.mxu0 %v598
  %695 = vmatpush1.bf16.xpose.msra.mxu0 %v597
  %696 = vmatprep.subr.bf16.mxu0 %v602
  %697 = vmatpush1.bf16.xpose.msra.mxu0 %v601
  %698 = vmatprep.subr.bf16.mxu0 %v606
  %699 = vmatpush1.bf16.xpose.msra.mxu0 %v605
  %700 = vmatprep.subr.bf16.mxu0 %v610
  %701 = vmatpush1.bf16.xpose.msra.mxu0 %v609
  %702 = vmatprep.subr.bf16.mxu0 %v614
  %703 = vmatpush1.bf16.xpose.msra.mxu0 %v613
  %704 = vmatprep.subr.bf16.mxu0 %v618
  %705 = vmatpush1.bf16.xpose.msra.mxu0 %v617
  %706 = vmatprep.subr.bf16.mxu0 %v622
  %707 = vmatpush1.bf16.xpose.msra.mxu0 %v621
  %708 = vmatprep.subr.bf16.mxu0 %v626
  %709 = vmatpush1.bf16.xpose.msra.mxu0 %v625
  %710 = vmatprep.subr.bf16.mxu0 0
  %711 = vmatpush1.bf16.xpose.msra.mxu0 0
  %712 = vmatprep.subr.bf16.mxu0 0
  %713 = vmatpush1.bf16.xpose.msra.mxu0 0
  %714 = vmatprep.subr.bf16.mxu0 0
  %715 = vmatpush1.bf16.xpose.msra.mxu0 0
  %716 = vmatprep.subr.bf16.mxu0 0
  %717 = vmatpush1.bf16.xpose.msra.mxu0 0
  %718 = vmatprep.subr.bf16.mxu0 0
  %719 = vmatpush1.bf16.xpose.msra.mxu0 0
  %720 = vmatprep.subr.bf16.mxu0 0
  %721 = vmatpush1.bf16.xpose.msra.mxu0 0
  %722 = vmatprep.subr.bf16.mxu0 0
  %723 = vmatpush1.bf16.xpose.msra.mxu0 0
  %724 = vmatprep.subr.bf16.mxu0 0
  %725 = vmatpush1.bf16.xpose.msra.mxu0 0
  %726 = vmatprep.mubr.bf16.mxu0 %v653
  %727 = vmatmul.mubr.bf16.gmra.mrb[0].mxu0 %v652
  %v728 = vpop.f32.mrb[0].mxu0
  %v729 = vadd.f32 %v689, %v728
  %v730 = vpop.f32.mrb[0].mxu0
  %v731 = vpop.f32.mrb[0].mxu0
  %v732 = vpop.f32.mrb[0].mxu0
  %733 = vdwg.mxu0
  %v734 = vld [vmem:[%s7] sm:$0xf]
  %v735 = vld [vmem:[%s7 + $0x4] sm:$0xf]
  %v736 = vld [vmem:[%s7 + $0x8] sm:$0xf]
  %v737 = vld [vmem:[%s7 + $0xc] sm:$0xf]
  %v738 = vld [vmem:[%s7 + $0x10] sm:$0xf]
  %v739 = vld [vmem:[%s7 + $0x14] sm:$0xf]
  %v740 = vld [vmem:[%s7 + $0x18] sm:$0xf]
  %v741 = vld [vmem:[%s7 + $0x1c] sm:$0xf]
  %v742 = vld [vmem:[%s7 + $0x20] sm:$0xf]
  %v743 = vld [vmem:[%s7 + $0x24] sm:$0xf]
  %v744 = vld [vmem:[%s7 + $0x28] sm:$0xf]
  %v745 = vld [vmem:[%s7 + $0x2c] sm:$0xf]
  %v746 = vld [vmem:[%s7 + $0x30] sm:$0xf]
  %v747 = vld [vmem:[%s7 + $0x34] sm:$0xf]
  %v748 = vld [vmem:[%s7 + $0x38] sm:$0xf]
  %v749 = vld [vmem:[%s7 + $0x3c] sm:$0xf]
  %v750 = vpack.c.bf16 %v729, %v729
  %v751 = vld [vmem:[%s12] ss:$0 sm:$0xff]
  %v768 = vunpack.c.l.b16 %v734
  %v769 = vunpack.c.l.b16 %v735
  %v770 = vunpack.c.l.b16 %v736
  %v771 = vunpack.c.l.b16 %v737
  %v772 = vunpack.c.l.b16 %v738
  %v773 = vunpack.c.l.b16 %v739
  %v774 = vunpack.c.l.b16 %v740
  %v775 = vunpack.c.l.b16 %v741
  %v776 = vunpack.c.l.b16 %v742
  %v777 = vunpack.c.l.b16 %v743
  %v778 = vunpack.c.l.b16 %v744
  %v779 = vunpack.c.l.b16 %v745
  %v780 = vunpack.c.l.b16 %v746
  %v781 = vunpack.c.l.b16 %v747
  %v782 = vunpack.c.l.b16 %v748
  %v783 = vunpack.c.l.b16 %v749
  %v784 = vpack.c.b16 %v769, %v768
  %v785 = vpack.c.b16 %v771, %v770
  %v786 = vpack.c.b16 %v773, %v772
  %v787 = vpack.c.b16 %v775, %v774
  %v788 = vpack.c.b16 %v777, %v776
  %v789 = vpack.c.b16 %v779, %v778
  %v790 = vpack.c.b16 %v781, %v780
  %v791 = vpack.c.b16 %v783, %v782
  %800 = vmatprep.subr.bf16.mxu0 0
  %801 = vmatpush1.bf16.msra.mxu0 %v784
  %802 = vmatprep.subr.bf16.mxu0 0
  %803 = vmatpush1.bf16.msra.mxu0 %v785
  %804 = vmatprep.subr.bf16.mxu0 0
  %805 = vmatpush1.bf16.msra.mxu0 %v786
  %806 = vmatprep.subr.bf16.mxu0 0
  %807 = vmatpush1.bf16.msra.mxu0 %v787
  %808 = vmatprep.subr.bf16.mxu0 0
  %809 = vmatpush1.bf16.msra.mxu0 %v788
  %810 = vmatprep.subr.bf16.mxu0 0
  %811 = vmatpush1.bf16.msra.mxu0 %v789
  %812 = vmatprep.subr.bf16.mxu0 0
  %813 = vmatpush1.bf16.msra.mxu0 %v790
  %814 = vmatprep.subr.bf16.mxu0 0
  %815 = vmatpush1.bf16.msra.mxu0 %v791
  %816 = vmatprep.subr.bf16.mxu0 0
  %817 = vmatpush1.bf16.msra.mxu0 0
  %818 = vmatprep.subr.bf16.mxu0 0
  %819 = vmatpush1.bf16.msra.mxu0 0
  %820 = vmatprep.subr.bf16.mxu0 0
  %821 = vmatpush1.bf16.msra.mxu0 0
  %822 = vmatprep.subr.bf16.mxu0 0
  %823 = vmatpush1.bf16.msra.mxu0 0
  %824 = vmatprep.subr.bf16.mxu0 0
  %825 = vmatpush1.bf16.msra.mxu0 0
  %826 = vmatprep.subr.bf16.mxu0 0
  %827 = vmatpush1.bf16.msra.mxu0 0
  %828 = vmatprep.subr.bf16.mxu0 0
  %829 = vmatpush1.bf16.msra.mxu0 0
  %830 = vmatprep.subr.bf16.mxu0 0
  %831 = vmatpush1.bf16.msra.mxu0 0
  %832 = vmatprep.mubr.bf16.mxu0 0
  %833 = vmatmul.mubr.bf16.gmra.mrb[0].mxu0 %v750
  %v834 = vpop.f32.mrb[0].mxu0
  %v835 = vadd.f32 %v751, %v834
  %v836 = vpop.f32.mrb[0].mxu0
  %v837 = vpop.f32.mrb[0].mxu0
  %v838 = vpop.f32.mrb[0].mxu0
  %839 = vdwg.mxu0
  %v840 = vmax.f32 %v835, 0.0
  %v841 = vld [vmem:[%s2] sm:$0xf]
  %v842 = vld [vmem:[%s2 + $0x4] sm:$0xf]
  %s843 = scalar_lea.vmem %s7, 64
  %v844 = vld [vmem:[%s843] sm:$0xf]
  %v845 = vld [vmem:[%s843 + $0x4] sm:$0xf]
  %v846 = vld [vmem:[%s843 + $0x8] sm:$0xf]
  %v847 = vld [vmem:[%s843 + $0xc] sm:$0xf]
  %v848 = vld [vmem:[%s843 + $0x10] sm:$0xf]
  %v849 = vld [vmem:[%s843 + $0x14] sm:$0xf]
  %v850 = vld [vmem:[%s843 + $0x18] sm:$0xf]
  %v851 = vld [vmem:[%s843 + $0x1c] sm:$0xf]
  %v852 = vld [vmem:[%s843 + $0x20] sm:$0xf]
  %v853 = vld [vmem:[%s843 + $0x24] sm:$0xf]
  %v854 = vld [vmem:[%s843 + $0x28] sm:$0xf]
  %v855 = vld [vmem:[%s843 + $0x2c] sm:$0xf]
  %v856 = vld [vmem:[%s843 + $0x30] sm:$0xf]
  %v857 = vld [vmem:[%s843 + $0x34] sm:$0xf]
  %v858 = vld [vmem:[%s843 + $0x38] sm:$0xf]
  %v859 = vld [vmem:[%s843 + $0x3c] sm:$0xf]
  %v860 = vld [vmem:[%s12 + $0x1] ss:$0 sm:$0xff]
  %v863 = vunpack.c.l.b16 %v841
  %v864 = vunpack.c.l.b16 %v842
  %v865 = vpack.c.b16 %v864, %v863
  %v883 = vunpack.c.l.b16 %v844
  %v884 = vunpack.c.l.b16 %v845
  %v885 = vunpack.c.l.b16 %v846
  %v886 = vunpack.c.l.b16 %v847
  %v887 = vunpack.c.l.b16 %v848
  %v888 = vunpack.c.l.b16 %v849
  %v889 = vunpack.c.l.b16 %v850
  %v890 = vunpack.c.l.b16 %v851
  %v891 = vunpack.c.l.b16 %v852
  %v892 = vunpack.c.l.b16 %v853
  %v893 = vunpack.c.l.b16 %v854
  %v894 = vunpack.c.l.b16 %v855
  %v895 = vunpack.c.l.b16 %v856
  %v896 = vunpack.c.l.b16 %v857
  %v897 = vunpack.c.l.b16 %v858
  %v898 = vunpack.c.l.b16 %v859
  %v899 = vpack.c.b16 %v884, %v883
  %v900 = vpack.c.b16 %v886, %v885
  %v901 = vpack.c.b16 %v888, %v887
  %v902 = vpack.c.b16 %v890, %v889
  %v903 = vpack.c.b16 %v892, %v891
  %v904 = vpack.c.b16 %v894, %v893
  %v905 = vpack.c.b16 %v896, %v895
  %v906 = vpack.c.b16 %v898, %v897
  %915 = vmatprep.subr.bf16.mxu0 0
  %916 = vmatpush1.bf16.msra.mxu0 %v899
  %917 = vmatprep.subr.bf16.mxu0 0
  %918 = vmatpush1.bf16.msra.mxu0 %v900
  %919 = vmatprep.subr.bf16.mxu0 0
  %920 = vmatpush1.bf16.msra.mxu0 %v901
  %921 = vmatprep.subr.bf16.mxu0 0
  %922 = vmatpush1.bf16.msra.mxu0 %v902
  %923 = vmatprep.subr.bf16.mxu0 0
  %924 = vmatpush1.bf16.msra.mxu0 %v903
  %925 = vmatprep.subr.bf16.mxu0 0
  %926 = vmatpush1.bf16.msra.mxu0 %v904
  %927 = vmatprep.subr.bf16.mxu0 0
  %928 = vmatpush1.bf16.msra.mxu0 %v905
  %929 = vmatprep.subr.bf16.mxu0 0
  %930 = vmatpush1.bf16.msra.mxu0 %v906
  %931 = vmatprep.subr.bf16.mxu0 0
  %932 = vmatpush1.bf16.msra.mxu0 0
  %933 = vmatprep.subr.bf16.mxu0 0
  %934 = vmatpush1.bf16.msra.mxu0 0
  %935 = vmatprep.subr.bf16.mxu0 0
  %936 = vmatpush1.bf16.msra.mxu0 0
  %937 = vmatprep.subr.bf16.mxu0 0
  %938 = vmatpush1.bf16.msra.mxu0 0
  %939 = vmatprep.subr.bf16.mxu0 0
  %940 = vmatpush1.bf16.msra.mxu0 0
  %941 = vmatprep.subr.bf16.mxu0 0
  %942 = vmatpush1.bf16.msra.mxu0 0
  %943 = vmatprep.subr.bf16.mxu0 0
  %944 = vmatpush1.bf16.msra.mxu0 0
  %945 = vmatprep.subr.bf16.mxu0 0
  %946 = vmatpush1.bf16.msra.mxu0 0
  %947 = vmatprep.mubr.bf16.mxu0 0
  %948 = vmatmul.mubr.bf16.gmra.mrb[0].mxu0 %v865
  %v949 = vpop.f32.mrb[0].mxu0
  %v950 = vadd.f32 %v860, %v949
  %v951 = vpop.f32.mrb[0].mxu0
  %v952 = vpop.f32.mrb[0].mxu0
  %v953 = vadd.f32 %v860, %v952
  %v954 = vpop.f32.mrb[0].mxu0
  %955 = vdwg.mxu0
  %v956 = vmax.f32 %v950, 0.0
  %v957 = vmax.f32 %v953, 0.0
  %v959 = vunpack.c.l.s4 1966171168
  %v960 = vunpack.c.0.s8 %v959
  %v961 = vlaneseq
  %v962 = vshrl.u32 %v961, 7
  %v963 = vsub.s32 %v960, %v962
  %v964 = vrot.slane %v48, %v963
  %v965 = vcombine.high %v964, %v964
  %v967 = vunpack.c.l.s4 1966171168
  %v968 = vunpack.c.0.s8 %v967
  %v969 = vlaneseq
  %v970 = vshrl.u32 %v969, 7
  %v971 = vsub.s32 %v968, %v970
  %v972 = vrot.slane %v964, %v971
  %v974 = vunpack.c.l.s4 1966171168
  %v975 = vunpack.c.0.s8 %v974
  %v976 = vlaneseq
  %v977 = vshrl.u32 %v976, 7
  %v978 = vsub.s32 %v975, %v977
  %v979 = vrot.slane %v965, %v978
  %v980 = vlaneseq
  %v981 = vshrl.u32 %v980, 7
  %v982 = vsub.s32 0, %v981
  %v983 = vrot.slane %v972, %v982
  %v984 = vlaneseq
  %v985 = vshrl.u32 %v984, 7
  %v986 = vsub.s32 0, %v985
  %v987 = vrot.slane %v979, %v986
  %vm988 = vcmp.lt.s32.totalorder %v628, %v983
  %vm989 = vcmp.lt.s32.totalorder %v628, %v987
  %v990 = vsel %vm988, 1, 0
  %v991 = vsel %vm989, 1, 0
  %v992 = vcvt.s32.f32 %v990
  %v993 = vcvt.s32.f32 %v991
  %995 = vset.pattern.permute.xlu0 0
  %996 = vperm.xlu0 %995, %v992
  %v997 = vpop.permute.xlu0 %996
  %1000 = vset.pattern.permute.xlu0 0
  %1001 = vperm.xlu0 %1000, %v993
  %v1002 = vpop.permute.xlu0 %1001
  %v1004 = vmul.f32 %v956, %v997
  %v1005 = vmul.f32 %v957, %v1002
  %v1006 = vrot.slane %v1004, 4
  %v1007 = vadd.f32 %v1004, %v1006
  %v1008 = vrot.slane %v1007, 2
  %v1009 = vadd.f32 %v1007, %v1008
  %v1010 = vrot.slane %v1009, 1
  %v1011 = vadd.f32 %v1009, %v1010
  %v1012 = vrot.slane %v1005, 4
  %v1013 = vadd.f32 %v1005, %v1012
  %v1014 = vrot.slane %v1013, 2
  %v1015 = vadd.f32 %v1013, %v1014
  %v1016 = vrot.slane %v1015, 1
  %v1017 = vadd.f32 %v1015, %v1016
  %v1018 = vcvt.s32.f32 %v48
  %v1019 = vmax.f32 %v1018, 1.0
  %1021 = vset.pattern.permute.xlu0 0
  %1022 = vperm.xlu0 %1021, %v1019
  %v1023 = vpop.permute.xlu0 %1022
  %v1024 = vrot.slane %v1023, 1
  %v1027 = vrcp.pop %v1023
  %v1028 = vmul.f32 %v1011, %v1027
  %v1029 = vrcp.pop %v1024
  %v1030 = vmul.f32 %v1017, %v1029
  %s1031 = scalar_lea.vmem %s7, 128
  %v1032 = vld [vmem:[%s1031] sm:$0xf]
  %v1033 = vld [vmem:[%s1031 + $0x4] sm:$0xf]
  %v1034 = vld [vmem:[%s1031 + $0x8] sm:$0xf]
  %v1035 = vld [vmem:[%s1031 + $0xc] sm:$0xf]
  %v1036 = vld [vmem:[%s1031 + $0x10] sm:$0xf]
  %v1037 = vld [vmem:[%s1031 + $0x14] sm:$0xf]
  %v1038 = vld [vmem:[%s1031 + $0x18] sm:$0xf]
  %v1039 = vld [vmem:[%s1031 + $0x1c] sm:$0xf]
  %v1040 = vld [vmem:[%s1031 + $0x20] sm:$0xf]
  %v1041 = vld [vmem:[%s1031 + $0x24] sm:$0xf]
  %v1042 = vld [vmem:[%s1031 + $0x28] sm:$0xf]
  %v1043 = vld [vmem:[%s1031 + $0x2c] sm:$0xf]
  %v1044 = vld [vmem:[%s1031 + $0x30] sm:$0xf]
  %v1045 = vld [vmem:[%s1031 + $0x34] sm:$0xf]
  %v1046 = vld [vmem:[%s1031 + $0x38] sm:$0xf]
  %v1047 = vld [vmem:[%s1031 + $0x3c] sm:$0xf]
  %v1048 = vpack.c.bf16 %v1028, %v1028
  %v1049 = vpack.c.bf16 %v1030, %v1030
  %v1050 = vld [vmem:[%s12 + $0x2] ss:$0 sm:$0xff]
  %v1053 = vunpack.c.l.b16 %v1048
  %v1054 = vunpack.c.l.b16 %v1049
  %v1055 = vrot.slane %v1054, 7
  %vm1056 = vcmask 1041409
  %v1057 = vsel %vm1056, %v1055, %v1053
  %v1058 = vpack.c.b16 %v1057, %v1057
  %v1076 = vunpack.c.l.b16 %v1032
  %v1077 = vunpack.c.l.b16 %v1033
  %v1078 = vunpack.c.l.b16 %v1034
  %v1079 = vunpack.c.l.b16 %v1035
  %v1080 = vunpack.c.l.b16 %v1036
  %v1081 = vunpack.c.l.b16 %v1037
  %v1082 = vunpack.c.l.b16 %v1038
  %v1083 = vunpack.c.l.b16 %v1039
  %v1084 = vunpack.c.l.b16 %v1040
  %v1085 = vunpack.c.l.b16 %v1041
  %v1086 = vunpack.c.l.b16 %v1042
  %v1087 = vunpack.c.l.b16 %v1043
  %v1088 = vunpack.c.l.b16 %v1044
  %v1089 = vunpack.c.l.b16 %v1045
  %v1090 = vunpack.c.l.b16 %v1046
  %v1091 = vunpack.c.l.b16 %v1047
  %v1092 = vpack.c.b16 %v1077, %v1076
  %v1093 = vpack.c.b16 %v1079, %v1078
  %v1094 = vpack.c.b16 %v1081, %v1080
  %v1095 = vpack.c.b16 %v1083, %v1082
  %v1096 = vpack.c.b16 %v1085, %v1084
  %v1097 = vpack.c.b16 %v1087, %v1086
  %v1098 = vpack.c.b16 %v1089, %v1088
  %v1099 = vpack.c.b16 %v1091, %v1090
  %1108 = vmatprep.subr.bf16.mxu0 0
  %1109 = vmatpush1.bf16.msra.mxu0 %v1092
  %1110 = vmatprep.subr.bf16.mxu0 0
  %1111 = vmatpush1.bf16.msra.mxu0 %v1093
  %1112 = vmatprep.subr.bf16.mxu0 0
  %1113 = vmatpush1.bf16.msra.mxu0 %v1094
  %1114 = vmatprep.subr.bf16.mxu0 0
  %1115 = vmatpush1.bf16.msra.mxu0 %v1095
  %1116 = vmatprep.subr.bf16.mxu0 0
  %1117 = vmatpush1.bf16.msra.mxu0 %v1096
  %1118 = vmatprep.subr.bf16.mxu0 0
  %1119 = vmatpush1.bf16.msra.mxu0 %v1097
  %1120 = vmatprep.subr.bf16.mxu0 0
  %1121 = vmatpush1.bf16.msra.mxu0 %v1098
  %1122 = vmatprep.subr.bf16.mxu0 0
  %1123 = vmatpush1.bf16.msra.mxu0 %v1099
  %1124 = vmatprep.subr.bf16.mxu0 0
  %1125 = vmatpush1.bf16.msra.mxu0 0
  %1126 = vmatprep.subr.bf16.mxu0 0
  %1127 = vmatpush1.bf16.msra.mxu0 0
  %1128 = vmatprep.subr.bf16.mxu0 0
  %1129 = vmatpush1.bf16.msra.mxu0 0
  %1130 = vmatprep.subr.bf16.mxu0 0
  %1131 = vmatpush1.bf16.msra.mxu0 0
  %1132 = vmatprep.subr.bf16.mxu0 0
  %1133 = vmatpush1.bf16.msra.mxu0 0
  %1134 = vmatprep.subr.bf16.mxu0 0
  %1135 = vmatpush1.bf16.msra.mxu0 0
  %1136 = vmatprep.subr.bf16.mxu0 0
  %1137 = vmatpush1.bf16.msra.mxu0 0
  %1138 = vmatprep.subr.bf16.mxu0 0
  %1139 = vmatpush1.bf16.msra.mxu0 0
  %1140 = vmatprep.mubr.bf16.mxu0 0
  %1141 = vmatmul.mubr.bf16.gmra.mrb[0].mxu0 %v1058
  %v1142 = vpop.f32.mrb[0].mxu0
  %v1143 = vadd.f32 %v1050, %v1142
  %v1144 = vpop.f32.mrb[0].mxu0
  %v1145 = vpop.f32.mrb[0].mxu0
  %v1146 = vpop.f32.mrb[0].mxu0
  %1147 = vdwg.mxu0
  %v1148 = vmax.f32 %v1143, 0.0
  %v1149 = vld [vmem:[%s3] sm:$0x1]
  %s1150 = scalar_lea.vmem %s7, 192
  %v1151 = vld [vmem:[%s1150] sm:$0xf]
  %v1152 = vld [vmem:[%s1150 + $0x4] sm:$0xf]
  %v1153 = vld [vmem:[%s1150 + $0x8] sm:$0xf]
  %v1154 = vld [vmem:[%s1150 + $0xc] sm:$0xf]
  %v1155 = vld [vmem:[%s1150 + $0x10] sm:$0xf]
  %v1156 = vld [vmem:[%s1150 + $0x14] sm:$0xf]
  %v1157 = vld [vmem:[%s1150 + $0x18] sm:$0xf]
  %v1158 = vld [vmem:[%s1150 + $0x1c] sm:$0xf]
  %v1159 = vld [vmem:[%s1150 + $0x20] sm:$0xf]
  %v1160 = vld [vmem:[%s1150 + $0x24] sm:$0xf]
  %v1161 = vld [vmem:[%s1150 + $0x28] sm:$0xf]
  %v1162 = vld [vmem:[%s1150 + $0x2c] sm:$0xf]
  %v1163 = vld [vmem:[%s1150 + $0x30] sm:$0xf]
  %v1164 = vld [vmem:[%s1150 + $0x34] sm:$0xf]
  %v1165 = vld [vmem:[%s1150 + $0x38] sm:$0xf]
  %v1166 = vld [vmem:[%s1150 + $0x3c] sm:$0xf]
  %v1167 = vld [vmem:[%s12 + $0x3] ss:$0 sm:$0xff]
  %v1184 = vunpack.c.l.b16 %v1151
  %v1185 = vunpack.c.l.b16 %v1152
  %v1186 = vunpack.c.l.b16 %v1153
  %v1187 = vunpack.c.l.b16 %v1154
  %v1188 = vunpack.c.l.b16 %v1155
  %v1189 = vunpack.c.l.b16 %v1156
  %v1190 = vunpack.c.l.b16 %v1157
  %v1191 = vunpack.c.l.b16 %v1158
  %v1192 = vunpack.c.l.b16 %v1159
  %v1193 = vunpack.c.l.b16 %v1160
  %v1194 = vunpack.c.l.b16 %v1161
  %v1195 = vunpack.c.l.b16 %v1162
  %v1196 = vunpack.c.l.b16 %v1163
  %v1197 = vunpack.c.l.b16 %v1164
  %v1198 = vunpack.c.l.b16 %v1165
  %v1199 = vunpack.c.l.b16 %v1166
  %v1200 = vpack.c.b16 %v1185, %v1184
  %v1201 = vpack.c.b16 %v1187, %v1186
  %v1202 = vpack.c.b16 %v1189, %v1188
  %v1203 = vpack.c.b16 %v1191, %v1190
  %v1204 = vpack.c.b16 %v1193, %v1192
  %v1205 = vpack.c.b16 %v1195, %v1194
  %v1206 = vpack.c.b16 %v1197, %v1196
  %v1207 = vpack.c.b16 %v1199, %v1198
  %1216 = vmatprep.subr.bf16.mxu0 0
  %1217 = vmatpush1.bf16.msra.mxu0 %v1200
  %1218 = vmatprep.subr.bf16.mxu0 0
  %1219 = vmatpush1.bf16.msra.mxu0 %v1201
  %1220 = vmatprep.subr.bf16.mxu0 0
  %1221 = vmatpush1.bf16.msra.mxu0 %v1202
  %1222 = vmatprep.subr.bf16.mxu0 0
  %1223 = vmatpush1.bf16.msra.mxu0 %v1203
  %1224 = vmatprep.subr.bf16.mxu0 0
  %1225 = vmatpush1.bf16.msra.mxu0 %v1204
  %1226 = vmatprep.subr.bf16.mxu0 0
  %1227 = vmatpush1.bf16.msra.mxu0 %v1205
  %1228 = vmatprep.subr.bf16.mxu0 0
  %1229 = vmatpush1.bf16.msra.mxu0 %v1206
  %1230 = vmatprep.subr.bf16.mxu0 0
  %1231 = vmatpush1.bf16.msra.mxu0 %v1207
  %1232 = vmatprep.subr.bf16.mxu0 0
  %1233 = vmatpush1.bf16.msra.mxu0 0
  %1234 = vmatprep.subr.bf16.mxu0 0
  %1235 = vmatpush1.bf16.msra.mxu0 0
  %1236 = vmatprep.subr.bf16.mxu0 0
  %1237 = vmatpush1.bf16.msra.mxu0 0
  %1238 = vmatprep.subr.bf16.mxu0 0
  %1239 = vmatpush1.bf16.msra.mxu0 0
  %1240 = vmatprep.subr.bf16.mxu0 0
  %1241 = vmatpush1.bf16.msra.mxu0 0
  %1242 = vmatprep.subr.bf16.mxu0 0
  %1243 = vmatpush1.bf16.msra.mxu0 0
  %1244 = vmatprep.subr.bf16.mxu0 0
  %1245 = vmatpush1.bf16.msra.mxu0 0
  %1246 = vmatprep.subr.bf16.mxu0 0
  %1247 = vmatpush1.bf16.msra.mxu0 0
  %1248 = vmatprep.mubr.bf16.mxu0 0
  %1249 = vmatmul.mubr.bf16.gmra.mrb[0].mxu0 %v1149
  %v1250 = vpop.f32.mrb[0].mxu0
  %v1251 = vadd.f32 %v1167, %v1250
  %v1252 = vpop.f32.mrb[0].mxu0
  %v1253 = vpop.f32.mrb[0].mxu0
  %v1254 = vpop.f32.mrb[0].mxu0
  %1255 = vdwg.mxu0
  %v1256 = vmax.f32 %v1251, 0.0
  %v1257 = vld [vmem:[%s8] sm:$0xff]
  %v1258 = vld [vmem:[%s8 + $0x8] sm:$0xff]
  %v1259 = vld [vmem:[%s8 + $0x10] sm:$0xff]
  %v1260 = vld [vmem:[%s8 + $0x18] sm:$0xff]
  %v1261 = vld [vmem:[%s8 + $0x20] sm:$0xff]
  %v1262 = vld [vmem:[%s8 + $0x28] sm:$0xff]
  %v1263 = vld [vmem:[%s8 + $0x30] sm:$0xff]
  %v1264 = vld [vmem:[%s8 + $0x38] sm:$0xff]
  %v1265 = vld [vmem:[%s8 + $0x40] sm:$0xff]
  %v1266 = vld [vmem:[%s8 + $0x48] sm:$0xff]
  %v1267 = vld [vmem:[%s8 + $0x50] sm:$0xff]
  %v1268 = vld [vmem:[%s8 + $0x58] sm:$0xff]
  %v1269 = vld [vmem:[%s8 + $0x60] sm:$0xff]
  %v1270 = vld [vmem:[%s8 + $0x68] sm:$0xff]
  %v1271 = vld [vmem:[%s8 + $0x70] sm:$0xff]
  %v1272 = vld [vmem:[%s8 + $0x78] sm:$0xff]
  %v1273 = vpack.c.bf16 %v1256, %v1256
  %s1274 = scalar_lea.vmem %s12, 5
  %v1275 = vld [vmem:[%s1274] ss:$8 sm:$0x3]
  %v1277 = vlaneseq
  %v1278 = vshrl.u32 %v1277, 7
  %v1279 = vsub.s32 0, %v1278
  %v1280 = vrot.slane %v1275, %v1279
  %v1281 = vlaneseq
  %v1282 = vshrl.u32 %v1281, 7
  %v1283 = vsub.s32 1, %v1282
  %v1284 = vrot.slane %v1275, %v1283
  %v1303 = vunpack.c.l.b16 %v1257
  %v1304 = vunpack.c.h.b16 %v1257
  %v1305 = vunpack.c.l.b16 %v1258
  %v1306 = vunpack.c.h.b16 %v1258
  %v1307 = vunpack.c.l.b16 %v1259
  %v1308 = vunpack.c.h.b16 %v1259
  %v1309 = vunpack.c.l.b16 %v1260
  %v1310 = vunpack.c.h.b16 %v1260
  %v1311 = vunpack.c.l.b16 %v1261
  %v1312 = vunpack.c.h.b16 %v1261
  %v1313 = vunpack.c.l.b16 %v1262
  %v1314 = vunpack.c.h.b16 %v1262
  %v1315 = vunpack.c.l.b16 %v1263
  %v1316 = vunpack.c.h.b16 %v1263
  %v1317 = vunpack.c.l.b16 %v1264
  %v1318 = vunpack.c.h.b16 %v1264
  %v1319 = vunpack.c.l.b16 %v1265
  %v1320 = vunpack.c.h.b16 %v1265
  %v1321 = vunpack.c.l.b16 %v1266
  %v1322 = vunpack.c.h.b16 %v1266
  %v1323 = vunpack.c.l.b16 %v1267
  %v1324 = vunpack.c.h.b16 %v1267
  %v1325 = vunpack.c.l.b16 %v1268
  %v1326 = vunpack.c.h.b16 %v1268
  %v1327 = vunpack.c.l.b16 %v1269
  %v1328 = vunpack.c.h.b16 %v1269
  %v1329 = vunpack.c.l.b16 %v1270
  %v1330 = vunpack.c.h.b16 %v1270
  %v1331 = vunpack.c.l.b16 %v1271
  %v1332 = vunpack.c.h.b16 %v1271
  %v1333 = vunpack.c.l.b16 %v1272
  %v1334 = vunpack.c.h.b16 %v1272
  %v1335 = vpack.c.b16 %v1305, %v1303
  %v1336 = vpack.c.b16 %v1306, %v1304
  %v1337 = vpack.c.b16 %v1309, %v1307
  %v1338 = vpack.c.b16 %v1310, %v1308
  %v1339 = vpack.c.b16 %v1313, %v1311
  %v1340 = vpack.c.b16 %v1314, %v1312
  %v1341 = vpack.c.b16 %v1317, %v1315
  %v1342 = vpack.c.b16 %v1318, %v1316
  %v1343 = vpack.c.b16 %v1321, %v1319
  %v1344 = vpack.c.b16 %v1322, %v1320
  %v1345 = vpack.c.b16 %v1325, %v1323
  %v1346 = vpack.c.b16 %v1326, %v1324
  %v1347 = vpack.c.b16 %v1329, %v1327
  %v1348 = vpack.c.b16 %v1330, %v1328
  %v1349 = vpack.c.b16 %v1333, %v1331
  %v1350 = vpack.c.b16 %v1334, %v1332
  %1367 = vmatprep.subr.bf16.mxu0 %v1336
  %1368 = vmatpush1.bf16.msra.mxu0 %v1335
  %1369 = vmatprep.subr.bf16.mxu0 %v1338
  %1370 = vmatpush1.bf16.msra.mxu0 %v1337
  %1371 = vmatprep.subr.bf16.mxu0 %v1340
  %1372 = vmatpush1.bf16.msra.mxu0 %v1339
  %1373 = vmatprep.subr.bf16.mxu0 %v1342
  %1374 = vmatpush1.bf16.msra.mxu0 %v1341
  %1375 = vmatprep.subr.bf16.mxu0 %v1344
  %1376 = vmatpush1.bf16.msra.mxu0 %v1343
  %1377 = vmatprep.subr.bf16.mxu0 %v1346
  %1378 = vmatpush1.bf16.msra.mxu0 %v1345
  %1379 = vmatprep.subr.bf16.mxu0 %v1348
  %1380 = vmatpush1.bf16.msra.mxu0 %v1347
  %1381 = vmatprep.subr.bf16.mxu0 %v1350
  %1382 = vmatpush1.bf16.msra.mxu0 %v1349
  %1383 = vmatprep.subr.bf16.mxu0 0
  %1384 = vmatpush1.bf16.msra.mxu0 0
  %1385 = vmatprep.subr.bf16.mxu0 0
  %1386 = vmatpush1.bf16.msra.mxu0 0
  %1387 = vmatprep.subr.bf16.mxu0 0
  %1388 = vmatpush1.bf16.msra.mxu0 0
  %1389 = vmatprep.subr.bf16.mxu0 0
  %1390 = vmatpush1.bf16.msra.mxu0 0
  %1391 = vmatprep.subr.bf16.mxu0 0
  %1392 = vmatpush1.bf16.msra.mxu0 0
  %1393 = vmatprep.subr.bf16.mxu0 0
  %1394 = vmatpush1.bf16.msra.mxu0 0
  %1395 = vmatprep.subr.bf16.mxu0 0
  %1396 = vmatpush1.bf16.msra.mxu0 0
  %1397 = vmatprep.subr.bf16.mxu0 0
  %1398 = vmatpush1.bf16.msra.mxu0 0
  %1399 = vmatprep.mubr.bf16.mxu0 0
  %1400 = vmatmul.mubr.bf16.gmra.mrb[0].mxu0 %v1273
  %v1401 = vpop.f32.mrb[0].mxu0
  %v1402 = vadd.f32 %v1280, %v1401
  %v1403 = vpop.f32.mrb[0].mxu0
  %v1404 = vadd.f32 %v1284, %v1403
  %v1405 = vpop.f32.mrb[0].mxu0
  %v1406 = vpop.f32.mrb[0].mxu0
  %1407 = vdwg.mxu0
  %v1408 = vmax.f32 %v1402, 0.0
  %v1409 = vld [vmem:[%s9] sm:$0xf]
  %v1410 = vld [vmem:[%s9 + $0x4] sm:$0xf]
  %v1411 = vld [vmem:[%s9 + $0x8] sm:$0xf]
  %v1412 = vld [vmem:[%s9 + $0xc] sm:$0xf]
  %v1413 = vld [vmem:[%s9 + $0x10] sm:$0xf]
  %v1414 = vld [vmem:[%s9 + $0x14] sm:$0xf]
  %v1415 = vld [vmem:[%s9 + $0x18] sm:$0xf]
  %v1416 = vld [vmem:[%s9 + $0x1c] sm:$0xf]
  %v1417 = vld [vmem:[%s9 + $0x20] sm:$0xf]
  %v1418 = vld [vmem:[%s9 + $0x24] sm:$0xf]
  %v1419 = vld [vmem:[%s9 + $0x28] sm:$0xf]
  %v1420 = vld [vmem:[%s9 + $0x2c] sm:$0xf]
  %v1421 = vld [vmem:[%s9 + $0x30] sm:$0xf]
  %v1422 = vld [vmem:[%s9 + $0x34] sm:$0xf]
  %v1423 = vld [vmem:[%s9 + $0x38] sm:$0xf]
  %v1424 = vld [vmem:[%s9 + $0x3c] sm:$0xf]
  %v1425 = vld [vmem:[%s9 + $0x40] sm:$0xf]
  %v1426 = vld [vmem:[%s9 + $0x44] sm:$0xf]
  %v1427 = vld [vmem:[%s9 + $0x48] sm:$0xf]
  %v1428 = vld [vmem:[%s9 + $0x4c] sm:$0xf]
  %v1429 = vld [vmem:[%s9 + $0x50] sm:$0xf]
  %v1430 = vld [vmem:[%s9 + $0x54] sm:$0xf]
  %v1431 = vld [vmem:[%s9 + $0x58] sm:$0xf]
  %v1432 = vld [vmem:[%s9 + $0x5c] sm:$0xf]
  %v1433 = vld [vmem:[%s9 + $0x60] sm:$0xf]
  %v1434 = vld [vmem:[%s9 + $0x64] sm:$0xf]
  %v1435 = vld [vmem:[%s9 + $0x68] sm:$0xf]
  %v1436 = vld [vmem:[%s9 + $0x6c] sm:$0xf]
  %v1437 = vld [vmem:[%s9 + $0x70] sm:$0xf]
  %v1438 = vld [vmem:[%s9 + $0x74] sm:$0xf]
  %v1439 = vld [vmem:[%s9 + $0x78] sm:$0xf]
  %v1440 = vld [vmem:[%s9 + $0x7c] sm:$0xf]
  %v1441 = vpack.c.bf16 %v840, %v840
  %v1442 = vpack.c.bf16 %v1148, %v1148
  %v1475 = vunpack.c.l.b16 %v1409
  %v1476 = vunpack.c.l.b16 %v1410
  %v1477 = vunpack.c.l.b16 %v1411
  %v1478 = vunpack.c.l.b16 %v1412
  %v1479 = vunpack.c.l.b16 %v1413
  %v1480 = vunpack.c.l.b16 %v1414
  %v1481 = vunpack.c.l.b16 %v1415
  %v1482 = vunpack.c.l.b16 %v1416
  %v1483 = vunpack.c.l.b16 %v1417
  %v1484 = vunpack.c.l.b16 %v1418
  %v1485 = vunpack.c.l.b16 %v1419
  %v1486 = vunpack.c.l.b16 %v1420
  %v1487 = vunpack.c.l.b16 %v1421
  %v1488 = vunpack.c.l.b16 %v1422
  %v1489 = vunpack.c.l.b16 %v1423
  %v1490 = vunpack.c.l.b16 %v1424
  %v1491 = vunpack.c.l.b16 %v1425
  %v1492 = vunpack.c.l.b16 %v1426
  %v1493 = vunpack.c.l.b16 %v1427
  %v1494 = vunpack.c.l.b16 %v1428
  %v1495 = vunpack.c.l.b16 %v1429
  %v1496 = vunpack.c.l.b16 %v1430
  %v1497 = vunpack.c.l.b16 %v1431
  %v1498 = vunpack.c.l.b16 %v1432
  %v1499 = vunpack.c.l.b16 %v1433
  %v1500 = vunpack.c.l.b16 %v1434
  %v1501 = vunpack.c.l.b16 %v1435
  %v1502 = vunpack.c.l.b16 %v1436
  %v1503 = vunpack.c.l.b16 %v1437
  %v1504 = vunpack.c.l.b16 %v1438
  %v1505 = vunpack.c.l.b16 %v1439
  %v1506 = vunpack.c.l.b16 %v1440
  %v1507 = vpack.c.b16 %v1476, %v1475
  %v1508 = vpack.c.b16 %v1478, %v1477
  %v1509 = vpack.c.b16 %v1480, %v1479
  %v1510 = vpack.c.b16 %v1482, %v1481
  %v1511 = vpack.c.b16 %v1484, %v1483
  %v1512 = vpack.c.b16 %v1486, %v1485
  %v1513 = vpack.c.b16 %v1488, %v1487
  %v1514 = vpack.c.b16 %v1490, %v1489
  %v1515 = vpack.c.b16 %v1492, %v1491
  %v1516 = vpack.c.b16 %v1494, %v1493
  %v1517 = vpack.c.b16 %v1496, %v1495
  %v1518 = vpack.c.b16 %v1498, %v1497
  %v1519 = vpack.c.b16 %v1500, %v1499
  %v1520 = vpack.c.b16 %v1502, %v1501
  %v1521 = vpack.c.b16 %v1504, %v1503
  %v1522 = vpack.c.b16 %v1506, %v1505
  %1539 = vmatprep.subr.bf16.mxu0 0
  %1540 = vmatpush1.bf16.msra.mxu0 %v1507
  %1541 = vmatprep.subr.bf16.mxu0 0
  %1542 = vmatpush1.bf16.msra.mxu0 %v1508
  %1543 = vmatprep.subr.bf16.mxu0 0
  %1544 = vmatpush1.bf16.msra.mxu0 %v1509
  %1545 = vmatprep.subr.bf16.mxu0 0
  %1546 = vmatpush1.bf16.msra.mxu0 %v1510
  %1547 = vmatprep.subr.bf16.mxu0 0
  %1548 = vmatpush1.bf16.msra.mxu0 %v1511
  %1549 = vmatprep.subr.bf16.mxu0 0
  %1550 = vmatpush1.bf16.msra.mxu0 %v1512
  %1551 = vmatprep.subr.bf16.mxu0 0
  %1552 = vmatpush1.bf16.msra.mxu0 %v1513
  %1553 = vmatprep.subr.bf16.mxu0 0
  %1554 = vmatpush1.bf16.msra.mxu0 %v1514
  %1555 = vmatprep.subr.bf16.mxu0 0
  %1556 = vmatpush1.bf16.msra.mxu0 %v1515
  %1557 = vmatprep.subr.bf16.mxu0 0
  %1558 = vmatpush1.bf16.msra.mxu0 %v1516
  %1559 = vmatprep.subr.bf16.mxu0 0
  %1560 = vmatpush1.bf16.msra.mxu0 %v1517
  %1561 = vmatprep.subr.bf16.mxu0 0
  %1562 = vmatpush1.bf16.msra.mxu0 %v1518
  %1563 = vmatprep.subr.bf16.mxu0 0
  %1564 = vmatpush1.bf16.msra.mxu0 %v1519
  %1565 = vmatprep.subr.bf16.mxu0 0
  %1566 = vmatpush1.bf16.msra.mxu0 %v1520
  %1567 = vmatprep.subr.bf16.mxu0 0
  %1568 = vmatpush1.bf16.msra.mxu0 %v1521
  %1569 = vmatprep.subr.bf16.mxu0 0
  %1570 = vmatpush1.bf16.msra.mxu0 %v1522
  %1571 = vmatprep.mubr.bf16.mxu0 %v1442
  %1572 = vmatmul.mubr.bf16.gmra.mrb[0].mxu0 %v1441
  %v1573 = vpop.f32.mrb[0].mxu0
  %v1574 = vadd.f32 %v1404, %v1573
  %v1575 = vpop.f32.mrb[0].mxu0
  %v1576 = vpop.f32.mrb[0].mxu0
  %v1577 = vpop.f32.mrb[0].mxu0
  %1578 = vdwg.mxu0
  %v1579 = vld [vmem:[%s4] sm:$0x3]
  %v1580 = vld [vmem:[%s5] sm:$0x3]
  %v1581 = vld [vmem:[%s11] sm:$0xff]
  %v1582 = vld [vmem:[%s11 + $0x8] sm:$0xff]
  %v1583 = vld [vmem:[%s11 + $0x10] sm:$0xff]
  %v1584 = vld [vmem:[%s11 + $0x18] sm:$0xff]
  %v1585 = vld [vmem:[%s11 + $0x20] sm:$0xff]
  %v1586 = vld [vmem:[%s11 + $0x28] sm:$0xff]
  %v1587 = vld [vmem:[%s11 + $0x30] sm:$0xff]
  %v1588 = vld [vmem:[%s11 + $0x38] sm:$0xff]
  %v1589 = vld [vmem:[%s11 + $0x40] sm:$0xff]
  %v1590 = vld [vmem:[%s11 + $0x48] sm:$0xff]
  %v1591 = vld [vmem:[%s11 + $0x50] sm:$0xff]
  %v1592 = vld [vmem:[%s11 + $0x58] sm:$0xff]
  %v1593 = vld [vmem:[%s11 + $0x60] sm:$0xff]
  %v1594 = vld [vmem:[%s11 + $0x68] sm:$0xff]
  %v1595 = vld [vmem:[%s11 + $0x70] sm:$0xff]
  %v1596 = vld [vmem:[%s11 + $0x78] sm:$0xff]
  %v1597 = vld [vmem:[%s11 + $0x80] sm:$0xff]
  %v1598 = vld [vmem:[%s11 + $0x88] sm:$0xff]
  %v1599 = vld [vmem:[%s11 + $0x90] sm:$0xff]
  %v1600 = vld [vmem:[%s11 + $0x98] sm:$0xff]
  %v1601 = vld [vmem:[%s11 + $0xa0] sm:$0xff]
  %v1602 = vld [vmem:[%s11 + $0xa8] sm:$0xff]
  %v1603 = vld [vmem:[%s11 + $0xb0] sm:$0xff]
  %v1604 = vld [vmem:[%s11 + $0xb8] sm:$0xff]
  %v1605 = vld [vmem:[%s11 + $0xc0] sm:$0xff]
  %v1606 = vld [vmem:[%s11 + $0xc8] sm:$0xff]
  %v1607 = vld [vmem:[%s11 + $0xd0] sm:$0xff]
  %v1608 = vld [vmem:[%s11 + $0xd8] sm:$0xff]
  %v1609 = vld [vmem:[%s11 + $0xe0] sm:$0xff]
  %v1610 = vld [vmem:[%s11 + $0xe8] sm:$0xff]
  %v1611 = vld [vmem:[%s11 + $0xf0] sm:$0xff]
  %v1612 = vld [vmem:[%s11 + $0xf8] sm:$0xff]
  %v1613 = vpack.c.bf16 %v1574, %v1574
  %v1646 = vunpack.c.l.b16 %v1581
  %v1647 = vunpack.c.h.b16 %v1581
  %v1648 = vunpack.c.l.b16 %v1582
  %v1649 = vunpack.c.h.b16 %v1582
  %v1650 = vunpack.c.l.b16 %v1583
  %v1651 = vunpack.c.h.b16 %v1583
  %v1652 = vunpack.c.l.b16 %v1584
  %v1653 = vunpack.c.h.b16 %v1584
  %v1654 = vunpack.c.l.b16 %v1585
  %v1655 = vunpack.c.h.b16 %v1585
  %v1656 = vunpack.c.l.b16 %v1586
  %v1657 = vunpack.c.h.b16 %v1586
  %v1658 = vunpack.c.l.b16 %v1587
  %v1659 = vunpack.c.h.b16 %v1587
  %v1660 = vunpack.c.l.b16 %v1588
  %v1661 = vunpack.c.h.b16 %v1588
  %v1662 = vunpack.c.l.b16 %v1589
  %v1663 = vunpack.c.h.b16 %v1589
  %v1664 = vunpack.c.l.b16 %v1590
  %v1665 = vunpack.c.h.b16 %v1590
  %v1666 = vunpack.c.l.b16 %v1591
  %v1667 = vunpack.c.h.b16 %v1591
  %v1668 = vunpack.c.l.b16 %v1592
  %v1669 = vunpack.c.h.b16 %v1592
  %v1670 = vunpack.c.l.b16 %v1593
  %v1671 = vunpack.c.h.b16 %v1593
  %v1672 = vunpack.c.l.b16 %v1594
  %v1673 = vunpack.c.h.b16 %v1594
  %v1674 = vunpack.c.l.b16 %v1595
  %v1675 = vunpack.c.h.b16 %v1595
  %v1676 = vunpack.c.l.b16 %v1596
  %v1677 = vunpack.c.h.b16 %v1596
  %v1678 = vunpack.c.l.b16 %v1597
  %v1679 = vunpack.c.h.b16 %v1597
  %v1680 = vunpack.c.l.b16 %v1598
  %v1681 = vunpack.c.h.b16 %v1598
  %v1682 = vunpack.c.l.b16 %v1599
  %v1683 = vunpack.c.h.b16 %v1599
  %v1684 = vunpack.c.l.b16 %v1600
  %v1685 = vunpack.c.h.b16 %v1600
  %v1686 = vunpack.c.l.b16 %v1601
  %v1687 = vunpack.c.h.b16 %v1601
  %v1688 = vunpack.c.l.b16 %v1602
  %v1689 = vunpack.c.h.b16 %v1602
  %v1690 = vunpack.c.l.b16 %v1603
  %v1691 = vunpack.c.h.b16 %v1603
  %v1692 = vunpack.c.l.b16 %v1604
  %v1693 = vunpack.c.h.b16 %v1604
  %v1694 = vunpack.c.l.b16 %v1605
  %v1695 = vunpack.c.h.b16 %v1605
  %v1696 = vunpack.c.l.b16 %v1606
  %v1697 = vunpack.c.h.b16 %v1606
  %v1698 = vunpack.c.l.b16 %v1607
  %v1699 = vunpack.c.h.b16 %v1607
  %v1700 = vunpack.c.l.b16 %v1608
  %v1701 = vunpack.c.h.b16 %v1608
  %v1702 = vunpack.c.l.b16 %v1609
  %v1703 = vunpack.c.h.b16 %v1609
  %v1704 = vunpack.c.l.b16 %v1610
  %v1705 = vunpack.c.h.b16 %v1610
  %v1706 = vunpack.c.l.b16 %v1611
  %v1707 = vunpack.c.h.b16 %v1611
  %v1708 = vunpack.c.l.b16 %v1612
  %v1709 = vunpack.c.h.b16 %v1612
  %v1710 = vpack.c.b16 %v1650, %v1646
  %v1711 = vpack.c.b16 %v1651, %v1647
  %v1712 = vpack.c.b16 %v1652, %v1648
  %v1713 = vpack.c.b16 %v1653, %v1649
  %v1714 = vpack.c.b16 %v1658, %v1654
  %v1715 = vpack.c.b16 %v1659, %v1655
  %v1716 = vpack.c.b16 %v1660, %v1656
  %v1717 = vpack.c.b16 %v1661, %v1657
  %v1718 = vpack.c.b16 %v1666, %v1662
  %v1719 = vpack.c.b16 %v1667, %v1663
  %v1720 = vpack.c.b16 %v1668, %v1664
  %v1721 = vpack.c.b16 %v1669, %v1665
  %v1722 = vpack.c.b16 %v1674, %v1670
  %v1723 = vpack.c.b16 %v1675, %v1671
  %v1724 = vpack.c.b16 %v1676, %v1672
  %v1725 = vpack.c.b16 %v1677, %v1673
  %v1726 = vpack.c.b16 %v1682, %v1678
  %v1727 = vpack.c.b16 %v1683, %v1679
  %v1728 = vpack.c.b16 %v1684, %v1680
  %v1729 = vpack.c.b16 %v1685, %v1681
  %v1730 = vpack.c.b16 %v1690, %v1686
  %v1731 = vpack.c.b16 %v1691, %v1687
  %v1732 = vpack.c.b16 %v1692, %v1688
  %v1733 = vpack.c.b16 %v1693, %v1689
  %v1734 = vpack.c.b16 %v1698, %v1694
  %v1735 = vpack.c.b16 %v1699, %v1695
  %v1736 = vpack.c.b16 %v1700, %v1696
  %v1737 = vpack.c.b16 %v1701, %v1697
  %v1738 = vpack.c.b16 %v1706, %v1702
  %v1739 = vpack.c.b16 %v1707, %v1703
  %v1740 = vpack.c.b16 %v1708, %v1704
  %v1741 = vpack.c.b16 %v1709, %v1705
  %1774 = vmatprep.subr.bf16.mxu0 %v1711
  %1775 = vmatpush1.bf16.msra.mxu0 %v1710
  %1776 = vmatprep.subr.bf16.mxu0 %v1715
  %1777 = vmatpush1.bf16.msra.mxu0 %v1714
  %1778 = vmatprep.subr.bf16.mxu0 %v1719
  %1779 = vmatpush1.bf16.msra.mxu0 %v1718
  %1780 = vmatprep.subr.bf16.mxu0 %v1723
  %1781 = vmatpush1.bf16.msra.mxu0 %v1722
  %1782 = vmatprep.subr.bf16.mxu0 %v1727
  %1783 = vmatpush1.bf16.msra.mxu0 %v1726
  %1784 = vmatprep.subr.bf16.mxu0 %v1731
  %1785 = vmatpush1.bf16.msra.mxu0 %v1730
  %1786 = vmatprep.subr.bf16.mxu0 %v1735
  %1787 = vmatpush1.bf16.msra.mxu0 %v1734
  %1788 = vmatprep.subr.bf16.mxu0 %v1739
  %1789 = vmatpush1.bf16.msra.mxu0 %v1738
  %1790 = vmatprep.subr.bf16.mxu0 0
  %1791 = vmatpush1.bf16.msra.mxu0 0
  %1792 = vmatprep.subr.bf16.mxu0 0
  %1793 = vmatpush1.bf16.msra.mxu0 0
  %1794 = vmatprep.subr.bf16.mxu0 0
  %1795 = vmatpush1.bf16.msra.mxu0 0
  %1796 = vmatprep.subr.bf16.mxu0 0
  %1797 = vmatpush1.bf16.msra.mxu0 0
  %1798 = vmatprep.subr.bf16.mxu0 0
  %1799 = vmatpush1.bf16.msra.mxu0 0
  %1800 = vmatprep.subr.bf16.mxu0 0
  %1801 = vmatpush1.bf16.msra.mxu0 0
  %1802 = vmatprep.subr.bf16.mxu0 0
  %1803 = vmatpush1.bf16.msra.mxu0 0
  %1804 = vmatprep.subr.bf16.mxu0 0
  %1805 = vmatpush1.bf16.msra.mxu0 0
  %1806 = vmatprep.mubr.bf16.mxu0 0
  %1807 = vmatmul.mubr.bf16.gmra.mrb[0].mxu0 %v1613
  %v1808 = vpop.f32.mrb[0].mxu0
  %v1809 = vadd.f32 0.0, %v1808
  %v1810 = vpop.f32.mrb[0].mxu0
  %v1811 = vadd.f32 0.0, %v1810
  %v1812 = vpop.f32.mrb[0].mxu0
  %v1813 = vpop.f32.mrb[0].mxu0
  %1814 = vdwg.mxu0
  %1815 = vmatprep.subr.bf16.mxu0 %v1713
  %1816 = vmatpush1.bf16.msra.mxu0 %v1712
  %1817 = vmatprep.subr.bf16.mxu0 %v1717
  %1818 = vmatpush1.bf16.msra.mxu0 %v1716
  %1819 = vmatprep.subr.bf16.mxu0 %v1721
  %1820 = vmatpush1.bf16.msra.mxu0 %v1720
  %1821 = vmatprep.subr.bf16.mxu0 %v1725
  %1822 = vmatpush1.bf16.msra.mxu0 %v1724
  %1823 = vmatprep.subr.bf16.mxu0 %v1729
  %1824 = vmatpush1.bf16.msra.mxu0 %v1728
  %1825 = vmatprep.subr.bf16.mxu0 %v1733
  %1826 = vmatpush1.bf16.msra.mxu0 %v1732
  %1827 = vmatprep.subr.bf16.mxu0 %v1737
  %1828 = vmatpush1.bf16.msra.mxu0 %v1736
  %1829 = vmatprep.subr.bf16.mxu0 %v1741
  %1830 = vmatpush1.bf16.msra.mxu0 %v1740
  %1831 = vmatprep.subr.bf16.mxu0 0
  %1832 = vmatpush1.bf16.msra.mxu0 0
  %1833 = vmatprep.subr.bf16.mxu0 0
  %1834 = vmatpush1.bf16.msra.mxu0 0
  %1835 = vmatprep.subr.bf16.mxu0 0
  %1836 = vmatpush1.bf16.msra.mxu0 0
  %1837 = vmatprep.subr.bf16.mxu0 0
  %1838 = vmatpush1.bf16.msra.mxu0 0
  %1839 = vmatprep.subr.bf16.mxu0 0
  %1840 = vmatpush1.bf16.msra.mxu0 0
  %1841 = vmatprep.subr.bf16.mxu0 0
  %1842 = vmatpush1.bf16.msra.mxu0 0
  %1843 = vmatprep.subr.bf16.mxu0 0
  %1844 = vmatpush1.bf16.msra.mxu0 0
  %1845 = vmatprep.subr.bf16.mxu0 0
  %1846 = vmatpush1.bf16.msra.mxu0 0
  %1847 = vmatprep.mubr.bf16.mxu0 0
  %1848 = vmatmul.mubr.bf16.gmra.mrb[0].mxu0 %v1613
  %v1849 = vpop.f32.mrb[0].mxu0
  %v1850 = vadd.f32 0.0, %v1849
  %v1851 = vpop.f32.mrb[0].mxu0
  %v1852 = vadd.f32 0.0, %v1851
  %v1853 = vpop.f32.mrb[0].mxu0
  %v1854 = vpop.f32.mrb[0].mxu0
  %1855 = vdwg.mxu0
  %s1856 = scalar_lea.vmem %s12, 7
  %v1857 = vld [vmem:[%s1856] ss:$8 sm:$0xf]
  %s1858 = scalar_lea.vmem %s12, 32
  %v1859 = vld [vmem:[%s1858] ss:$8 sm:$0xf]
  %vm1860 = vcmask 1041408
  %v1861 = vsel %vm1860, %v1809, 0.0
  %v1862 = vsel %vm1860, %v1811, 0.0
  %v1863 = vadd.f32 %v1861, %v1862
  %v1864 = vsel %vm1860, %v1850, 0.0
  %v1865 = vadd.f32 %v1863, %v1864
  %v1866 = vsel %vm1860, %v1852, 0.0
  %v1867 = vadd.f32 %v1865, %v1866
  %1868 = vadd.xlane.f32.xlu0 %v1867
  %v1869 = vpop.xlane.xlu0 %1868
  %v1870 = vrcp.pop 512.0
  %v1871 = vmul.f32 %v1869, %v1870
  %v1872 = vsub.f32 %v1809, %v1871
  %v1873 = vsub.f32 %v1811, %v1871
  %v1874 = vsub.f32 %v1850, %v1871
  %v1875 = vsub.f32 %v1852, %v1871
  %v1876 = vmul.f32 %v1872, %v1872
  %v1877 = vmul.f32 %v1873, %v1873
  %v1878 = vmul.f32 %v1874, %v1874
  %v1879 = vmul.f32 %v1875, %v1875
  %v1880 = vsel %vm1860, %v1876, 0.0
  %v1881 = vsel %vm1860, %v1877, 0.0
  %v1882 = vadd.f32 %v1880, %v1881
  %v1883 = vsel %vm1860, %v1878, 0.0
  %v1884 = vadd.f32 %v1882, %v1883
  %v1885 = vsel %vm1860, %v1879, 0.0
  %v1886 = vadd.f32 %v1884, %v1885
  %1887 = vadd.xlane.f32.xlu0 %v1886
  %v1888 = vpop.xlane.xlu0 %1887
  %v1889 = vmul.f32 %v1888, %v1870
  %v1890 = vadd.f32 %v1889, 1e-05
  %v1891 = vrsqrt.pop %v1890
  %v1892 = vmul.f32 %v1872, %v1891
  %v1893 = vmul.f32 %v1873, %v1891
  %v1894 = vmul.f32 %v1874, %v1891
  %v1895 = vmul.f32 %v1875, %v1891
  %v1897 = vlaneseq
  %v1898 = vshrl.u32 %v1897, 7
  %v1899 = vsub.s32 0, %v1898
  %v1900 = vrot.slane %v1857, %v1899
  %v1901 = vlaneseq
  %v1902 = vshrl.u32 %v1901, 7
  %v1903 = vsub.s32 1, %v1902
  %v1904 = vrot.slane %v1857, %v1903
  %v1905 = vlaneseq
  %v1906 = vshrl.u32 %v1905, 7
  %v1907 = vsub.s32 2, %v1906
  %v1908 = vrot.slane %v1857, %v1907
  %v1909 = vlaneseq
  %v1910 = vshrl.u32 %v1909, 7
  %v1911 = vsub.s32 3, %v1910
  %v1912 = vrot.slane %v1857, %v1911
  %v1917 = vmul.f32 %v1892, %v1900
  %v1918 = vmul.f32 %v1893, %v1904
  %v1919 = vmul.f32 %v1894, %v1908
  %v1920 = vmul.f32 %v1895, %v1912
  %v1922 = vlaneseq
  %v1923 = vshrl.u32 %v1922, 7
  %v1924 = vsub.s32 0, %v1923
  %v1925 = vrot.slane %v1859, %v1924
  %v1926 = vlaneseq
  %v1927 = vshrl.u32 %v1926, 7
  %v1928 = vsub.s32 1, %v1927
  %v1929 = vrot.slane %v1859, %v1928
  %v1930 = vlaneseq
  %v1931 = vshrl.u32 %v1930, 7
  %v1932 = vsub.s32 2, %v1931
  %v1933 = vrot.slane %v1859, %v1932
  %v1934 = vlaneseq
  %v1935 = vshrl.u32 %v1934, 7
  %v1936 = vsub.s32 3, %v1935
  %v1937 = vrot.slane %v1859, %v1936
  %v1942 = vadd.f32 %v1917, %v1925
  %v1943 = vadd.f32 %v1918, %v1929
  %v1944 = vadd.f32 %v1919, %v1933
  %v1945 = vadd.f32 %v1920, %v1937
  %s1946 = scalar_lea.vmem %s11, 256
  %v1947 = vld [vmem:[%s1946] sm:$0xff]
  %v1948 = vld [vmem:[%s1946 + $0x8] sm:$0xff]
  %v1949 = vld [vmem:[%s1946 + $0x10] sm:$0xff]
  %v1950 = vld [vmem:[%s1946 + $0x18] sm:$0xff]
  %v1951 = vld [vmem:[%s1946 + $0x20] sm:$0xff]
  %v1952 = vld [vmem:[%s1946 + $0x28] sm:$0xff]
  %v1953 = vld [vmem:[%s1946 + $0x30] sm:$0xff]
  %v1954 = vld [vmem:[%s1946 + $0x38] sm:$0xff]
  %v1955 = vld [vmem:[%s1946 + $0x40] sm:$0xff]
  %v1956 = vld [vmem:[%s1946 + $0x48] sm:$0xff]
  %v1957 = vld [vmem:[%s1946 + $0x50] sm:$0xff]
  %v1958 = vld [vmem:[%s1946 + $0x58] sm:$0xff]
  %v1959 = vld [vmem:[%s1946 + $0x60] sm:$0xff]
  %v1960 = vld [vmem:[%s1946 + $0x68] sm:$0xff]
  %v1961 = vld [vmem:[%s1946 + $0x70] sm:$0xff]
  %v1962 = vld [vmem:[%s1946 + $0x78] sm:$0xff]
  %v1963 = vld [vmem:[%s1946 + $0x80] sm:$0xff]
  %v1964 = vld [vmem:[%s1946 + $0x88] sm:$0xff]
  %v1965 = vld [vmem:[%s1946 + $0x90] sm:$0xff]
  %v1966 = vld [vmem:[%s1946 + $0x98] sm:$0xff]
  %v1967 = vld [vmem:[%s1946 + $0xa0] sm:$0xff]
  %v1968 = vld [vmem:[%s1946 + $0xa8] sm:$0xff]
  %v1969 = vld [vmem:[%s1946 + $0xb0] sm:$0xff]
  %v1970 = vld [vmem:[%s1946 + $0xb8] sm:$0xff]
  %v1971 = vld [vmem:[%s1946 + $0xc0] sm:$0xff]
  %v1972 = vld [vmem:[%s1946 + $0xc8] sm:$0xff]
  %v1973 = vld [vmem:[%s1946 + $0xd0] sm:$0xff]
  %v1974 = vld [vmem:[%s1946 + $0xd8] sm:$0xff]
  %v1975 = vld [vmem:[%s1946 + $0xe0] sm:$0xff]
  %v1976 = vld [vmem:[%s1946 + $0xe8] sm:$0xff]
  %v1977 = vld [vmem:[%s1946 + $0xf0] sm:$0xff]
  %v1978 = vld [vmem:[%s1946 + $0xf8] sm:$0xff]
  %v1979 = vpack.c.bf16 %v1579, %v1579
  %v2012 = vunpack.c.l.b16 %v1947
  %v2013 = vunpack.c.h.b16 %v1947
  %v2014 = vunpack.c.l.b16 %v1948
  %v2015 = vunpack.c.h.b16 %v1948
  %v2016 = vunpack.c.l.b16 %v1949
  %v2017 = vunpack.c.h.b16 %v1949
  %v2018 = vunpack.c.l.b16 %v1950
  %v2019 = vunpack.c.h.b16 %v1950
  %v2020 = vunpack.c.l.b16 %v1951
  %v2021 = vunpack.c.h.b16 %v1951
  %v2022 = vunpack.c.l.b16 %v1952
  %v2023 = vunpack.c.h.b16 %v1952
  %v2024 = vunpack.c.l.b16 %v1953
  %v2025 = vunpack.c.h.b16 %v1953
  %v2026 = vunpack.c.l.b16 %v1954
  %v2027 = vunpack.c.h.b16 %v1954
  %v2028 = vunpack.c.l.b16 %v1955
  %v2029 = vunpack.c.h.b16 %v1955
  %v2030 = vunpack.c.l.b16 %v1956
  %v2031 = vunpack.c.h.b16 %v1956
  %v2032 = vunpack.c.l.b16 %v1957
  %v2033 = vunpack.c.h.b16 %v1957
  %v2034 = vunpack.c.l.b16 %v1958
  %v2035 = vunpack.c.h.b16 %v1958
  %v2036 = vunpack.c.l.b16 %v1959
  %v2037 = vunpack.c.h.b16 %v1959
  %v2038 = vunpack.c.l.b16 %v1960
  %v2039 = vunpack.c.h.b16 %v1960
  %v2040 = vunpack.c.l.b16 %v1961
  %v2041 = vunpack.c.h.b16 %v1961
  %v2042 = vunpack.c.l.b16 %v1962
  %v2043 = vunpack.c.h.b16 %v1962
  %v2044 = vunpack.c.l.b16 %v1963
  %v2045 = vunpack.c.h.b16 %v1963
  %v2046 = vunpack.c.l.b16 %v1964
  %v2047 = vunpack.c.h.b16 %v1964
  %v2048 = vunpack.c.l.b16 %v1965
  %v2049 = vunpack.c.h.b16 %v1965
  %v2050 = vunpack.c.l.b16 %v1966
  %v2051 = vunpack.c.h.b16 %v1966
  %v2052 = vunpack.c.l.b16 %v1967
  %v2053 = vunpack.c.h.b16 %v1967
  %v2054 = vunpack.c.l.b16 %v1968
  %v2055 = vunpack.c.h.b16 %v1968
  %v2056 = vunpack.c.l.b16 %v1969
  %v2057 = vunpack.c.h.b16 %v1969
  %v2058 = vunpack.c.l.b16 %v1970
  %v2059 = vunpack.c.h.b16 %v1970
  %v2060 = vunpack.c.l.b16 %v1971
  %v2061 = vunpack.c.h.b16 %v1971
  %v2062 = vunpack.c.l.b16 %v1972
  %v2063 = vunpack.c.h.b16 %v1972
  %v2064 = vunpack.c.l.b16 %v1973
  %v2065 = vunpack.c.h.b16 %v1973
  %v2066 = vunpack.c.l.b16 %v1974
  %v2067 = vunpack.c.h.b16 %v1974
  %v2068 = vunpack.c.l.b16 %v1975
  %v2069 = vunpack.c.h.b16 %v1975
  %v2070 = vunpack.c.l.b16 %v1976
  %v2071 = vunpack.c.h.b16 %v1976
  %v2072 = vunpack.c.l.b16 %v1977
  %v2073 = vunpack.c.h.b16 %v1977
  %v2074 = vunpack.c.l.b16 %v1978
  %v2075 = vunpack.c.h.b16 %v1978
  %v2076 = vpack.c.b16 %v2016, %v2012
  %v2077 = vpack.c.b16 %v2017, %v2013
  %v2078 = vpack.c.b16 %v2018, %v2014
  %v2079 = vpack.c.b16 %v2019, %v2015
  %v2080 = vpack.c.b16 %v2024, %v2020
  %v2081 = vpack.c.b16 %v2025, %v2021
  %v2082 = vpack.c.b16 %v2026, %v2022
  %v2083 = vpack.c.b16 %v2027, %v2023
  %v2084 = vpack.c.b16 %v2032, %v2028
  %v2085 = vpack.c.b16 %v2033, %v2029
  %v2086 = vpack.c.b16 %v2034, %v2030
  %v2087 = vpack.c.b16 %v2035, %v2031
  %v2088 = vpack.c.b16 %v2040, %v2036
  %v2089 = vpack.c.b16 %v2041, %v2037
  %v2090 = vpack.c.b16 %v2042, %v2038
  %v2091 = vpack.c.b16 %v2043, %v2039
  %v2092 = vpack.c.b16 %v2048, %v2044
  %v2093 = vpack.c.b16 %v2049, %v2045
  %v2094 = vpack.c.b16 %v2050, %v2046
  %v2095 = vpack.c.b16 %v2051, %v2047
  %v2096 = vpack.c.b16 %v2056, %v2052
  %v2097 = vpack.c.b16 %v2057, %v2053
  %v2098 = vpack.c.b16 %v2058, %v2054
  %v2099 = vpack.c.b16 %v2059, %v2055
  %v2100 = vpack.c.b16 %v2064, %v2060
  %v2101 = vpack.c.b16 %v2065, %v2061
  %v2102 = vpack.c.b16 %v2066, %v2062
  %v2103 = vpack.c.b16 %v2067, %v2063
  %v2104 = vpack.c.b16 %v2072, %v2068
  %v2105 = vpack.c.b16 %v2073, %v2069
  %v2106 = vpack.c.b16 %v2074, %v2070
  %v2107 = vpack.c.b16 %v2075, %v2071
  %2140 = vmatprep.subr.bf16.mxu0 %v2077
  %2141 = vmatpush1.bf16.msra.mxu0 %v2076
  %2142 = vmatprep.subr.bf16.mxu0 %v2081
  %2143 = vmatpush1.bf16.msra.mxu0 %v2080
  %2144 = vmatprep.subr.bf16.mxu0 %v2085
  %2145 = vmatpush1.bf16.msra.mxu0 %v2084
  %2146 = vmatprep.subr.bf16.mxu0 %v2089
  %2147 = vmatpush1.bf16.msra.mxu0 %v2088
  %2148 = vmatprep.subr.bf16.mxu0 %v2093
  %2149 = vmatpush1.bf16.msra.mxu0 %v2092
  %2150 = vmatprep.subr.bf16.mxu0 %v2097
  %2151 = vmatpush1.bf16.msra.mxu0 %v2096
  %2152 = vmatprep.subr.bf16.mxu0 %v2101
  %2153 = vmatpush1.bf16.msra.mxu0 %v2100
  %2154 = vmatprep.subr.bf16.mxu0 %v2105
  %2155 = vmatpush1.bf16.msra.mxu0 %v2104
  %2156 = vmatprep.subr.bf16.mxu0 0
  %2157 = vmatpush1.bf16.msra.mxu0 0
  %2158 = vmatprep.subr.bf16.mxu0 0
  %2159 = vmatpush1.bf16.msra.mxu0 0
  %2160 = vmatprep.subr.bf16.mxu0 0
  %2161 = vmatpush1.bf16.msra.mxu0 0
  %2162 = vmatprep.subr.bf16.mxu0 0
  %2163 = vmatpush1.bf16.msra.mxu0 0
  %2164 = vmatprep.subr.bf16.mxu0 0
  %2165 = vmatpush1.bf16.msra.mxu0 0
  %2166 = vmatprep.subr.bf16.mxu0 0
  %2167 = vmatpush1.bf16.msra.mxu0 0
  %2168 = vmatprep.subr.bf16.mxu0 0
  %2169 = vmatpush1.bf16.msra.mxu0 0
  %2170 = vmatprep.subr.bf16.mxu0 0
  %2171 = vmatpush1.bf16.msra.mxu0 0
  %2172 = vmatprep.mubr.bf16.mxu0 0
  %2173 = vmatmul.mubr.bf16.gmra.mrb[0].mxu0 %v1979
  %v2174 = vpop.f32.mrb[0].mxu0
  %v2175 = vadd.f32 0.0, %v2174
  %v2176 = vpop.f32.mrb[0].mxu0
  %v2177 = vadd.f32 0.0, %v2176
  %v2178 = vpop.f32.mrb[0].mxu0
  %v2179 = vpop.f32.mrb[0].mxu0
  %2180 = vdwg.mxu0
  %2181 = vmatprep.subr.bf16.mxu0 %v2079
  %2182 = vmatpush1.bf16.msra.mxu0 %v2078
  %2183 = vmatprep.subr.bf16.mxu0 %v2083
  %2184 = vmatpush1.bf16.msra.mxu0 %v2082
  %2185 = vmatprep.subr.bf16.mxu0 %v2087
  %2186 = vmatpush1.bf16.msra.mxu0 %v2086
  %2187 = vmatprep.subr.bf16.mxu0 %v2091
  %2188 = vmatpush1.bf16.msra.mxu0 %v2090
  %2189 = vmatprep.subr.bf16.mxu0 %v2095
  %2190 = vmatpush1.bf16.msra.mxu0 %v2094
  %2191 = vmatprep.subr.bf16.mxu0 %v2099
  %2192 = vmatpush1.bf16.msra.mxu0 %v2098
  %2193 = vmatprep.subr.bf16.mxu0 %v2103
  %2194 = vmatpush1.bf16.msra.mxu0 %v2102
  %2195 = vmatprep.subr.bf16.mxu0 %v2107
  %2196 = vmatpush1.bf16.msra.mxu0 %v2106
  %2197 = vmatprep.subr.bf16.mxu0 0
  %2198 = vmatpush1.bf16.msra.mxu0 0
  %2199 = vmatprep.subr.bf16.mxu0 0
  %2200 = vmatpush1.bf16.msra.mxu0 0
  %2201 = vmatprep.subr.bf16.mxu0 0
  %2202 = vmatpush1.bf16.msra.mxu0 0
  %2203 = vmatprep.subr.bf16.mxu0 0
  %2204 = vmatpush1.bf16.msra.mxu0 0
  %2205 = vmatprep.subr.bf16.mxu0 0
  %2206 = vmatpush1.bf16.msra.mxu0 0
  %2207 = vmatprep.subr.bf16.mxu0 0
  %2208 = vmatpush1.bf16.msra.mxu0 0
  %2209 = vmatprep.subr.bf16.mxu0 0
  %2210 = vmatpush1.bf16.msra.mxu0 0
  %2211 = vmatprep.subr.bf16.mxu0 0
  %2212 = vmatpush1.bf16.msra.mxu0 0
  %2213 = vmatprep.mubr.bf16.mxu0 0
  %2214 = vmatmul.mubr.bf16.gmra.mrb[0].mxu0 %v1979
  %v2215 = vpop.f32.mrb[0].mxu0
  %v2216 = vadd.f32 0.0, %v2215
  %v2217 = vpop.f32.mrb[0].mxu0
  %v2218 = vadd.f32 0.0, %v2217
  %v2219 = vpop.f32.mrb[0].mxu0
  %v2220 = vpop.f32.mrb[0].mxu0
  %2221 = vdwg.mxu0
  %s2222 = scalar_lea.vmem %s12, 33
  %v2223 = vld [vmem:[%s2222] ss:$8 sm:$0xf]
  %s2224 = scalar_lea.vmem %s12, 34
  %v2225 = vld [vmem:[%s2224] ss:$8 sm:$0xf]
  %v2226 = vsel %vm1860, %v2175, 0.0
  %v2227 = vsel %vm1860, %v2177, 0.0
  %v2228 = vadd.f32 %v2226, %v2227
  %v2229 = vsel %vm1860, %v2216, 0.0
  %v2230 = vadd.f32 %v2228, %v2229
  %v2231 = vsel %vm1860, %v2218, 0.0
  %v2232 = vadd.f32 %v2230, %v2231
  %2233 = vadd.xlane.f32.xlu0 %v2232
  %v2234 = vpop.xlane.xlu0 %2233
  %v2235 = vmul.f32 %v2234, %v1870
  %v2236 = vsub.f32 %v2175, %v2235
  %v2237 = vsub.f32 %v2177, %v2235
  %v2238 = vsub.f32 %v2216, %v2235
  %v2239 = vsub.f32 %v2218, %v2235
  %v2240 = vmul.f32 %v2236, %v2236
  %v2241 = vmul.f32 %v2237, %v2237
  %v2242 = vmul.f32 %v2238, %v2238
  %v2243 = vmul.f32 %v2239, %v2239
  %v2244 = vsel %vm1860, %v2240, 0.0
  %v2245 = vsel %vm1860, %v2241, 0.0
  %v2246 = vadd.f32 %v2244, %v2245
  %v2247 = vsel %vm1860, %v2242, 0.0
  %v2248 = vadd.f32 %v2246, %v2247
  %v2249 = vsel %vm1860, %v2243, 0.0
  %v2250 = vadd.f32 %v2248, %v2249
  %2251 = vadd.xlane.f32.xlu0 %v2250
  %v2252 = vpop.xlane.xlu0 %2251
  %v2253 = vmul.f32 %v2252, %v1870
  %v2254 = vadd.f32 %v2253, 1e-05
  %v2255 = vrsqrt.pop %v2254
  %v2256 = vmul.f32 %v2236, %v2255
  %v2257 = vmul.f32 %v2237, %v2255
  %v2258 = vmul.f32 %v2238, %v2255
  %v2259 = vmul.f32 %v2239, %v2255
  %v2261 = vlaneseq
  %v2262 = vshrl.u32 %v2261, 7
  %v2263 = vsub.s32 0, %v2262
  %v2264 = vrot.slane %v2223, %v2263
  %v2265 = vlaneseq
  %v2266 = vshrl.u32 %v2265, 7
  %v2267 = vsub.s32 1, %v2266
  %v2268 = vrot.slane %v2223, %v2267
  %v2269 = vlaneseq
  %v2270 = vshrl.u32 %v2269, 7
  %v2271 = vsub.s32 2, %v2270
  %v2272 = vrot.slane %v2223, %v2271
  %v2273 = vlaneseq
  %v2274 = vshrl.u32 %v2273, 7
  %v2275 = vsub.s32 3, %v2274
  %v2276 = vrot.slane %v2223, %v2275
  %v2281 = vmul.f32 %v2256, %v2264
  %v2282 = vmul.f32 %v2257, %v2268
  %v2283 = vmul.f32 %v2258, %v2272
  %v2284 = vmul.f32 %v2259, %v2276
  %v2286 = vlaneseq
  %v2287 = vshrl.u32 %v2286, 7
  %v2288 = vsub.s32 0, %v2287
  %v2289 = vrot.slane %v2225, %v2288
  %v2290 = vlaneseq
  %v2291 = vshrl.u32 %v2290, 7
  %v2292 = vsub.s32 1, %v2291
  %v2293 = vrot.slane %v2225, %v2292
  %v2294 = vlaneseq
  %v2295 = vshrl.u32 %v2294, 7
  %v2296 = vsub.s32 2, %v2295
  %v2297 = vrot.slane %v2225, %v2296
  %v2298 = vlaneseq
  %v2299 = vshrl.u32 %v2298, 7
  %v2300 = vsub.s32 3, %v2299
  %v2301 = vrot.slane %v2225, %v2300
  %v2306 = vadd.f32 %v2281, %v2289
  %v2307 = vadd.f32 %v2282, %v2293
  %v2308 = vadd.f32 %v2283, %v2297
  %v2309 = vadd.f32 %v2284, %v2301
  %v2310 = vadd.f32 %v1942, %v2306
  %v2311 = vadd.f32 %v1943, %v2307
  %v2312 = vadd.f32 %v1944, %v2308
  %v2313 = vadd.f32 %v1945, %v2309
  %v2314 = vxor.u32 %v2310, 2147483648
  %v2315 = vmul.f32 %v2314, 1.442695
  %v2316 = vpow.pop %v2315
  %v2317 = vadd.f32 %v2316, 1.0
  %v2318 = vrcp.pop %v2317
  %v2319 = vmul.f32 1.0, %v2318
  %v2320 = vxor.u32 %v2311, 2147483648
  %v2321 = vmul.f32 %v2320, 1.442695
  %v2322 = vpow.pop %v2321
  %v2323 = vadd.f32 %v2322, 1.0
  %v2324 = vrcp.pop %v2323
  %v2325 = vmul.f32 1.0, %v2324
  %v2326 = vtanh.pop %v2312
  %v2327 = vxor.u32 %v2313, 2147483648
  %v2328 = vmul.f32 %v2327, 1.442695
  %v2329 = vpow.pop %v2328
  %v2330 = vadd.f32 %v2329, 1.0
  %v2331 = vrcp.pop %v2330
  %v2332 = vmul.f32 1.0, %v2331
  %v2333 = vmul.f32 %v2325, %v1580
  %v2334 = vmul.f32 %v2319, %v2326
  %v2335 = vadd.f32 %v2333, %v2334
  %v2336 = vld [vmem:[%s12 + $0x23] ss:$0 sm:$0xff]
  %v2337 = vld [vmem:[%s12 + $0x24] ss:$0 sm:$0xff]
  %v2338 = vsel %vm1860, %v2335, 0.0
  %2339 = vadd.xlane.f32.xlu0 %v2338
  %v2340 = vpop.xlane.xlu0 %2339
  %v2341 = vrcp.pop 128.0
  %v2342 = vmul.f32 %v2340, %v2341
  %v2343 = vsub.f32 %v2335, %v2342
  %v2344 = vmul.f32 %v2343, %v2343
  %v2345 = vsel %vm1860, %v2344, 0.0
  %2346 = vadd.xlane.f32.xlu0 %v2345
  %v2347 = vpop.xlane.xlu0 %2346
  %v2348 = vmul.f32 %v2347, %v2341
  %v2349 = vadd.f32 %v2348, 1e-05
  %v2350 = vrsqrt.pop %v2349
  %v2351 = vmul.f32 %v2343, %v2350
  %v2352 = vmul.f32 %v2351, %v2336
  %v2353 = vadd.f32 %v2352, %v2337
  %v2354 = vtanh.pop %v2353
  %v2355 = vmul.f32 %v2332, %v2354
  %2356 = vst [vmem:[%s14] sm:$0x3] %v2355
  %2357 = vst [vmem:[%s15] sm:$0x3] %v2353
  %s2358 = scalar_lea.vmem %s4, 2
  %v2359 = vld [vmem:[%s2358] sm:$0x3]
  %s2360 = scalar_lea.vmem %s5, 2
  %v2361 = vld [vmem:[%s2360] sm:$0x3]
  %s2362 = scalar_lea.vmem %s11, 512
  %v2363 = vld [vmem:[%s2362] sm:$0xff]
  %v2364 = vld [vmem:[%s2362 + $0x8] sm:$0xff]
  %v2365 = vld [vmem:[%s2362 + $0x10] sm:$0xff]
  %v2366 = vld [vmem:[%s2362 + $0x18] sm:$0xff]
  %v2367 = vld [vmem:[%s2362 + $0x20] sm:$0xff]
  %v2368 = vld [vmem:[%s2362 + $0x28] sm:$0xff]
  %v2369 = vld [vmem:[%s2362 + $0x30] sm:$0xff]
  %v2370 = vld [vmem:[%s2362 + $0x38] sm:$0xff]
  %v2371 = vld [vmem:[%s2362 + $0x40] sm:$0xff]
  %v2372 = vld [vmem:[%s2362 + $0x48] sm:$0xff]
  %v2373 = vld [vmem:[%s2362 + $0x50] sm:$0xff]
  %v2374 = vld [vmem:[%s2362 + $0x58] sm:$0xff]
  %v2375 = vld [vmem:[%s2362 + $0x60] sm:$0xff]
  %v2376 = vld [vmem:[%s2362 + $0x68] sm:$0xff]
  %v2377 = vld [vmem:[%s2362 + $0x70] sm:$0xff]
  %v2378 = vld [vmem:[%s2362 + $0x78] sm:$0xff]
  %v2379 = vld [vmem:[%s2362 + $0x80] sm:$0xff]
  %v2380 = vld [vmem:[%s2362 + $0x88] sm:$0xff]
  %v2381 = vld [vmem:[%s2362 + $0x90] sm:$0xff]
  %v2382 = vld [vmem:[%s2362 + $0x98] sm:$0xff]
  %v2383 = vld [vmem:[%s2362 + $0xa0] sm:$0xff]
  %v2384 = vld [vmem:[%s2362 + $0xa8] sm:$0xff]
  %v2385 = vld [vmem:[%s2362 + $0xb0] sm:$0xff]
  %v2386 = vld [vmem:[%s2362 + $0xb8] sm:$0xff]
  %v2387 = vld [vmem:[%s2362 + $0xc0] sm:$0xff]
  %v2388 = vld [vmem:[%s2362 + $0xc8] sm:$0xff]
  %v2389 = vld [vmem:[%s2362 + $0xd0] sm:$0xff]
  %v2390 = vld [vmem:[%s2362 + $0xd8] sm:$0xff]
  %v2391 = vld [vmem:[%s2362 + $0xe0] sm:$0xff]
  %v2392 = vld [vmem:[%s2362 + $0xe8] sm:$0xff]
  %v2393 = vld [vmem:[%s2362 + $0xf0] sm:$0xff]
  %v2394 = vld [vmem:[%s2362 + $0xf8] sm:$0xff]
  %v2395 = vpack.c.bf16 %v2355, %v2355
  %v2428 = vunpack.c.l.b16 %v2363
  %v2429 = vunpack.c.h.b16 %v2363
  %v2430 = vunpack.c.l.b16 %v2364
  %v2431 = vunpack.c.h.b16 %v2364
  %v2432 = vunpack.c.l.b16 %v2365
  %v2433 = vunpack.c.h.b16 %v2365
  %v2434 = vunpack.c.l.b16 %v2366
  %v2435 = vunpack.c.h.b16 %v2366
  %v2436 = vunpack.c.l.b16 %v2367
  %v2437 = vunpack.c.h.b16 %v2367
  %v2438 = vunpack.c.l.b16 %v2368
  %v2439 = vunpack.c.h.b16 %v2368
  %v2440 = vunpack.c.l.b16 %v2369
  %v2441 = vunpack.c.h.b16 %v2369
  %v2442 = vunpack.c.l.b16 %v2370
  %v2443 = vunpack.c.h.b16 %v2370
  %v2444 = vunpack.c.l.b16 %v2371
  %v2445 = vunpack.c.h.b16 %v2371
  %v2446 = vunpack.c.l.b16 %v2372
  %v2447 = vunpack.c.h.b16 %v2372
  %v2448 = vunpack.c.l.b16 %v2373
  %v2449 = vunpack.c.h.b16 %v2373
  %v2450 = vunpack.c.l.b16 %v2374
  %v2451 = vunpack.c.h.b16 %v2374
  %v2452 = vunpack.c.l.b16 %v2375
  %v2453 = vunpack.c.h.b16 %v2375
  %v2454 = vunpack.c.l.b16 %v2376
  %v2455 = vunpack.c.h.b16 %v2376
  %v2456 = vunpack.c.l.b16 %v2377
  %v2457 = vunpack.c.h.b16 %v2377
  %v2458 = vunpack.c.l.b16 %v2378
  %v2459 = vunpack.c.h.b16 %v2378
  %v2460 = vunpack.c.l.b16 %v2379
  %v2461 = vunpack.c.h.b16 %v2379
  %v2462 = vunpack.c.l.b16 %v2380
  %v2463 = vunpack.c.h.b16 %v2380
  %v2464 = vunpack.c.l.b16 %v2381
  %v2465 = vunpack.c.h.b16 %v2381
  %v2466 = vunpack.c.l.b16 %v2382
  %v2467 = vunpack.c.h.b16 %v2382
  %v2468 = vunpack.c.l.b16 %v2383
  %v2469 = vunpack.c.h.b16 %v2383
  %v2470 = vunpack.c.l.b16 %v2384
  %v2471 = vunpack.c.h.b16 %v2384
  %v2472 = vunpack.c.l.b16 %v2385
  %v2473 = vunpack.c.h.b16 %v2385
  %v2474 = vunpack.c.l.b16 %v2386
  %v2475 = vunpack.c.h.b16 %v2386
  %v2476 = vunpack.c.l.b16 %v2387
  %v2477 = vunpack.c.h.b16 %v2387
  %v2478 = vunpack.c.l.b16 %v2388
  %v2479 = vunpack.c.h.b16 %v2388
  %v2480 = vunpack.c.l.b16 %v2389
  %v2481 = vunpack.c.h.b16 %v2389
  %v2482 = vunpack.c.l.b16 %v2390
  %v2483 = vunpack.c.h.b16 %v2390
  %v2484 = vunpack.c.l.b16 %v2391
  %v2485 = vunpack.c.h.b16 %v2391
  %v2486 = vunpack.c.l.b16 %v2392
  %v2487 = vunpack.c.h.b16 %v2392
  %v2488 = vunpack.c.l.b16 %v2393
  %v2489 = vunpack.c.h.b16 %v2393
  %v2490 = vunpack.c.l.b16 %v2394
  %v2491 = vunpack.c.h.b16 %v2394
  %v2492 = vpack.c.b16 %v2432, %v2428
  %v2493 = vpack.c.b16 %v2433, %v2429
  %v2494 = vpack.c.b16 %v2434, %v2430
  %v2495 = vpack.c.b16 %v2435, %v2431
  %v2496 = vpack.c.b16 %v2440, %v2436
  %v2497 = vpack.c.b16 %v2441, %v2437
  %v2498 = vpack.c.b16 %v2442, %v2438
  %v2499 = vpack.c.b16 %v2443, %v2439
  %v2500 = vpack.c.b16 %v2448, %v2444
  %v2501 = vpack.c.b16 %v2449, %v2445
  %v2502 = vpack.c.b16 %v2450, %v2446
  %v2503 = vpack.c.b16 %v2451, %v2447
  %v2504 = vpack.c.b16 %v2456, %v2452
  %v2505 = vpack.c.b16 %v2457, %v2453
  %v2506 = vpack.c.b16 %v2458, %v2454
  %v2507 = vpack.c.b16 %v2459, %v2455
  %v2508 = vpack.c.b16 %v2464, %v2460
  %v2509 = vpack.c.b16 %v2465, %v2461
  %v2510 = vpack.c.b16 %v2466, %v2462
  %v2511 = vpack.c.b16 %v2467, %v2463
  %v2512 = vpack.c.b16 %v2472, %v2468
  %v2513 = vpack.c.b16 %v2473, %v2469
  %v2514 = vpack.c.b16 %v2474, %v2470
  %v2515 = vpack.c.b16 %v2475, %v2471
  %v2516 = vpack.c.b16 %v2480, %v2476
  %v2517 = vpack.c.b16 %v2481, %v2477
  %v2518 = vpack.c.b16 %v2482, %v2478
  %v2519 = vpack.c.b16 %v2483, %v2479
  %v2520 = vpack.c.b16 %v2488, %v2484
  %v2521 = vpack.c.b16 %v2489, %v2485
  %v2522 = vpack.c.b16 %v2490, %v2486
  %v2523 = vpack.c.b16 %v2491, %v2487
  %2556 = vmatprep.subr.bf16.mxu0 %v2493
  %2557 = vmatpush1.bf16.msra.mxu0 %v2492
  %2558 = vmatprep.subr.bf16.mxu0 %v2497
  %2559 = vmatpush1.bf16.msra.mxu0 %v2496
  %2560 = vmatprep.subr.bf16.mxu0 %v2501
  %2561 = vmatpush1.bf16.msra.mxu0 %v2500
  %2562 = vmatprep.subr.bf16.mxu0 %v2505
  %2563 = vmatpush1.bf16.msra.mxu0 %v2504
  %2564 = vmatprep.subr.bf16.mxu0 %v2509
  %2565 = vmatpush1.bf16.msra.mxu0 %v2508
  %2566 = vmatprep.subr.bf16.mxu0 %v2513
  %2567 = vmatpush1.bf16.msra.mxu0 %v2512
  %2568 = vmatprep.subr.bf16.mxu0 %v2517
  %2569 = vmatpush1.bf16.msra.mxu0 %v2516
  %2570 = vmatprep.subr.bf16.mxu0 %v2521
  %2571 = vmatpush1.bf16.msra.mxu0 %v2520
  %2572 = vmatprep.subr.bf16.mxu0 0
  %2573 = vmatpush1.bf16.msra.mxu0 0
  %2574 = vmatprep.subr.bf16.mxu0 0
  %2575 = vmatpush1.bf16.msra.mxu0 0
  %2576 = vmatprep.subr.bf16.mxu0 0
  %2577 = vmatpush1.bf16.msra.mxu0 0
  %2578 = vmatprep.subr.bf16.mxu0 0
  %2579 = vmatpush1.bf16.msra.mxu0 0
  %2580 = vmatprep.subr.bf16.mxu0 0
  %2581 = vmatpush1.bf16.msra.mxu0 0
  %2582 = vmatprep.subr.bf16.mxu0 0
  %2583 = vmatpush1.bf16.msra.mxu0 0
  %2584 = vmatprep.subr.bf16.mxu0 0
  %2585 = vmatpush1.bf16.msra.mxu0 0
  %2586 = vmatprep.subr.bf16.mxu0 0
  %2587 = vmatpush1.bf16.msra.mxu0 0
  %2588 = vmatprep.mubr.bf16.mxu0 0
  %2589 = vmatmul.mubr.bf16.gmra.mrb[0].mxu0 %v2395
  %v2590 = vpop.f32.mrb[0].mxu0
  %v2591 = vadd.f32 0.0, %v2590
  %v2592 = vpop.f32.mrb[0].mxu0
  %v2593 = vadd.f32 0.0, %v2592
  %v2594 = vpop.f32.mrb[0].mxu0
  %v2595 = vpop.f32.mrb[0].mxu0
  %2596 = vdwg.mxu0
  %2597 = vmatprep.subr.bf16.mxu0 %v2495
  %2598 = vmatpush1.bf16.msra.mxu0 %v2494
  %2599 = vmatprep.subr.bf16.mxu0 %v2499
  %2600 = vmatpush1.bf16.msra.mxu0 %v2498
  %2601 = vmatprep.subr.bf16.mxu0 %v2503
  %2602 = vmatpush1.bf16.msra.mxu0 %v2502
  %2603 = vmatprep.subr.bf16.mxu0 %v2507
  %2604 = vmatpush1.bf16.msra.mxu0 %v2506
  %2605 = vmatprep.subr.bf16.mxu0 %v2511
  %2606 = vmatpush1.bf16.msra.mxu0 %v2510
  %2607 = vmatprep.subr.bf16.mxu0 %v2515
  %2608 = vmatpush1.bf16.msra.mxu0 %v2514
  %2609 = vmatprep.subr.bf16.mxu0 %v2519
  %2610 = vmatpush1.bf16.msra.mxu0 %v2518
  %2611 = vmatprep.subr.bf16.mxu0 %v2523
  %2612 = vmatpush1.bf16.msra.mxu0 %v2522
  %2613 = vmatprep.subr.bf16.mxu0 0
  %2614 = vmatpush1.bf16.msra.mxu0 0
  %2615 = vmatprep.subr.bf16.mxu0 0
  %2616 = vmatpush1.bf16.msra.mxu0 0
  %2617 = vmatprep.subr.bf16.mxu0 0
  %2618 = vmatpush1.bf16.msra.mxu0 0
  %2619 = vmatprep.subr.bf16.mxu0 0
  %2620 = vmatpush1.bf16.msra.mxu0 0
  %2621 = vmatprep.subr.bf16.mxu0 0
  %2622 = vmatpush1.bf16.msra.mxu0 0
  %2623 = vmatprep.subr.bf16.mxu0 0
  %2624 = vmatpush1.bf16.msra.mxu0 0
  %2625 = vmatprep.subr.bf16.mxu0 0
  %2626 = vmatpush1.bf16.msra.mxu0 0
  %2627 = vmatprep.subr.bf16.mxu0 0
  %2628 = vmatpush1.bf16.msra.mxu0 0
  %2629 = vmatprep.mubr.bf16.mxu0 0
  %2630 = vmatmul.mubr.bf16.gmra.mrb[0].mxu0 %v2395
  %v2631 = vpop.f32.mrb[0].mxu0
  %v2632 = vadd.f32 0.0, %v2631
  %v2633 = vpop.f32.mrb[0].mxu0
  %v2634 = vadd.f32 0.0, %v2633
  %v2635 = vpop.f32.mrb[0].mxu0
  %v2636 = vpop.f32.mrb[0].mxu0
  %2637 = vdwg.mxu0
  %s2638 = scalar_lea.vmem %s12, 37
  %v2639 = vld [vmem:[%s2638] ss:$8 sm:$0xf]
  %s2640 = scalar_lea.vmem %s12, 38
  %v2641 = vld [vmem:[%s2640] ss:$8 sm:$0xf]
  %v2642 = vsel %vm1860, %v2591, 0.0
  %v2643 = vsel %vm1860, %v2593, 0.0
  %v2644 = vadd.f32 %v2642, %v2643
  %v2645 = vsel %vm1860, %v2632, 0.0
  %v2646 = vadd.f32 %v2644, %v2645
  %v2647 = vsel %vm1860, %v2634, 0.0
  %v2648 = vadd.f32 %v2646, %v2647
  %2649 = vadd.xlane.f32.xlu0 %v2648
  %v2650 = vpop.xlane.xlu0 %2649
  %v2651 = vmul.f32 %v2650, %v1870
  %v2652 = vsub.f32 %v2591, %v2651
  %v2653 = vsub.f32 %v2593, %v2651
  %v2654 = vsub.f32 %v2632, %v2651
  %v2655 = vsub.f32 %v2634, %v2651
  %v2656 = vmul.f32 %v2652, %v2652
  %v2657 = vmul.f32 %v2653, %v2653
  %v2658 = vmul.f32 %v2654, %v2654
  %v2659 = vmul.f32 %v2655, %v2655
  %v2660 = vsel %vm1860, %v2656, 0.0
  %v2661 = vsel %vm1860, %v2657, 0.0
  %v2662 = vadd.f32 %v2660, %v2661
  %v2663 = vsel %vm1860, %v2658, 0.0
  %v2664 = vadd.f32 %v2662, %v2663
  %v2665 = vsel %vm1860, %v2659, 0.0
  %v2666 = vadd.f32 %v2664, %v2665
  %2667 = vadd.xlane.f32.xlu0 %v2666
  %v2668 = vpop.xlane.xlu0 %2667
  %v2669 = vmul.f32 %v2668, %v1870
  %v2670 = vadd.f32 %v2669, 1e-05
  %v2671 = vrsqrt.pop %v2670
  %v2672 = vmul.f32 %v2652, %v2671
  %v2673 = vmul.f32 %v2653, %v2671
  %v2674 = vmul.f32 %v2654, %v2671
  %v2675 = vmul.f32 %v2655, %v2671
  %v2677 = vlaneseq
  %v2678 = vshrl.u32 %v2677, 7
  %v2679 = vsub.s32 0, %v2678
  %v2680 = vrot.slane %v2639, %v2679
  %v2681 = vlaneseq
  %v2682 = vshrl.u32 %v2681, 7
  %v2683 = vsub.s32 1, %v2682
  %v2684 = vrot.slane %v2639, %v2683
  %v2685 = vlaneseq
  %v2686 = vshrl.u32 %v2685, 7
  %v2687 = vsub.s32 2, %v2686
  %v2688 = vrot.slane %v2639, %v2687
  %v2689 = vlaneseq
  %v2690 = vshrl.u32 %v2689, 7
  %v2691 = vsub.s32 3, %v2690
  %v2692 = vrot.slane %v2639, %v2691
  %v2697 = vmul.f32 %v2672, %v2680
  %v2698 = vmul.f32 %v2673, %v2684
  %v2699 = vmul.f32 %v2674, %v2688
  %v2700 = vmul.f32 %v2675, %v2692
  %v2702 = vlaneseq
  %v2703 = vshrl.u32 %v2702, 7
  %v2704 = vsub.s32 0, %v2703
  %v2705 = vrot.slane %v2641, %v2704
  %v2706 = vlaneseq
  %v2707 = vshrl.u32 %v2706, 7
  %v2708 = vsub.s32 1, %v2707
  %v2709 = vrot.slane %v2641, %v2708
  %v2710 = vlaneseq
  %v2711 = vshrl.u32 %v2710, 7
  %v2712 = vsub.s32 2, %v2711
  %v2713 = vrot.slane %v2641, %v2712
  %v2714 = vlaneseq
  %v2715 = vshrl.u32 %v2714, 7
  %v2716 = vsub.s32 3, %v2715
  %v2717 = vrot.slane %v2641, %v2716
  %v2722 = vadd.f32 %v2697, %v2705
  %v2723 = vadd.f32 %v2698, %v2709
  %v2724 = vadd.f32 %v2699, %v2713
  %v2725 = vadd.f32 %v2700, %v2717
  %s2726 = scalar_lea.vmem %s11, 768
  %v2727 = vld [vmem:[%s2726] sm:$0xff]
  %v2728 = vld [vmem:[%s2726 + $0x8] sm:$0xff]
  %v2729 = vld [vmem:[%s2726 + $0x10] sm:$0xff]
  %v2730 = vld [vmem:[%s2726 + $0x18] sm:$0xff]
  %v2731 = vld [vmem:[%s2726 + $0x20] sm:$0xff]
  %v2732 = vld [vmem:[%s2726 + $0x28] sm:$0xff]
  %v2733 = vld [vmem:[%s2726 + $0x30] sm:$0xff]
  %v2734 = vld [vmem:[%s2726 + $0x38] sm:$0xff]
  %v2735 = vld [vmem:[%s2726 + $0x40] sm:$0xff]
  %v2736 = vld [vmem:[%s2726 + $0x48] sm:$0xff]
  %v2737 = vld [vmem:[%s2726 + $0x50] sm:$0xff]
  %v2738 = vld [vmem:[%s2726 + $0x58] sm:$0xff]
  %v2739 = vld [vmem:[%s2726 + $0x60] sm:$0xff]
  %v2740 = vld [vmem:[%s2726 + $0x68] sm:$0xff]
  %v2741 = vld [vmem:[%s2726 + $0x70] sm:$0xff]
  %v2742 = vld [vmem:[%s2726 + $0x78] sm:$0xff]
  %v2743 = vld [vmem:[%s2726 + $0x80] sm:$0xff]
  %v2744 = vld [vmem:[%s2726 + $0x88] sm:$0xff]
  %v2745 = vld [vmem:[%s2726 + $0x90] sm:$0xff]
  %v2746 = vld [vmem:[%s2726 + $0x98] sm:$0xff]
  %v2747 = vld [vmem:[%s2726 + $0xa0] sm:$0xff]
  %v2748 = vld [vmem:[%s2726 + $0xa8] sm:$0xff]
  %v2749 = vld [vmem:[%s2726 + $0xb0] sm:$0xff]
  %v2750 = vld [vmem:[%s2726 + $0xb8] sm:$0xff]
  %v2751 = vld [vmem:[%s2726 + $0xc0] sm:$0xff]
  %v2752 = vld [vmem:[%s2726 + $0xc8] sm:$0xff]
  %v2753 = vld [vmem:[%s2726 + $0xd0] sm:$0xff]
  %v2754 = vld [vmem:[%s2726 + $0xd8] sm:$0xff]
  %v2755 = vld [vmem:[%s2726 + $0xe0] sm:$0xff]
  %v2756 = vld [vmem:[%s2726 + $0xe8] sm:$0xff]
  %v2757 = vld [vmem:[%s2726 + $0xf0] sm:$0xff]
  %v2758 = vld [vmem:[%s2726 + $0xf8] sm:$0xff]
  %v2759 = vpack.c.bf16 %v2359, %v2359
  %v2792 = vunpack.c.l.b16 %v2727
  %v2793 = vunpack.c.h.b16 %v2727
  %v2794 = vunpack.c.l.b16 %v2728
  %v2795 = vunpack.c.h.b16 %v2728
  %v2796 = vunpack.c.l.b16 %v2729
  %v2797 = vunpack.c.h.b16 %v2729
  %v2798 = vunpack.c.l.b16 %v2730
  %v2799 = vunpack.c.h.b16 %v2730
  %v2800 = vunpack.c.l.b16 %v2731
  %v2801 = vunpack.c.h.b16 %v2731
  %v2802 = vunpack.c.l.b16 %v2732
  %v2803 = vunpack.c.h.b16 %v2732
  %v2804 = vunpack.c.l.b16 %v2733
  %v2805 = vunpack.c.h.b16 %v2733
  %v2806 = vunpack.c.l.b16 %v2734
  %v2807 = vunpack.c.h.b16 %v2734
  %v2808 = vunpack.c.l.b16 %v2735
  %v2809 = vunpack.c.h.b16 %v2735
  %v2810 = vunpack.c.l.b16 %v2736
  %v2811 = vunpack.c.h.b16 %v2736
  %v2812 = vunpack.c.l.b16 %v2737
  %v2813 = vunpack.c.h.b16 %v2737
  %v2814 = vunpack.c.l.b16 %v2738
  %v2815 = vunpack.c.h.b16 %v2738
  %v2816 = vunpack.c.l.b16 %v2739
  %v2817 = vunpack.c.h.b16 %v2739
  %v2818 = vunpack.c.l.b16 %v2740
  %v2819 = vunpack.c.h.b16 %v2740
  %v2820 = vunpack.c.l.b16 %v2741
  %v2821 = vunpack.c.h.b16 %v2741
  %v2822 = vunpack.c.l.b16 %v2742
  %v2823 = vunpack.c.h.b16 %v2742
  %v2824 = vunpack.c.l.b16 %v2743
  %v2825 = vunpack.c.h.b16 %v2743
  %v2826 = vunpack.c.l.b16 %v2744
  %v2827 = vunpack.c.h.b16 %v2744
  %v2828 = vunpack.c.l.b16 %v2745
  %v2829 = vunpack.c.h.b16 %v2745
  %v2830 = vunpack.c.l.b16 %v2746
  %v2831 = vunpack.c.h.b16 %v2746
  %v2832 = vunpack.c.l.b16 %v2747
  %v2833 = vunpack.c.h.b16 %v2747
  %v2834 = vunpack.c.l.b16 %v2748
  %v2835 = vunpack.c.h.b16 %v2748
  %v2836 = vunpack.c.l.b16 %v2749
  %v2837 = vunpack.c.h.b16 %v2749
  %v2838 = vunpack.c.l.b16 %v2750
  %v2839 = vunpack.c.h.b16 %v2750
  %v2840 = vunpack.c.l.b16 %v2751
  %v2841 = vunpack.c.h.b16 %v2751
  %v2842 = vunpack.c.l.b16 %v2752
  %v2843 = vunpack.c.h.b16 %v2752
  %v2844 = vunpack.c.l.b16 %v2753
  %v2845 = vunpack.c.h.b16 %v2753
  %v2846 = vunpack.c.l.b16 %v2754
  %v2847 = vunpack.c.h.b16 %v2754
  %v2848 = vunpack.c.l.b16 %v2755
  %v2849 = vunpack.c.h.b16 %v2755
  %v2850 = vunpack.c.l.b16 %v2756
  %v2851 = vunpack.c.h.b16 %v2756
  %v2852 = vunpack.c.l.b16 %v2757
  %v2853 = vunpack.c.h.b16 %v2757
  %v2854 = vunpack.c.l.b16 %v2758
  %v2855 = vunpack.c.h.b16 %v2758
  %v2856 = vpack.c.b16 %v2796, %v2792
  %v2857 = vpack.c.b16 %v2797, %v2793
  %v2858 = vpack.c.b16 %v2798, %v2794
  %v2859 = vpack.c.b16 %v2799, %v2795
  %v2860 = vpack.c.b16 %v2804, %v2800
  %v2861 = vpack.c.b16 %v2805, %v2801
  %v2862 = vpack.c.b16 %v2806, %v2802
  %v2863 = vpack.c.b16 %v2807, %v2803
  %v2864 = vpack.c.b16 %v2812, %v2808
  %v2865 = vpack.c.b16 %v2813, %v2809
  %v2866 = vpack.c.b16 %v2814, %v2810
  %v2867 = vpack.c.b16 %v2815, %v2811
  %v2868 = vpack.c.b16 %v2820, %v2816
  %v2869 = vpack.c.b16 %v2821, %v2817
  %v2870 = vpack.c.b16 %v2822, %v2818
  %v2871 = vpack.c.b16 %v2823, %v2819
  %v2872 = vpack.c.b16 %v2828, %v2824
  %v2873 = vpack.c.b16 %v2829, %v2825
  %v2874 = vpack.c.b16 %v2830, %v2826
  %v2875 = vpack.c.b16 %v2831, %v2827
  %v2876 = vpack.c.b16 %v2836, %v2832
  %v2877 = vpack.c.b16 %v2837, %v2833
  %v2878 = vpack.c.b16 %v2838, %v2834
  %v2879 = vpack.c.b16 %v2839, %v2835
  %v2880 = vpack.c.b16 %v2844, %v2840
  %v2881 = vpack.c.b16 %v2845, %v2841
  %v2882 = vpack.c.b16 %v2846, %v2842
  %v2883 = vpack.c.b16 %v2847, %v2843
  %v2884 = vpack.c.b16 %v2852, %v2848
  %v2885 = vpack.c.b16 %v2853, %v2849
  %v2886 = vpack.c.b16 %v2854, %v2850
  %v2887 = vpack.c.b16 %v2855, %v2851
  %2920 = vmatprep.subr.bf16.mxu0 %v2857
  %2921 = vmatpush1.bf16.msra.mxu0 %v2856
  %2922 = vmatprep.subr.bf16.mxu0 %v2861
  %2923 = vmatpush1.bf16.msra.mxu0 %v2860
  %2924 = vmatprep.subr.bf16.mxu0 %v2865
  %2925 = vmatpush1.bf16.msra.mxu0 %v2864
  %2926 = vmatprep.subr.bf16.mxu0 %v2869
  %2927 = vmatpush1.bf16.msra.mxu0 %v2868
  %2928 = vmatprep.subr.bf16.mxu0 %v2873
  %2929 = vmatpush1.bf16.msra.mxu0 %v2872
  %2930 = vmatprep.subr.bf16.mxu0 %v2877
  %2931 = vmatpush1.bf16.msra.mxu0 %v2876
  %2932 = vmatprep.subr.bf16.mxu0 %v2881
  %2933 = vmatpush1.bf16.msra.mxu0 %v2880
  %2934 = vmatprep.subr.bf16.mxu0 %v2885
  %2935 = vmatpush1.bf16.msra.mxu0 %v2884
  %2936 = vmatprep.subr.bf16.mxu0 0
  %2937 = vmatpush1.bf16.msra.mxu0 0
  %2938 = vmatprep.subr.bf16.mxu0 0
  %2939 = vmatpush1.bf16.msra.mxu0 0
  %2940 = vmatprep.subr.bf16.mxu0 0
  %2941 = vmatpush1.bf16.msra.mxu0 0
  %2942 = vmatprep.subr.bf16.mxu0 0
  %2943 = vmatpush1.bf16.msra.mxu0 0
  %2944 = vmatprep.subr.bf16.mxu0 0
  %2945 = vmatpush1.bf16.msra.mxu0 0
  %2946 = vmatprep.subr.bf16.mxu0 0
  %2947 = vmatpush1.bf16.msra.mxu0 0
  %2948 = vmatprep.subr.bf16.mxu0 0
  %2949 = vmatpush1.bf16.msra.mxu0 0
  %2950 = vmatprep.subr.bf16.mxu0 0
  %2951 = vmatpush1.bf16.msra.mxu0 0
  %2952 = vmatprep.mubr.bf16.mxu0 0
  %2953 = vmatmul.mubr.bf16.gmra.mrb[0].mxu0 %v2759
  %v2954 = vpop.f32.mrb[0].mxu0
  %v2955 = vadd.f32 0.0, %v2954
  %v2956 = vpop.f32.mrb[0].mxu0
  %v2957 = vadd.f32 0.0, %v2956
  %v2958 = vpop.f32.mrb[0].mxu0
  %v2959 = vpop.f32.mrb[0].mxu0
  %2960 = vdwg.mxu0
  %2961 = vmatprep.subr.bf16.mxu0 %v2859
  %2962 = vmatpush1.bf16.msra.mxu0 %v2858
  %2963 = vmatprep.subr.bf16.mxu0 %v2863
  %2964 = vmatpush1.bf16.msra.mxu0 %v2862
  %2965 = vmatprep.subr.bf16.mxu0 %v2867
  %2966 = vmatpush1.bf16.msra.mxu0 %v2866
  %2967 = vmatprep.subr.bf16.mxu0 %v2871
  %2968 = vmatpush1.bf16.msra.mxu0 %v2870
  %2969 = vmatprep.subr.bf16.mxu0 %v2875
  %2970 = vmatpush1.bf16.msra.mxu0 %v2874
  %2971 = vmatprep.subr.bf16.mxu0 %v2879
  %2972 = vmatpush1.bf16.msra.mxu0 %v2878
  %2973 = vmatprep.subr.bf16.mxu0 %v2883
  %2974 = vmatpush1.bf16.msra.mxu0 %v2882
  %2975 = vmatprep.subr.bf16.mxu0 %v2887
  %2976 = vmatpush1.bf16.msra.mxu0 %v2886
  %2977 = vmatprep.subr.bf16.mxu0 0
  %2978 = vmatpush1.bf16.msra.mxu0 0
  %2979 = vmatprep.subr.bf16.mxu0 0
  %2980 = vmatpush1.bf16.msra.mxu0 0
  %2981 = vmatprep.subr.bf16.mxu0 0
  %2982 = vmatpush1.bf16.msra.mxu0 0
  %2983 = vmatprep.subr.bf16.mxu0 0
  %2984 = vmatpush1.bf16.msra.mxu0 0
  %2985 = vmatprep.subr.bf16.mxu0 0
  %2986 = vmatpush1.bf16.msra.mxu0 0
  %2987 = vmatprep.subr.bf16.mxu0 0
  %2988 = vmatpush1.bf16.msra.mxu0 0
  %2989 = vmatprep.subr.bf16.mxu0 0
  %2990 = vmatpush1.bf16.msra.mxu0 0
  %2991 = vmatprep.subr.bf16.mxu0 0
  %2992 = vmatpush1.bf16.msra.mxu0 0
  %2993 = vmatprep.mubr.bf16.mxu0 0
  %2994 = vmatmul.mubr.bf16.gmra.mrb[0].mxu0 %v2759
  %v2995 = vpop.f32.mrb[0].mxu0
  %v2996 = vadd.f32 0.0, %v2995
  %v2997 = vpop.f32.mrb[0].mxu0
  %v2998 = vadd.f32 0.0, %v2997
  %v2999 = vpop.f32.mrb[0].mxu0
  %v3000 = vpop.f32.mrb[0].mxu0
  %3001 = vdwg.mxu0
  %s3002 = scalar_lea.vmem %s12, 39
  %v3003 = vld [vmem:[%s3002] ss:$8 sm:$0xf]
  %s3004 = scalar_lea.vmem %s12, 64
  %v3005 = vld [vmem:[%s3004] ss:$8 sm:$0xf]
  %v3006 = vsel %vm1860, %v2955, 0.0
  %v3007 = vsel %vm1860, %v2957, 0.0
  %v3008 = vadd.f32 %v3006, %v3007
  %v3009 = vsel %vm1860, %v2996, 0.0
  %v3010 = vadd.f32 %v3008, %v3009
  %v3011 = vsel %vm1860, %v2998, 0.0
  %v3012 = vadd.f32 %v3010, %v3011
  %3013 = vadd.xlane.f32.xlu0 %v3012
  %v3014 = vpop.xlane.xlu0 %3013
  %v3015 = vmul.f32 %v3014, %v1870
  %v3016 = vsub.f32 %v2955, %v3015
  %v3017 = vsub.f32 %v2957, %v3015
  %v3018 = vsub.f32 %v2996, %v3015
  %v3019 = vsub.f32 %v2998, %v3015
  %v3020 = vmul.f32 %v3016, %v3016
  %v3021 = vmul.f32 %v3017, %v3017
  %v3022 = vmul.f32 %v3018, %v3018
  %v3023 = vmul.f32 %v3019, %v3019
  %v3024 = vsel %vm1860, %v3020, 0.0
  %v3025 = vsel %vm1860, %v3021, 0.0
  %v3026 = vadd.f32 %v3024, %v3025
  %v3027 = vsel %vm1860, %v3022, 0.0
  %v3028 = vadd.f32 %v3026, %v3027
  %v3029 = vsel %vm1860, %v3023, 0.0
  %v3030 = vadd.f32 %v3028, %v3029
  %3031 = vadd.xlane.f32.xlu0 %v3030
  %v3032 = vpop.xlane.xlu0 %3031
  %v3033 = vmul.f32 %v3032, %v1870
  %v3034 = vadd.f32 %v3033, 1e-05
  %v3035 = vrsqrt.pop %v3034
  %v3036 = vmul.f32 %v3016, %v3035
  %v3037 = vmul.f32 %v3017, %v3035
  %v3038 = vmul.f32 %v3018, %v3035
  %v3039 = vmul.f32 %v3019, %v3035
  %v3041 = vlaneseq
  %v3042 = vshrl.u32 %v3041, 7
  %v3043 = vsub.s32 0, %v3042
  %v3044 = vrot.slane %v3003, %v3043
  %v3045 = vlaneseq
  %v3046 = vshrl.u32 %v3045, 7
  %v3047 = vsub.s32 1, %v3046
  %v3048 = vrot.slane %v3003, %v3047
  %v3049 = vlaneseq
  %v3050 = vshrl.u32 %v3049, 7
  %v3051 = vsub.s32 2, %v3050
  %v3052 = vrot.slane %v3003, %v3051
  %v3053 = vlaneseq
  %v3054 = vshrl.u32 %v3053, 7
  %v3055 = vsub.s32 3, %v3054
  %v3056 = vrot.slane %v3003, %v3055
  %v3061 = vmul.f32 %v3036, %v3044
  %v3062 = vmul.f32 %v3037, %v3048
  %v3063 = vmul.f32 %v3038, %v3052
  %v3064 = vmul.f32 %v3039, %v3056
  %v3066 = vlaneseq
  %v3067 = vshrl.u32 %v3066, 7
  %v3068 = vsub.s32 0, %v3067
  %v3069 = vrot.slane %v3005, %v3068
  %v3070 = vlaneseq
  %v3071 = vshrl.u32 %v3070, 7
  %v3072 = vsub.s32 1, %v3071
  %v3073 = vrot.slane %v3005, %v3072
  %v3074 = vlaneseq
  %v3075 = vshrl.u32 %v3074, 7
  %v3076 = vsub.s32 2, %v3075
  %v3077 = vrot.slane %v3005, %v3076
  %v3078 = vlaneseq
  %v3079 = vshrl.u32 %v3078, 7
  %v3080 = vsub.s32 3, %v3079
  %v3081 = vrot.slane %v3005, %v3080
  %v3086 = vadd.f32 %v3061, %v3069
  %v3087 = vadd.f32 %v3062, %v3073
  %v3088 = vadd.f32 %v3063, %v3077
  %v3089 = vadd.f32 %v3064, %v3081
  %v3090 = vadd.f32 %v2722, %v3086
  %v3091 = vadd.f32 %v2723, %v3087
  %v3092 = vadd.f32 %v2724, %v3088
  %v3093 = vadd.f32 %v2725, %v3089
  %v3094 = vxor.u32 %v3090, 2147483648
  %v3095 = vmul.f32 %v3094, 1.442695
  %v3096 = vpow.pop %v3095
  %v3097 = vadd.f32 %v3096, 1.0
  %v3098 = vrcp.pop %v3097
  %v3099 = vmul.f32 1.0, %v3098
  %v3100 = vxor.u32 %v3091, 2147483648
  %v3101 = vmul.f32 %v3100, 1.442695
  %v3102 = vpow.pop %v3101
  %v3103 = vadd.f32 %v3102, 1.0
  %v3104 = vrcp.pop %v3103
  %v3105 = vmul.f32 1.0, %v3104
  %v3106 = vtanh.pop %v3092
  %v3107 = vxor.u32 %v3093, 2147483648
  %v3108 = vmul.f32 %v3107, 1.442695
  %v3109 = vpow.pop %v3108
  %v3110 = vadd.f32 %v3109, 1.0
  %v3111 = vrcp.pop %v3110
  %v3112 = vmul.f32 1.0, %v3111
  %v3113 = vmul.f32 %v3105, %v2361
  %v3114 = vmul.f32 %v3099, %v3106
  %v3115 = vadd.f32 %v3113, %v3114
  %v3116 = vld [vmem:[%s12 + $0x41] ss:$0 sm:$0xff]
  %v3117 = vld [vmem:[%s12 + $0x42] ss:$0 sm:$0xff]
  %v3118 = vsel %vm1860, %v3115, 0.0
  %3119 = vadd.xlane.f32.xlu0 %v3118
  %v3120 = vpop.xlane.xlu0 %3119
  %v3121 = vmul.f32 %v3120, %v2341
  %v3122 = vsub.f32 %v3115, %v3121
  %v3123 = vmul.f32 %v3122, %v3122
  %v3124 = vsel %vm1860, %v3123, 0.0
  %3125 = vadd.xlane.f32.xlu0 %v3124
  %v3126 = vpop.xlane.xlu0 %3125
  %v3127 = vmul.f32 %v3126, %v2341
  %v3128 = vadd.f32 %v3127, 1e-05
  %v3129 = vrsqrt.pop %v3128
  %v3130 = vmul.f32 %v3122, %v3129
  %v3131 = vmul.f32 %v3130, %v3116
  %v3132 = vadd.f32 %v3131, %v3117
  %v3133 = vtanh.pop %v3132
  %v3134 = vmul.f32 %v3112, %v3133
  %s3135 = scalar_lea.vmem %s14, 2
  %3136 = vst [vmem:[%s3135] sm:$0x3] %v3134
  %s3137 = scalar_lea.vmem %s15, 2
  %3138 = vst [vmem:[%s3137] sm:$0x3] %v3132
  %v3139 = vld [vmem:[%s10] sm:$0xff]
  %v3140 = vld [vmem:[%s10 + $0x8] sm:$0xff]
  %v3141 = vld [vmem:[%s10 + $0x10] sm:$0xff]
  %v3142 = vld [vmem:[%s10 + $0x18] sm:$0xff]
  %v3143 = vld [vmem:[%s10 + $0x20] sm:$0xff]
  %v3144 = vld [vmem:[%s10 + $0x28] sm:$0xff]
  %v3145 = vld [vmem:[%s10 + $0x30] sm:$0xff]
  %v3146 = vld [vmem:[%s10 + $0x38] sm:$0xff]
  %v3147 = vld [vmem:[%s10 + $0x40] sm:$0xff]
  %v3148 = vld [vmem:[%s10 + $0x48] sm:$0xff]
  %v3149 = vld [vmem:[%s10 + $0x50] sm:$0xff]
  %v3150 = vld [vmem:[%s10 + $0x58] sm:$0xff]
  %v3151 = vld [vmem:[%s10 + $0x60] sm:$0xff]
  %v3152 = vld [vmem:[%s10 + $0x68] sm:$0xff]
  %v3153 = vld [vmem:[%s10 + $0x70] sm:$0xff]
  %v3154 = vld [vmem:[%s10 + $0x78] sm:$0xff]
  %v3155 = vld [vmem:[%s10 + $0x80] sm:$0xff]
  %v3156 = vld [vmem:[%s10 + $0x88] sm:$0xff]
  %v3157 = vld [vmem:[%s10 + $0x90] sm:$0xff]
  %v3158 = vld [vmem:[%s10 + $0x98] sm:$0xff]
  %v3159 = vld [vmem:[%s10 + $0xa0] sm:$0xff]
  %v3160 = vld [vmem:[%s10 + $0xa8] sm:$0xff]
  %v3161 = vld [vmem:[%s10 + $0xb0] sm:$0xff]
  %v3162 = vld [vmem:[%s10 + $0xb8] sm:$0xff]
  %v3163 = vld [vmem:[%s10 + $0xc0] sm:$0xff]
  %v3164 = vld [vmem:[%s10 + $0xc8] sm:$0xff]
  %v3165 = vld [vmem:[%s10 + $0xd0] sm:$0xff]
  %v3166 = vld [vmem:[%s10 + $0xd8] sm:$0xff]
  %v3167 = vld [vmem:[%s10 + $0xe0] sm:$0xff]
  %v3168 = vld [vmem:[%s10 + $0xe8] sm:$0xff]
  %v3169 = vld [vmem:[%s10 + $0xf0] sm:$0xff]
  %v3170 = vld [vmem:[%s10 + $0xf8] sm:$0xff]
  %v3171 = vpack.c.bf16 %v3134, %v3134
  %s3172 = scalar_lea.vmem %s12, 6
  %v3173 = vld [vmem:[%s3172] ss:$8 sm:$0xf]
  %v3175 = vlaneseq
  %v3176 = vshrl.u32 %v3175, 7
  %v3177 = vsub.s32 0, %v3176
  %v3178 = vrot.slane %v3173, %v3177
  %v3179 = vlaneseq
  %v3180 = vshrl.u32 %v3179, 7
  %v3181 = vsub.s32 1, %v3180
  %v3182 = vrot.slane %v3173, %v3181
  %v3183 = vlaneseq
  %v3184 = vshrl.u32 %v3183, 7
  %v3185 = vsub.s32 2, %v3184
  %v3186 = vrot.slane %v3173, %v3185
  %v3187 = vlaneseq
  %v3188 = vshrl.u32 %v3187, 7
  %v3189 = vsub.s32 3, %v3188
  %v3190 = vrot.slane %v3173, %v3189
  %v3227 = vunpack.c.l.b16 %v3139
  %v3228 = vunpack.c.h.b16 %v3139
  %v3229 = vunpack.c.l.b16 %v3140
  %v3230 = vunpack.c.h.b16 %v3140
  %v3231 = vunpack.c.l.b16 %v3141
  %v3232 = vunpack.c.h.b16 %v3141
  %v3233 = vunpack.c.l.b16 %v3142
  %v3234 = vunpack.c.h.b16 %v3142
  %v3235 = vunpack.c.l.b16 %v3143
  %v3236 = vunpack.c.h.b16 %v3143
  %v3237 = vunpack.c.l.b16 %v3144
  %v3238 = vunpack.c.h.b16 %v3144
  %v3239 = vunpack.c.l.b16 %v3145
  %v3240 = vunpack.c.h.b16 %v3145
  %v3241 = vunpack.c.l.b16 %v3146
  %v3242 = vunpack.c.h.b16 %v3146
  %v3243 = vunpack.c.l.b16 %v3147
  %v3244 = vunpack.c.h.b16 %v3147
  %v3245 = vunpack.c.l.b16 %v3148
  %v3246 = vunpack.c.h.b16 %v3148
  %v3247 = vunpack.c.l.b16 %v3149
  %v3248 = vunpack.c.h.b16 %v3149
  %v3249 = vunpack.c.l.b16 %v3150
  %v3250 = vunpack.c.h.b16 %v3150
  %v3251 = vunpack.c.l.b16 %v3151
  %v3252 = vunpack.c.h.b16 %v3151
  %v3253 = vunpack.c.l.b16 %v3152
  %v3254 = vunpack.c.h.b16 %v3152
  %v3255 = vunpack.c.l.b16 %v3153
  %v3256 = vunpack.c.h.b16 %v3153
  %v3257 = vunpack.c.l.b16 %v3154
  %v3258 = vunpack.c.h.b16 %v3154
  %v3259 = vunpack.c.l.b16 %v3155
  %v3260 = vunpack.c.h.b16 %v3155
  %v3261 = vunpack.c.l.b16 %v3156
  %v3262 = vunpack.c.h.b16 %v3156
  %v3263 = vunpack.c.l.b16 %v3157
  %v3264 = vunpack.c.h.b16 %v3157
  %v3265 = vunpack.c.l.b16 %v3158
  %v3266 = vunpack.c.h.b16 %v3158
  %v3267 = vunpack.c.l.b16 %v3159
  %v3268 = vunpack.c.h.b16 %v3159
  %v3269 = vunpack.c.l.b16 %v3160
  %v3270 = vunpack.c.h.b16 %v3160
  %v3271 = vunpack.c.l.b16 %v3161
  %v3272 = vunpack.c.h.b16 %v3161
  %v3273 = vunpack.c.l.b16 %v3162
  %v3274 = vunpack.c.h.b16 %v3162
  %v3275 = vunpack.c.l.b16 %v3163
  %v3276 = vunpack.c.h.b16 %v3163
  %v3277 = vunpack.c.l.b16 %v3164
  %v3278 = vunpack.c.h.b16 %v3164
  %v3279 = vunpack.c.l.b16 %v3165
  %v3280 = vunpack.c.h.b16 %v3165
  %v3281 = vunpack.c.l.b16 %v3166
  %v3282 = vunpack.c.h.b16 %v3166
  %v3283 = vunpack.c.l.b16 %v3167
  %v3284 = vunpack.c.h.b16 %v3167
  %v3285 = vunpack.c.l.b16 %v3168
  %v3286 = vunpack.c.h.b16 %v3168
  %v3287 = vunpack.c.l.b16 %v3169
  %v3288 = vunpack.c.h.b16 %v3169
  %v3289 = vunpack.c.l.b16 %v3170
  %v3290 = vunpack.c.h.b16 %v3170
  %v3291 = vpack.c.b16 %v3231, %v3227
  %v3292 = vpack.c.b16 %v3232, %v3228
  %v3293 = vpack.c.b16 %v3233, %v3229
  %v3294 = vpack.c.b16 %v3234, %v3230
  %v3295 = vpack.c.b16 %v3239, %v3235
  %v3296 = vpack.c.b16 %v3240, %v3236
  %v3297 = vpack.c.b16 %v3241, %v3237
  %v3298 = vpack.c.b16 %v3242, %v3238
  %v3299 = vpack.c.b16 %v3247, %v3243
  %v3300 = vpack.c.b16 %v3248, %v3244
  %v3301 = vpack.c.b16 %v3249, %v3245
  %v3302 = vpack.c.b16 %v3250, %v3246
  %v3303 = vpack.c.b16 %v3255, %v3251
  %v3304 = vpack.c.b16 %v3256, %v3252
  %v3305 = vpack.c.b16 %v3257, %v3253
  %v3306 = vpack.c.b16 %v3258, %v3254
  %v3307 = vpack.c.b16 %v3263, %v3259
  %v3308 = vpack.c.b16 %v3264, %v3260
  %v3309 = vpack.c.b16 %v3265, %v3261
  %v3310 = vpack.c.b16 %v3266, %v3262
  %v3311 = vpack.c.b16 %v3271, %v3267
  %v3312 = vpack.c.b16 %v3272, %v3268
  %v3313 = vpack.c.b16 %v3273, %v3269
  %v3314 = vpack.c.b16 %v3274, %v3270
  %v3315 = vpack.c.b16 %v3279, %v3275
  %v3316 = vpack.c.b16 %v3280, %v3276
  %v3317 = vpack.c.b16 %v3281, %v3277
  %v3318 = vpack.c.b16 %v3282, %v3278
  %v3319 = vpack.c.b16 %v3287, %v3283
  %v3320 = vpack.c.b16 %v3288, %v3284
  %v3321 = vpack.c.b16 %v3289, %v3285
  %v3322 = vpack.c.b16 %v3290, %v3286
  %3355 = vmatprep.subr.bf16.mxu0 %v3292
  %3356 = vmatpush1.bf16.msra.mxu0 %v3291
  %3357 = vmatprep.subr.bf16.mxu0 %v3296
  %3358 = vmatpush1.bf16.msra.mxu0 %v3295
  %3359 = vmatprep.subr.bf16.mxu0 %v3300
  %3360 = vmatpush1.bf16.msra.mxu0 %v3299
  %3361 = vmatprep.subr.bf16.mxu0 %v3304
  %3362 = vmatpush1.bf16.msra.mxu0 %v3303
  %3363 = vmatprep.subr.bf16.mxu0 %v3308
  %3364 = vmatpush1.bf16.msra.mxu0 %v3307
  %3365 = vmatprep.subr.bf16.mxu0 %v3312
  %3366 = vmatpush1.bf16.msra.mxu0 %v3311
  %3367 = vmatprep.subr.bf16.mxu0 %v3316
  %3368 = vmatpush1.bf16.msra.mxu0 %v3315
  %3369 = vmatprep.subr.bf16.mxu0 %v3320
  %3370 = vmatpush1.bf16.msra.mxu0 %v3319
  %3371 = vmatprep.subr.bf16.mxu0 0
  %3372 = vmatpush1.bf16.msra.mxu0 0
  %3373 = vmatprep.subr.bf16.mxu0 0
  %3374 = vmatpush1.bf16.msra.mxu0 0
  %3375 = vmatprep.subr.bf16.mxu0 0
  %3376 = vmatpush1.bf16.msra.mxu0 0
  %3377 = vmatprep.subr.bf16.mxu0 0
  %3378 = vmatpush1.bf16.msra.mxu0 0
  %3379 = vmatprep.subr.bf16.mxu0 0
  %3380 = vmatpush1.bf16.msra.mxu0 0
  %3381 = vmatprep.subr.bf16.mxu0 0
  %3382 = vmatpush1.bf16.msra.mxu0 0
  %3383 = vmatprep.subr.bf16.mxu0 0
  %3384 = vmatpush1.bf16.msra.mxu0 0
  %3385 = vmatprep.subr.bf16.mxu0 0
  %3386 = vmatpush1.bf16.msra.mxu0 0
  %3387 = vmatprep.mubr.bf16.mxu0 0
  %3388 = vmatmul.mubr.bf16.gmra.mrb[0].mxu0 %v3171
  %v3389 = vpop.f32.mrb[0].mxu0
  %v3390 = vadd.f32 %v3178, %v3389
  %v3391 = vpop.f32.mrb[0].mxu0
  %v3392 = vadd.f32 %v3182, %v3391
  %v3393 = vpop.f32.mrb[0].mxu0
  %v3394 = vpop.f32.mrb[0].mxu0
  %3395 = vdwg.mxu0
  %3396 = vmatprep.subr.bf16.mxu0 %v3294
  %3397 = vmatpush1.bf16.msra.mxu0 %v3293
  %3398 = vmatprep.subr.bf16.mxu0 %v3298
  %3399 = vmatpush1.bf16.msra.mxu0 %v3297
  %3400 = vmatprep.subr.bf16.mxu0 %v3302
  %3401 = vmatpush1.bf16.msra.mxu0 %v3301
  %3402 = vmatprep.subr.bf16.mxu0 %v3306
  %3403 = vmatpush1.bf16.msra.mxu0 %v3305
  %3404 = vmatprep.subr.bf16.mxu0 %v3310
  %3405 = vmatpush1.bf16.msra.mxu0 %v3309
  %3406 = vmatprep.subr.bf16.mxu0 %v3314
  %3407 = vmatpush1.bf16.msra.mxu0 %v3313
  %3408 = vmatprep.subr.bf16.mxu0 %v3318
  %3409 = vmatpush1.bf16.msra.mxu0 %v3317
  %3410 = vmatprep.subr.bf16.mxu0 %v3322
  %3411 = vmatpush1.bf16.msra.mxu0 %v3321
  %3412 = vmatprep.subr.bf16.mxu0 0
  %3413 = vmatpush1.bf16.msra.mxu0 0
  %3414 = vmatprep.subr.bf16.mxu0 0
  %3415 = vmatpush1.bf16.msra.mxu0 0
  %3416 = vmatprep.subr.bf16.mxu0 0
  %3417 = vmatpush1.bf16.msra.mxu0 0
  %3418 = vmatprep.subr.bf16.mxu0 0
  %3419 = vmatpush1.bf16.msra.mxu0 0
  %3420 = vmatprep.subr.bf16.mxu0 0
  %3421 = vmatpush1.bf16.msra.mxu0 0
  %3422 = vmatprep.subr.bf16.mxu0 0
  %3423 = vmatpush1.bf16.msra.mxu0 0
  %3424 = vmatprep.subr.bf16.mxu0 0
  %3425 = vmatpush1.bf16.msra.mxu0 0
  %3426 = vmatprep.subr.bf16.mxu0 0
  %3427 = vmatpush1.bf16.msra.mxu0 0
  %3428 = vmatprep.mubr.bf16.mxu0 0
  %3429 = vmatmul.mubr.bf16.gmra.mrb[0].mxu0 %v3171
  %v3430 = vpop.f32.mrb[0].mxu0
  %v3431 = vadd.f32 %v3186, %v3430
  %v3432 = vpop.f32.mrb[0].mxu0
  %v3433 = vadd.f32 %v3190, %v3432
  %v3434 = vpop.f32.mrb[0].mxu0
  %v3435 = vpop.f32.mrb[0].mxu0
  %3436 = vdwg.mxu0
  %s3437 = scalar_lea.vmem %s7, 256
  %v3438 = vld [vmem:[%s3437] sm:$0xf]
  %v3439 = vld [vmem:[%s3437 + $0x4] sm:$0xf]
  %v3440 = vld [vmem:[%s3437 + $0x8] sm:$0xf]
  %v3441 = vld [vmem:[%s3437 + $0xc] sm:$0xf]
  %v3442 = vld [vmem:[%s3437 + $0x10] sm:$0xf]
  %v3443 = vld [vmem:[%s3437 + $0x14] sm:$0xf]
  %v3444 = vld [vmem:[%s3437 + $0x18] sm:$0xf]
  %v3445 = vld [vmem:[%s3437 + $0x1c] sm:$0xf]
  %v3446 = vld [vmem:[%s3437 + $0x20] sm:$0xf]
  %v3447 = vld [vmem:[%s3437 + $0x24] sm:$0xf]
  %v3448 = vld [vmem:[%s3437 + $0x28] sm:$0xf]
  %v3449 = vld [vmem:[%s3437 + $0x2c] sm:$0xf]
  %v3450 = vld [vmem:[%s3437 + $0x30] sm:$0xf]
  %v3451 = vld [vmem:[%s3437 + $0x34] sm:$0xf]
  %v3452 = vld [vmem:[%s3437 + $0x38] sm:$0xf]
  %v3453 = vld [vmem:[%s3437 + $0x3c] sm:$0xf]
  %v3454 = vpack.c.bf16 %v1408, %v1408
  %v3471 = vunpack.c.l.b16 %v3438
  %v3472 = vunpack.c.l.b16 %v3439
  %v3473 = vunpack.c.l.b16 %v3440
  %v3474 = vunpack.c.l.b16 %v3441
  %v3475 = vunpack.c.l.b16 %v3442
  %v3476 = vunpack.c.l.b16 %v3443
  %v3477 = vunpack.c.l.b16 %v3444
  %v3478 = vunpack.c.l.b16 %v3445
  %v3479 = vunpack.c.l.b16 %v3446
  %v3480 = vunpack.c.l.b16 %v3447
  %v3481 = vunpack.c.l.b16 %v3448
  %v3482 = vunpack.c.l.b16 %v3449
  %v3483 = vunpack.c.l.b16 %v3450
  %v3484 = vunpack.c.l.b16 %v3451
  %v3485 = vunpack.c.l.b16 %v3452
  %v3486 = vunpack.c.l.b16 %v3453
  %v3487 = vpack.c.b16 %v3472, %v3471
  %v3488 = vpack.c.b16 %v3474, %v3473
  %v3489 = vpack.c.b16 %v3476, %v3475
  %v3490 = vpack.c.b16 %v3478, %v3477
  %v3491 = vpack.c.b16 %v3480, %v3479
  %v3492 = vpack.c.b16 %v3482, %v3481
  %v3493 = vpack.c.b16 %v3484, %v3483
  %v3494 = vpack.c.b16 %v3486, %v3485
  %3503 = vmatprep.subr.bf16.mxu0 0
  %3504 = vmatpush1.bf16.msra.mxu0 %v3487
  %3505 = vmatprep.subr.bf16.mxu0 0
  %3506 = vmatpush1.bf16.msra.mxu0 %v3488
  %3507 = vmatprep.subr.bf16.mxu0 0
  %3508 = vmatpush1.bf16.msra.mxu0 %v3489
  %3509 = vmatprep.subr.bf16.mxu0 0
  %3510 = vmatpush1.bf16.msra.mxu0 %v3490
  %3511 = vmatprep.subr.bf16.mxu0 0
  %3512 = vmatpush1.bf16.msra.mxu0 %v3491
  %3513 = vmatprep.subr.bf16.mxu0 0
  %3514 = vmatpush1.bf16.msra.mxu0 %v3492
  %3515 = vmatprep.subr.bf16.mxu0 0
  %3516 = vmatpush1.bf16.msra.mxu0 %v3493
  %3517 = vmatprep.subr.bf16.mxu0 0
  %3518 = vmatpush1.bf16.msra.mxu0 %v3494
  %3519 = vmatprep.subr.bf16.mxu0 0
  %3520 = vmatpush1.bf16.msra.mxu0 0
  %3521 = vmatprep.subr.bf16.mxu0 0
  %3522 = vmatpush1.bf16.msra.mxu0 0
  %3523 = vmatprep.subr.bf16.mxu0 0
  %3524 = vmatpush1.bf16.msra.mxu0 0
  %3525 = vmatprep.subr.bf16.mxu0 0
  %3526 = vmatpush1.bf16.msra.mxu0 0
  %3527 = vmatprep.subr.bf16.mxu0 0
  %3528 = vmatpush1.bf16.msra.mxu0 0
  %3529 = vmatprep.subr.bf16.mxu0 0
  %3530 = vmatpush1.bf16.msra.mxu0 0
  %3531 = vmatprep.subr.bf16.mxu0 0
  %3532 = vmatpush1.bf16.msra.mxu0 0
  %3533 = vmatprep.subr.bf16.mxu0 0
  %3534 = vmatpush1.bf16.msra.mxu0 0
  %3535 = vmatprep.mubr.bf16.mxu0 0
  %3536 = vmatmul.mubr.bf16.gmra.mrb[0].mxu0 %v3454
  %v3537 = vpop.f32.mrb[0].mxu0
  %v3538 = vadd.f32 0.0, %v3537
  %v3539 = vpop.f32.mrb[0].mxu0
  %v3540 = vpop.f32.mrb[0].mxu0
  %v3541 = vpop.f32.mrb[0].mxu0
  %3542 = vdwg.mxu0
  %v3543 = vadd.f32 %v3390, %v3538
  %v3544 = vmax.f32 %v3543, 0.0
  %s3545 = scalar_lea.vmem %s7, 320
  %v3546 = vld [vmem:[%s3545] sm:$0xf]
  %v3547 = vld [vmem:[%s3545 + $0x4] sm:$0xf]
  %v3548 = vld [vmem:[%s3545 + $0x8] sm:$0xf]
  %v3549 = vld [vmem:[%s3545 + $0xc] sm:$0xf]
  %v3550 = vld [vmem:[%s3545 + $0x10] sm:$0xf]
  %v3551 = vld [vmem:[%s3545 + $0x14] sm:$0xf]
  %v3552 = vld [vmem:[%s3545 + $0x18] sm:$0xf]
  %v3553 = vld [vmem:[%s3545 + $0x1c] sm:$0xf]
  %v3554 = vld [vmem:[%s3545 + $0x20] sm:$0xf]
  %v3555 = vld [vmem:[%s3545 + $0x24] sm:$0xf]
  %v3556 = vld [vmem:[%s3545 + $0x28] sm:$0xf]
  %v3557 = vld [vmem:[%s3545 + $0x2c] sm:$0xf]
  %v3558 = vld [vmem:[%s3545 + $0x30] sm:$0xf]
  %v3559 = vld [vmem:[%s3545 + $0x34] sm:$0xf]
  %v3560 = vld [vmem:[%s3545 + $0x38] sm:$0xf]
  %v3561 = vld [vmem:[%s3545 + $0x3c] sm:$0xf]
  %v3562 = vpack.c.bf16 %v3544, %v3544
  %v3563 = vld [vmem:[%s12 + $0x4] ss:$0 sm:$0xff]
  %v3580 = vunpack.c.l.b16 %v3546
  %v3581 = vunpack.c.l.b16 %v3547
  %v3582 = vunpack.c.l.b16 %v3548
  %v3583 = vunpack.c.l.b16 %v3549
  %v3584 = vunpack.c.l.b16 %v3550
  %v3585 = vunpack.c.l.b16 %v3551
  %v3586 = vunpack.c.l.b16 %v3552
  %v3587 = vunpack.c.l.b16 %v3553
  %v3588 = vunpack.c.l.b16 %v3554
  %v3589 = vunpack.c.l.b16 %v3555
  %v3590 = vunpack.c.l.b16 %v3556
  %v3591 = vunpack.c.l.b16 %v3557
  %v3592 = vunpack.c.l.b16 %v3558
  %v3593 = vunpack.c.l.b16 %v3559
  %v3594 = vunpack.c.l.b16 %v3560
  %v3595 = vunpack.c.l.b16 %v3561
  %v3596 = vpack.c.b16 %v3581, %v3580
  %v3597 = vpack.c.b16 %v3583, %v3582
  %v3598 = vpack.c.b16 %v3585, %v3584
  %v3599 = vpack.c.b16 %v3587, %v3586
  %v3600 = vpack.c.b16 %v3589, %v3588
  %v3601 = vpack.c.b16 %v3591, %v3590
  %v3602 = vpack.c.b16 %v3593, %v3592
  %v3603 = vpack.c.b16 %v3595, %v3594
  %3612 = vmatprep.subr.bf16.mxu0 0
  %3613 = vmatpush1.bf16.msra.mxu0 %v3596
  %3614 = vmatprep.subr.bf16.mxu0 0
  %3615 = vmatpush1.bf16.msra.mxu0 %v3597
  %3616 = vmatprep.subr.bf16.mxu0 0
  %3617 = vmatpush1.bf16.msra.mxu0 %v3598
  %3618 = vmatprep.subr.bf16.mxu0 0
  %3619 = vmatpush1.bf16.msra.mxu0 %v3599
  %3620 = vmatprep.subr.bf16.mxu0 0
  %3621 = vmatpush1.bf16.msra.mxu0 %v3600
  %3622 = vmatprep.subr.bf16.mxu0 0
  %3623 = vmatpush1.bf16.msra.mxu0 %v3601
  %3624 = vmatprep.subr.bf16.mxu0 0
  %3625 = vmatpush1.bf16.msra.mxu0 %v3602
  %3626 = vmatprep.subr.bf16.mxu0 0
  %3627 = vmatpush1.bf16.msra.mxu0 %v3603
  %3628 = vmatprep.subr.bf16.mxu0 0
  %3629 = vmatpush1.bf16.msra.mxu0 0
  %3630 = vmatprep.subr.bf16.mxu0 0
  %3631 = vmatpush1.bf16.msra.mxu0 0
  %3632 = vmatprep.subr.bf16.mxu0 0
  %3633 = vmatpush1.bf16.msra.mxu0 0
  %3634 = vmatprep.subr.bf16.mxu0 0
  %3635 = vmatpush1.bf16.msra.mxu0 0
  %3636 = vmatprep.subr.bf16.mxu0 0
  %3637 = vmatpush1.bf16.msra.mxu0 0
  %3638 = vmatprep.subr.bf16.mxu0 0
  %3639 = vmatpush1.bf16.msra.mxu0 0
  %3640 = vmatprep.subr.bf16.mxu0 0
  %3641 = vmatpush1.bf16.msra.mxu0 0
  %3642 = vmatprep.subr.bf16.mxu0 0
  %3643 = vmatpush1.bf16.msra.mxu0 0
  %3644 = vmatprep.mubr.bf16.mxu0 0
  %3645 = vmatmul.mubr.bf16.gmra.mrb[0].mxu0 %v3562
  %v3646 = vpop.f32.mrb[0].mxu0
  %v3647 = vadd.f32 %v3563, %v3646
  %v3648 = vpop.f32.mrb[0].mxu0
  %v3649 = vpop.f32.mrb[0].mxu0
  %v3650 = vpop.f32.mrb[0].mxu0
  %3651 = vdwg.mxu0
  %vm3652 = vcmp.lt.s32.totalorder %v630, 10
  %v3653 = vsel %vm3652, %v3647, -1e+30
  %v3654 = vsel %vm1860, %v3653, -inf
  %3655 = vmax.xlane.f32.xlu0 %v3654
  %v3656 = vpop.xlane.xlu0 %3655
  %vm3657 = vcmp.eq.f32.partialorder %v3653, %v3656
  %vm3658 = vmand %vm3657, %vm3652
  %v3659 = vcvt.s32.f32 %v630
  %v3660 = vsel %vm3658, %v3659, 1e+09
  %v3661 = vsel %vm1860, %v3660, inf
  %3662 = vmin.xlane.f32.xlu0 %v3661
  %v3663 = vpop.xlane.xlu0 %3662
  %v3664 = vcvt.f32.s32.to.zero.pseudo %v3663
  %vm3665 = vcmp.lt.s32.totalorder %v630, 5
  %v3666 = vsel %vm3665, %v3392, -1e+30
  %v3667 = vsel %vm1860, %v3666, -inf
  %3668 = vmax.xlane.f32.xlu0 %v3667
  %v3669 = vpop.xlane.xlu0 %3668
  %vm3670 = vcmp.eq.f32.partialorder %v3666, %v3669
  %vm3671 = vmand %vm3670, %vm3665
  %v3672 = vsel %vm3671, %v3659, 1e+09
  %v3673 = vsel %vm1860, %v3672, inf
  %3674 = vmin.xlane.f32.xlu0 %v3673
  %v3675 = vpop.xlane.xlu0 %3674
  %v3676 = vcvt.f32.s32.to.zero.pseudo %v3675
  %v3679 = vunpack.c.l.s4 1966171168
  %v3680 = vunpack.c.0.s8 %v3679
  %v3681 = vlaneseq
  %v3682 = vshrl.u32 %v3681, 7
  %v3683 = vsub.s32 %v3680, %v3682
  %v3684 = vrot.slane %v3431, %v3683
  %v3685 = vcombine.high %v3684, %v3684
  %v3687 = vunpack.c.l.s4 1966171168
  %v3688 = vunpack.c.0.s8 %v3687
  %v3689 = vlaneseq
  %v3690 = vshrl.u32 %v3689, 7
  %v3691 = vsub.s32 %v3688, %v3690
  %v3692 = vrot.slane %v3684, %v3691
  %v3694 = vunpack.c.l.s4 1966171168
  %v3695 = vunpack.c.0.s8 %v3694
  %v3696 = vlaneseq
  %v3697 = vshrl.u32 %v3696, 7
  %v3698 = vsub.s32 %v3695, %v3697
  %v3699 = vrot.slane %v3685, %v3698
  %v3700 = vlaneseq
  %v3701 = vshrl.u32 %v3700, 7
  %v3702 = vsub.s32 0, %v3701
  %v3703 = vrot.slane %v3692, %v3702
  %v3704 = vlaneseq
  %v3705 = vshrl.u32 %v3704, 7
  %v3706 = vsub.s32 0, %v3705
  %v3707 = vrot.slane %v3699, %v3706
  %v3710 = vmul.f32 %v956, %v3703
  %v3711 = vmul.f32 %v957, %v3707
  %3712 = vadd.xlane.f32.xlu0 %v3710
  %v3713 = vpop.xlane.xlu0 %3712
  %3714 = vadd.xlane.f32.xlu0 %v3711
  %v3715 = vpop.xlane.xlu0 %3714
  %3716 = vset.pattern.permute.xlu0 0
  %3717 = vperm.xlu0 %3716, %v48
  %v3718 = vpop.permute.xlu0 %3717
  %vm3719 = vcmp.lt.s32.totalorder %v630, %v3718
  %v3722 = vlaneseq
  %v3723 = vshrl.u32 %v3722, 7
  %v3724 = vsub.s32 %v630, %v3723
  %v3725 = vrot.slane %v3713, %v3724
  %v3726 = vlaneseq
  %v3727 = vshrl.u32 %v3726, 7
  %v3728 = vsub.s32 %v630, %v3727
  %v3729 = vrot.slane %v3715, %v3728
  %v3730 = vsel %vm1056, %v3729, %v3725
  %v3732 = vsel %vm3719, %v3730, -1e+30
  %vm3733 = vcmask 58368
  %v3734 = vsel %vm3733, %v3732, -inf
  %3735 = vmax.xlane.f32.xlu0 %v3734
  %v3736 = vpop.xlane.xlu0 %3735
  %vm3737 = vcmp.eq.f32.partialorder %v3732, %v3736
  %vm3738 = vmand %vm3737, %vm3719
  %v3739 = vsel %vm3738, %v3659, 1e+09
  %v3740 = vsel %vm3733, %v3739, inf
  %3741 = vmin.xlane.f32.xlu0 %v3740
  %v3742 = vpop.xlane.xlu0 %3741
  %v3743 = vcvt.f32.s32.to.zero.pseudo %v3742
  %v3744 = vpack.c.bf16 %v3433, %v3433
  %3745 = vmatprep.subr.bf16.mxu0 %v596
  %3746 = vmatpush1.bf16.msra.mxu0 %v595
  %3747 = vmatprep.subr.bf16.mxu0 %v600
  %3748 = vmatpush1.bf16.msra.mxu0 %v599
  %3749 = vmatprep.subr.bf16.mxu0 %v604
  %3750 = vmatpush1.bf16.msra.mxu0 %v603
  %3751 = vmatprep.subr.bf16.mxu0 %v608
  %3752 = vmatpush1.bf16.msra.mxu0 %v607
  %3753 = vmatprep.subr.bf16.mxu0 %v612
  %3754 = vmatpush1.bf16.msra.mxu0 %v611
  %3755 = vmatprep.subr.bf16.mxu0 %v616
  %3756 = vmatpush1.bf16.msra.mxu0 %v615
  %3757 = vmatprep.subr.bf16.mxu0 %v620
  %3758 = vmatpush1.bf16.msra.mxu0 %v619
  %3759 = vmatprep.subr.bf16.mxu0 %v624
  %3760 = vmatpush1.bf16.msra.mxu0 %v623
  %3761 = vmatprep.subr.bf16.mxu0 0
  %3762 = vmatpush1.bf16.msra.mxu0 0
  %3763 = vmatprep.subr.bf16.mxu0 0
  %3764 = vmatpush1.bf16.msra.mxu0 0
  %3765 = vmatprep.subr.bf16.mxu0 0
  %3766 = vmatpush1.bf16.msra.mxu0 0
  %3767 = vmatprep.subr.bf16.mxu0 0
  %3768 = vmatpush1.bf16.msra.mxu0 0
  %3769 = vmatprep.subr.bf16.mxu0 0
  %3770 = vmatpush1.bf16.msra.mxu0 0
  %3771 = vmatprep.subr.bf16.mxu0 0
  %3772 = vmatpush1.bf16.msra.mxu0 0
  %3773 = vmatprep.subr.bf16.mxu0 0
  %3774 = vmatpush1.bf16.msra.mxu0 0
  %3775 = vmatprep.subr.bf16.mxu0 0
  %3776 = vmatpush1.bf16.msra.mxu0 0
  %3777 = vmatprep.mubr.bf16.mxu0 0
  %3778 = vmatmul.mubr.bf16.gmra.mrb[0].mxu0 %v3744
  %v3779 = vpop.f32.mrb[0].mxu0
  %v3780 = vadd.f32 0.0, %v3779
  %v3781 = vpop.f32.mrb[0].mxu0
  %v3782 = vadd.f32 0.0, %v3781
  %v3783 = vpop.f32.mrb[0].mxu0
  %v3784 = vpop.f32.mrb[0].mxu0
  %3785 = vdwg.mxu0
  %3786 = vmatprep.subr.bf16.mxu0 %v598
  %3787 = vmatpush1.bf16.msra.mxu0 %v597
  %3788 = vmatprep.subr.bf16.mxu0 %v602
  %3789 = vmatpush1.bf16.msra.mxu0 %v601
  %3790 = vmatprep.subr.bf16.mxu0 %v606
  %3791 = vmatpush1.bf16.msra.mxu0 %v605
  %3792 = vmatprep.subr.bf16.mxu0 %v610
  %3793 = vmatpush1.bf16.msra.mxu0 %v609
  %3794 = vmatprep.subr.bf16.mxu0 %v614
  %3795 = vmatpush1.bf16.msra.mxu0 %v613
  %3796 = vmatprep.subr.bf16.mxu0 %v618
  %3797 = vmatpush1.bf16.msra.mxu0 %v617
  %3798 = vmatprep.subr.bf16.mxu0 %v622
  %3799 = vmatpush1.bf16.msra.mxu0 %v621
  %3800 = vmatprep.subr.bf16.mxu0 %v626
  %3801 = vmatpush1.bf16.msra.mxu0 %v625
  %3802 = vmatprep.subr.bf16.mxu0 0
  %3803 = vmatpush1.bf16.msra.mxu0 0
  %3804 = vmatprep.subr.bf16.mxu0 0
  %3805 = vmatpush1.bf16.msra.mxu0 0
  %3806 = vmatprep.subr.bf16.mxu0 0
  %3807 = vmatpush1.bf16.msra.mxu0 0
  %3808 = vmatprep.subr.bf16.mxu0 0
  %3809 = vmatpush1.bf16.msra.mxu0 0
  %3810 = vmatprep.subr.bf16.mxu0 0
  %3811 = vmatpush1.bf16.msra.mxu0 0
  %3812 = vmatprep.subr.bf16.mxu0 0
  %3813 = vmatpush1.bf16.msra.mxu0 0
  %3814 = vmatprep.subr.bf16.mxu0 0
  %3815 = vmatpush1.bf16.msra.mxu0 0
  %3816 = vmatprep.subr.bf16.mxu0 0
  %3817 = vmatpush1.bf16.msra.mxu0 0
  %3818 = vmatprep.mubr.bf16.mxu0 0
  %3819 = vmatmul.mubr.bf16.gmra.mrb[0].mxu0 %v3744
  %v3820 = vpop.f32.mrb[0].mxu0
  %v3821 = vadd.f32 0.0, %v3820
  %v3822 = vpop.f32.mrb[0].mxu0
  %v3823 = vadd.f32 0.0, %v3822
  %v3824 = vpop.f32.mrb[0].mxu0
  %v3825 = vpop.f32.mrb[0].mxu0
  %3826 = vdwg.mxu0
  %v3827 = vsel %vm642, %v3780, -1e+30
  %v3828 = vsel %vm643, %v3782, -1e+30
  %v3829 = vsel %vm644, %v3821, -1e+30
  %v3830 = vsel %vm645, %v3823, -1e+30
  %v3831 = vsel %vm1860, %v3827, -inf
  %v3832 = vsel %vm1860, %v3828, -inf
  %v3833 = vsel %vm1860, %v3829, -inf
  %v3834 = vsel %vm1860, %v3830, -inf
  %v3835 = vmax.f32 %v3831, %v3832
  %v3836 = vmax.f32 %v3833, %v3834
  %v3837 = vmax.f32 %v3835, %v3836
  %3838 = vmax.xlane.f32.xlu0 %v3837
  %v3839 = vpop.xlane.xlu0 %3838
  %vm3840 = vcmp.eq.f32.partialorder %v3827, %v3839
  %vm3841 = vcmp.eq.f32.partialorder %v3828, %v3839
  %vm3842 = vcmp.eq.f32.partialorder %v3829, %v3839
  %vm3843 = vcmp.eq.f32.partialorder %v3830, %v3839
  %vm3844 = vmand %vm3840, %vm642
  %vm3845 = vmand %vm3841, %vm643
  %vm3846 = vmand %vm3842, %vm644
  %vm3847 = vmand %vm3843, %vm645
  %v3848 = vcvt.s32.f32 %v638
  %v3849 = vcvt.s32.f32 %v639
  %v3850 = vcvt.s32.f32 %v640
  %v3851 = vcvt.s32.f32 %v641
  %v3852 = vsel %vm3844, %v3848, 1e+09
  %v3853 = vsel %vm3845, %v3849, 1e+09
  %v3854 = vsel %vm3846, %v3850, 1e+09
  %v3855 = vsel %vm3847, %v3851, 1e+09
  %v3856 = vsel %vm1860, %v3852, inf
  %v3857 = vsel %vm1860, %v3853, inf
  %v3858 = vsel %vm1860, %v3854, inf
  %v3859 = vsel %vm1860, %v3855, inf
  %v3860 = vmin.f32 %v3856, %v3857
  %v3861 = vmin.f32 %v3858, %v3859
  %v3862 = vmin.f32 %v3860, %v3861
  %3863 = vmin.xlane.f32.xlu0 %v3862
  %v3864 = vpop.xlane.xlu0 %3863
  %v3865 = vcvt.f32.s32.to.zero.pseudo %v3864
  %vm3866 = vcmask 7168
  %v3867 = vsel %vm3866, %v3664, %v3743
  %vm3868 = vcmask 15360
  %v3869 = vsel %vm3868, %v3867, %v3865
  %vm3870 = vcmask 23552
  %v3871 = vsel %vm3870, %v3869, %v3676
  %vm3872 = vcmask 25600
  %3873 = vst.msk [vmem:[%s13] sm:$0x3] %vm3872, %v3871
  // Predicated region
  $region54: #{alphastar_forward.1} parent=0 // pred_check
    _
  $region55: #{alphastar_forward.1} parent=0 // pred_check_branch
    %3875 = sbr.rel (0) target = $region57
  $region56: #{alphastar_forward.1} parent=0 // pred_region
    _
  $region57: #{alphastar_forward.1} parent=0 // pred_fallthru
    _
  // Predicated region
  $region58: #{alphastar_forward.1} parent=0 // pred_check
    _
  $region59: #{alphastar_forward.1} parent=0 // pred_check_branch
    %3877 = sbr.rel (0) target = $region61
  $region60: #{alphastar_forward.1} parent=0 // pred_region
    _
  $region61: #{alphastar_forward.1} parent=0 // pred_fallthru
    _
  // Predicated region
  $region62: #{alphastar_forward.1} parent=0 // pred_check
    _
  $region63: #{alphastar_forward.1} parent=0 // pred_check_branch
    %3879 = sbr.rel (0) target = $region65
  $region64: #{alphastar_forward.1} parent=0 // pred_region
    _
  $region65: #{alphastar_forward.1} parent=0 // pred_fallthru
    _
  // Predicated region
  $region66: #{alphastar_forward.1} parent=0 // pred_check
    _
  $region67: #{alphastar_forward.1} parent=0 // pred_check_branch
    %3881 = sbr.rel (0) target = $region69
  $region68: #{alphastar_forward.1} parent=0 // pred_region
    _
  $region69: #{alphastar_forward.1} parent=0 // pred_fallthru
    _
  // Predicated region
  $region70: #{alphastar_forward.1} parent=0 // pred_check
    _
  $region71: #{alphastar_forward.1} parent=0 // pred_check_branch
    %3883 = sbr.rel (0) target = $region73
  $region72: #{alphastar_forward.1} parent=0 // pred_region
    _
  $region73: #{alphastar_forward.1} parent=0 // pred_fallthru
    _
  // Predicated region
  $region74: #{alphastar_forward.1} parent=0 // pred_check
    _
  $region75: #{alphastar_forward.1} parent=0 // pred_check_branch
    %3885 = sbr.rel (0) target = $region77
  $region76: #{alphastar_forward.1} parent=0 // pred_region
    _
  $region77: #{alphastar_forward.1} parent=0 // pred_fallthru
    _

</llo_original>
